<compile_context>
chip_gen: v5e
topology: v5e:2x2
jax: 0.10.0
libtpu: 0.0.40
codegen_flags: <defaults>
</compile_context>

<pallas_src>
import functools

import jax
import jax.numpy as jnp
import numpy as np
from jax.experimental import pallas as pl
from jax.experimental.pallas import tpu as pltpu

EPS = 1e-5


def _bam_kernel(x_ref, w_cin_ref, w_lin2_ref, w_dil_ref, pcols_ref, o_ref, *, H, W):
    B, C, L = x_ref.shape
    BL = B * L
    mid = w_lin2_ref.shape[1]

    # ---------------- parameters (one load per packed array, then value slices) ----
    w_cin = w_cin_ref[...]                       # [2*mid, C]
    lin1_w = w_cin[:mid]                         # [mid, C]
    conv1_w = w_cin[mid:]                        # [mid, C]
    lin2_w = w_lin2_ref[...]                     # [C, mid]
    w_dil = w_dil_ref[...]                       # [18, mid, mid]  (2 blocks x 9 taps)

    pc = pcols_ref[...]                          # [C, 15] packed column params
    lin1_b = pc[:mid, 0:1]
    lin2_b = pc[:, 1:2]
    bn1_g = pc[:, 2:3]
    bn1_b = pc[:, 3:4]
    conv1_b = pc[:mid, 4:5]
    cd_b = (pc[:mid, 5:6], pc[:mid, 8:9])
    bnd_g = (pc[:mid, 6:7], pc[:mid, 9:10])
    bnd_b = (pc[:mid, 7:8], pc[:mid, 10:11])
    conv3_w = pc[:mid, 11:12]
    conv3_b = pc[0:1, 12:13]
    bn3_g = pc[0:1, 13:14]
    bn3_b = pc[0:1, 14:15]

    # ---------------- fold batch onto the lane axis: xall = [C, B*L] f32 ----------
    xall = jnp.concatenate(
        [x_ref[b].astype(jnp.float32) for b in range(B)], axis=1)     # [C, BL]

    # ---------------- Channel gate (computed transposed: [C, B]) ------------------
    # AdaptiveAvgPool2d(1): per-batch spatial mean, kept with C on sublanes.
    yT = jnp.concatenate(
        [jnp.mean(xall[:, b * L:(b + 1) * L], axis=1, keepdims=True)
         for b in range(B)], axis=1)                                   # [C, B]
    h = jnp.dot(lin1_w, yT, preferred_element_type=jnp.float32) + lin1_b
    h = jnp.maximum(h, 0.0)                                            # [mid, B]
    h = jnp.dot(lin2_w, h, preferred_element_type=jnp.float32) + lin2_b  # [C, B]
    # BatchNorm1d (training mode: stats over the batch axis, biased variance)
    mu = jnp.mean(h, axis=1, keepdims=True)
    var = jnp.mean((h - mu) ** 2, axis=1, keepdims=True)
    chT = (h - mu) * jax.lax.rsqrt(var + EPS) * bn1_g + bn1_b          # [C, B]

    # ---------------- Spatial gate (batch-free on [*, B*L]) -----------------------
    # Tap descriptors of the 3x3 / dilation=4 / padding=4 conv: output[p] gets
    # input[p + dh*W + dw] of the SAME image when valid; each tap is a lane roll
    # plus a validity mask built once on the [1, BL] lane index (identical
    # per-image pattern; wrap-around across images is masked out).
    lane = jax.lax.broadcasted_iota(jnp.int32, (1, BL), 1)
    pix = lane & (L - 1) if (L & (L - 1)) == 0 else lane % L           # index in image
    col = pix & (W - 1) if (W & (W - 1)) == 0 else pix % W             # column index
    tap_specs = []                                 # (roll_amount, mask [mid,BL] | None)
    for kh in range(3):
        for kw in range(3):
            dh, dw = 4 * (kh - 1), 4 * (kw - 1)
            s = dh * W + dw
            if s == 0 and dh == 0 and dw == 0:
                tap_specs.append((0, None))
                continue
            valid = ((pix >= -dh * W) & (pix < (H - dh) * W)
                     & (col >= -dw) & (col < W - dw))
            mask = jnp.broadcast_to(
                jnp.where(valid, 1.0, 0.0).astype(jnp.float32), (mid, BL))
            tap_specs.append(((-s) % BL, mask))

    def dilated_bn_relu(z, blk):
        # 3x3 dilated conv as 9 ACCUMULATED [mid,mid] x [mid,BL] matmuls
        # (no 9-tap sublane concatenate, no per-batch loop).
        acc = None
        for t, (amt, mask) in enumerate(tap_specs):
            tap = z if amt == 0 else pltpu.roll(z, amt, axis=1)
            if mask is not None:
                tap = tap * mask
            w_t = w_dil[blk * 9 + t]                                   # [mid, mid]
            contrib = jnp.dot(w_t, tap, preferred_element_type=jnp.float32)
            acc = contrib if acc is None else acc + contrib
        zc = acc + cd_b[blk]                                           # [mid, BL]
        # BatchNorm2d (training mode): stats over N and the spatial extent,
        # i.e. the whole lane axis once batch is folded onto lanes.
        m = jnp.mean(zc, axis=1, keepdims=True)
        v = jnp.mean((zc - m) ** 2, axis=1, keepdims=True)
        zc = (zc - m) * jax.lax.rsqrt(v + EPS) * bnd_g[blk] + bnd_b[blk]
        return jnp.maximum(zc, 0.0)

    # conv1: 1x1 conv C -> mid (one weight-stationary matmul over channels)
    y1 = jnp.dot(conv1_w, xall, preferred_element_type=jnp.float32) + conv1_b
    z = dilated_bn_relu(y1, 0)
    z = dilated_bn_relu(z, 1)                                          # [mid, BL]

    # conv3: 1x1 conv mid -> 1 as a VPU broadcast-MAC + cross-sublane reduce
    s3 = jnp.sum(conv3_w * z, axis=0, keepdims=True) + conv3_b         # [1, BL]
    # BatchNorm2d(1) over all N*H*W elements
    m = jnp.mean(s3, axis=1, keepdims=True)
    v = jnp.mean((s3 - m) ** 2, axis=1, keepdims=True)
    sp = (s3 - m) * jax.lax.rsqrt(v + EPS) * bn3_g + bn3_b             # [1, BL]

    # -------- Combine per batch (fused into the store; no [B,C,L] temporaries) ----
    # chT[:, b] broadcasts along lanes, sp slice broadcasts along sublanes.
    for b in range(B):
        xb = x_ref[b].astype(jnp.float32)                              # [C, L]
        logit = chT[:, b:b + 1] + sp[:, b * L:(b + 1) * L]             # [C, L]
        attn = 0.5 * jnp.tanh(0.5 * logit) + 0.5                       # exact sigmoid, 1 EUP op
        o_ref[b] = (xb * (1.0 + attn)).astype(o_ref.dtype)


def bam_forward(x_nchw, p):
    """BAM forward. x_nchw: [B, C, H, W] (PyTorch layout). Returns bf16 [B,C,H,W]."""
    B, C, H, W = x_nchw.shape
    mid = p['lin1_w'].shape[0]
    L = H * W
    f32 = jnp.float32

    # Free reshape (no transpose); bf16 at the HBM boundary (x/out are ~99% of bytes).
    x_flat = x_nchw.reshape(B, C, L).astype(jnp.bfloat16)

    # ----- pack weights into 3 small arrays -----
    w_cin = jnp.concatenate(
        [p['lin1_w'].astype(f32), p['conv1_w'][:, :, 0, 0].astype(f32)], axis=0)  # [2*mid, C]
    w_lin2 = p['lin2_w'].astype(f32)                                               # [C, mid]
    # OIHW dilated weights -> [2 blocks * 9 taps, O, I]
    w_dil = jnp.transpose(
        jnp.stack([p['convd1_w'], p['convd2_w']], axis=0), (0, 3, 4, 1, 2)
    ).reshape(18, mid, mid).astype(f32)

    # ----- pack all tiny bias / gamma / beta vectors into ONE [C, 15] column table -----
    pcols = jnp.zeros((C, 15), f32)

    def put(a, idx, v):
        v = jnp.asarray(v, f32).reshape(-1)
        return a.at[:v.shape[0], idx].set(v)

    pcols = put(pcols, 0, p['lin1_b'])
    pcols = put(pcols, 1, p['lin2_b'])
    pcols = put(pcols, 2, p['bn1_g'])
    pcols = put(pcols, 3, p['bn1_b'])
    pcols = put(pcols, 4, p['conv1_b'])
    pcols = put(pcols, 5, p['convd1_b'])
    pcols = put(pcols, 6, p['bnd1_g'])
    pcols = put(pcols, 7, p['bnd1_b'])
    pcols = put(pcols, 8, p['convd2_b'])
    pcols = put(pcols, 9, p['bnd2_g'])
    pcols = put(pcols, 10, p['bnd2_b'])
    pcols = put(pcols, 11, p['conv3_w'][0, :, 0, 0])
    pcols = put(pcols, 12, p['conv3_b'])
    pcols = put(pcols, 13, p['bn3_g'])
    pcols = put(pcols, 14, p['bn3_b'])

    vmem = pl.BlockSpec(memory_space=pltpu.MemorySpace.VMEM)
    out_flat = pl.pallas_call(
        functools.partial(_bam_kernel, H=H, W=W),
        out_shape=jax.ShapeDtypeStruct((B, C, L), jnp.bfloat16),
        in_specs=[vmem] * 5,
        out_specs=vmem,
        compiler_params=pltpu.CompilerParams(vmem_limit_bytes=32 * 1024 * 1024),
    )(x_flat, w_cin, w_lin2, w_dil, pcols)
    return out_flat.reshape(B, C, H, W)


# ----------------------- pure-JAX reference (for verification) -----------------------
def _bn(x, g, b, axes):
    m = jnp.mean(x, axis=axes, keepdims=True)
    v = jnp.mean((x - m) ** 2, axis=axes, keepdims=True)
    sh = [1] * x.ndim
    sh[1] = -1
    return (x - m) * jax.lax.rsqrt(v + EPS) * g.reshape(sh) + b.reshape(sh)


def bam_reference(x, p):
    def conv(z, w, b, dil, pad):
        o = jax.lax.conv_general_dilated(
            z, w, (1, 1), [(pad, pad), (pad, pad)],
            rhs_dilation=(dil, dil),
            dimension_numbers=('NCHW', 'OIHW', 'NCHW'))
        return o + b.reshape(1, -1, 1, 1)

    # channel gate
    y = jnp.mean(x, axis=(2, 3))
    y = jnp.maximum(y @ p['lin1_w'].T + p['lin1_b'], 0.0)
    y = y @ p['lin2_w'].T + p['lin2_b']
    ch = _bn(y, p['bn1_g'], p['bn1_b'], (0,))[:, :, None, None]
    # spatial gate
    s = conv(x, p['conv1_w'], p['conv1_b'], 1, 0)
    s = jnp.maximum(_bn(conv(s, p['convd1_w'], p['convd1_b'], 4, 4),
                        p['bnd1_g'], p['bnd1_b'], (0, 2, 3)), 0.0)
    s = jnp.maximum(_bn(conv(s, p['convd2_w'], p['convd2_b'], 4, 4),
                        p['bnd2_g'], p['bnd2_b'], (0, 2, 3)), 0.0)
    s = conv(s, p['conv3_w'], p['conv3_b'], 1, 0)
    s = _bn(s, p['bn3_g'], p['bn3_b'], (0, 2, 3))
    attn = jax.nn.sigmoid(ch + s)
    return x + x * attn


if __name__ == "__main__":
    B, C, H, W = 2, 32, 16, 16
    reduction = 16
    mid = C // reduction

    key = jax.random.PRNGKey(0)
    ks = jax.random.split(key, 21)

    def nrm(k, shape, scale=0.1):
        return (scale * jax.random.normal(k, shape)).astype(jnp.float32)

    params = {
        # ChannelGate
        'lin1_w': nrm(ks[0], (mid, C)),           'lin1_b': nrm(ks[1], (mid,)),
        'lin2_w': nrm(ks[2], (C, mid)),           'lin2_b': nrm(ks[3], (C,)),
        'bn1_g': 1.0 + nrm(ks[4], (C,)),          'bn1_b': nrm(ks[5], (C,)),
        # SpatialGate
        'conv1_w': nrm(ks[6], (mid, C, 1, 1)),    'conv1_b': nrm(ks[7], (mid,)),
        'convd1_w': nrm(ks[8], (mid, mid, 3, 3)), 'convd1_b': nrm(ks[9], (mid,)),
        'bnd1_g': 1.0 + nrm(ks[10], (mid,)),      'bnd1_b': nrm(ks[11], (mid,)),
        'convd2_w': nrm(ks[12], (mid, mid, 3, 3)), 'convd2_b': nrm(ks[13], (mid,)),
        'bnd2_g': 1.0 + nrm(ks[14], (mid,)),      'bnd2_b': nrm(ks[15], (mid,)),
        'conv3_w': nrm(ks[16], (1, mid, 1, 1)),   'conv3_b': nrm(ks[17], (1,)),
        'bn3_g': 1.0 + nrm(ks[18], (1,)),         'bn3_b': nrm(ks[19], (1,)),
    }

    x = jax.random.normal(ks[20], (B, C, H, W), dtype=jnp.float32)

    out = jax.block_until_ready(bam_forward(x, params)).astype(jnp.float32)

    # Reference on the same bf16-rounded input the kernel sees (isolates kernel
    # numerics from the bf16 boundary cast); bf16 output rounding is covered by
    # the rtol/atol.
    x_seen = x.astype(jnp.bfloat16).astype(jnp.float32)
    ref = jax.block_until_ready(bam_reference(x_seen, params))

    np.testing.assert_allclose(np.asarray(out), np.asarray(ref), rtol=2e-2, atol=2e-2)
    print("KERNEL_OK")
</pallas_src>

<mosaic_0001>
module attributes {stable_mosaic.version = 11 : i64} {
  func.func @_bam_kernel(%arg0: memref<2x32x256xbf16, #tpu.memory_space<vmem>>, %arg1: memref<4x32xf32, #tpu.memory_space<vmem>>, %arg2: memref<32x2xf32, #tpu.memory_space<vmem>>, %arg3: memref<18x2x2xf32, #tpu.memory_space<vmem>>, %arg4: memref<32x15xf32, #tpu.memory_space<vmem>>, %arg5: memref<2x32x256xbf16, #tpu.memory_space<vmem>>) attributes {dimension_semantics = [], scalar_prefetch = 0 : i64, scratch_operands = 0 : i64, tpu.core_type = #tpu.core_type<tc>} {
    %c0 = arith.constant 0 : index
    %c0_0 = arith.constant 0 : index
    %0 = vector.load %arg1[%c0, %c0_0] : memref<4x32xf32, #tpu.memory_space<vmem>>, vector<4x32xf32>
    %1 = vector.extract_strided_slice %0 {offsets = [0, 0], sizes = [2, 32], strides = [1, 1]} : vector<4x32xf32> to vector<2x32xf32>
    %2 = vector.extract_strided_slice %0 {offsets = [2, 0], sizes = [2, 32], strides = [1, 1]} : vector<4x32xf32> to vector<2x32xf32>
    %c0_1 = arith.constant 0 : index
    %c0_2 = arith.constant 0 : index
    %3 = vector.load %arg2[%c0_1, %c0_2] : memref<32x2xf32, #tpu.memory_space<vmem>>, vector<32x2xf32>
    %c0_3 = arith.constant 0 : index
    %c0_4 = arith.constant 0 : index
    %c0_5 = arith.constant 0 : index
    %4 = vector.load %arg3[%c0_3, %c0_4, %c0_5] : memref<18x2x2xf32, #tpu.memory_space<vmem>>, vector<18x2x2xf32>
    %c0_6 = arith.constant 0 : index
    %c0_7 = arith.constant 0 : index
    %5 = vector.load %arg4[%c0_6, %c0_7] : memref<32x15xf32, #tpu.memory_space<vmem>>, vector<32x15xf32>
    %6 = vector.extract_strided_slice %5 {offsets = [0, 0], sizes = [2, 1], strides = [1, 1]} : vector<32x15xf32> to vector<2x1xf32>
    %7 = vector.extract_strided_slice %5 {offsets = [0, 1], sizes = [32, 1], strides = [1, 1]} : vector<32x15xf32> to vector<32x1xf32>
    %8 = vector.extract_strided_slice %5 {offsets = [0, 2], sizes = [32, 1], strides = [1, 1]} : vector<32x15xf32> to vector<32x1xf32>
    %9 = vector.extract_strided_slice %5 {offsets = [0, 3], sizes = [32, 1], strides = [1, 1]} : vector<32x15xf32> to vector<32x1xf32>
    %10 = vector.extract_strided_slice %5 {offsets = [0, 4], sizes = [2, 1], strides = [1, 1]} : vector<32x15xf32> to vector<2x1xf32>
    %11 = vector.extract_strided_slice %5 {offsets = [0, 5], sizes = [2, 1], strides = [1, 1]} : vector<32x15xf32> to vector<2x1xf32>
    %12 = vector.extract_strided_slice %5 {offsets = [0, 8], sizes = [2, 1], strides = [1, 1]} : vector<32x15xf32> to vector<2x1xf32>
    %13 = vector.extract_strided_slice %5 {offsets = [0, 6], sizes = [2, 1], strides = [1, 1]} : vector<32x15xf32> to vector<2x1xf32>
    %14 = vector.extract_strided_slice %5 {offsets = [0, 9], sizes = [2, 1], strides = [1, 1]} : vector<32x15xf32> to vector<2x1xf32>
    %15 = vector.extract_strided_slice %5 {offsets = [0, 7], sizes = [2, 1], strides = [1, 1]} : vector<32x15xf32> to vector<2x1xf32>
    %16 = vector.extract_strided_slice %5 {offsets = [0, 10], sizes = [2, 1], strides = [1, 1]} : vector<32x15xf32> to vector<2x1xf32>
    %17 = vector.extract_strided_slice %5 {offsets = [0, 11], sizes = [2, 1], strides = [1, 1]} : vector<32x15xf32> to vector<2x1xf32>
    %18 = vector.extract_strided_slice %5 {offsets = [0, 12], sizes = [1, 1], strides = [1, 1]} : vector<32x15xf32> to vector<1x1xf32>
    %19 = vector.extract_strided_slice %5 {offsets = [0, 13], sizes = [1, 1], strides = [1, 1]} : vector<32x15xf32> to vector<1x1xf32>
    %20 = vector.extract_strided_slice %5 {offsets = [0, 14], sizes = [1, 1], strides = [1, 1]} : vector<32x15xf32> to vector<1x1xf32>
    %c0_8 = arith.constant 0 : index
    %c0_9 = arith.constant 0 : index
    %c0_10 = arith.constant 0 : index
    %21 = vector.load %arg0[%c0_8, %c0_9, %c0_10] : memref<2x32x256xbf16, #tpu.memory_space<vmem>>, vector<1x32x256xbf16>
    %22 = vector.shape_cast %21 : vector<1x32x256xbf16> to vector<32x256xbf16>
    %23 = arith.extf %22 : vector<32x256xbf16> to vector<32x256xf32>
    %c1 = arith.constant 1 : index
    %c0_11 = arith.constant 0 : index
    %c0_12 = arith.constant 0 : index
    %24 = vector.load %arg0[%c1, %c0_11, %c0_12] : memref<2x32x256xbf16, #tpu.memory_space<vmem>>, vector<1x32x256xbf16>
    %25 = vector.shape_cast %24 : vector<1x32x256xbf16> to vector<32x256xbf16>
    %26 = arith.extf %25 : vector<32x256xbf16> to vector<32x256xf32>
    %27 = tpu.concatenate %23, %26 in 1 : vector<32x256xf32>, vector<32x256xf32> -> vector<32x512xf32>
    %28 = vector.extract_strided_slice %27 {offsets = [0, 0], sizes = [32, 256], strides = [1, 1]} : vector<32x512xf32> to vector<32x256xf32>
    %cst = arith.constant dense<0.000000e+00> : vector<32xf32>
    %29 = vector.multi_reduction <add>, %28, %cst [1] : vector<32x256xf32> to vector<32xf32>
    %30 = vector.shape_cast %29 : vector<32xf32> to vector<32x1xf32>
    %cst_13 = arith.constant 2.560000e+02 : f32
    %31 = vector.broadcast %cst_13 : f32 to vector<32x1xf32>
    %32 = arith.divf %30, %31 : vector<32x1xf32>
    %33 = vector.extract_strided_slice %27 {offsets = [0, 256], sizes = [32, 256], strides = [1, 1]} : vector<32x512xf32> to vector<32x256xf32>
    %cst_14 = arith.constant dense<0.000000e+00> : vector<32xf32>
    %34 = vector.multi_reduction <add>, %33, %cst_14 [1] : vector<32x256xf32> to vector<32xf32>
    %35 = vector.shape_cast %34 : vector<32xf32> to vector<32x1xf32>
    %cst_15 = arith.constant 2.560000e+02 : f32
    %36 = vector.broadcast %cst_15 : f32 to vector<32x1xf32>
    %37 = arith.divf %35, %36 : vector<32x1xf32>
    %38 = tpu.concatenate %32, %37 in 1 : vector<32x1xf32>, vector<32x1xf32> -> vector<32x2xf32>
    %cst_16 = arith.constant dense<0.000000e+00> : vector<2x2xf32>
    %39 = tpu.matmul %1, %38, %cst_16 {dimension_numbers = #tpu.dot_dimension_numbers<[1], [0], [0], [1], [0, 0, 1, 1], [], []>} : vector<2x32xf32>, vector<32x2xf32>, vector<2x2xf32> -> vector<2x2xf32>
    %40 = vector.broadcast %6 : vector<2x1xf32> to vector<2x2xf32>
    %41 = arith.addf %39, %40 : vector<2x2xf32>
    %cst_17 = arith.constant 0.000000e+00 : f32
    %42 = vector.broadcast %cst_17 : f32 to vector<2x2xf32>
    %43 = arith.maximumf %41, %42 : vector<2x2xf32>
    %cst_18 = arith.constant dense<0.000000e+00> : vector<32x2xf32>
    %44 = tpu.matmul %3, %43, %cst_18 {dimension_numbers = #tpu.dot_dimension_numbers<[1], [0], [0], [1], [0, 0, 1, 1], [], []>} : vector<32x2xf32>, vector<2x2xf32>, vector<32x2xf32> -> vector<32x2xf32>
    %45 = vector.broadcast %7 : vector<32x1xf32> to vector<32x2xf32>
    %46 = arith.addf %44, %45 : vector<32x2xf32>
    %cst_19 = arith.constant dense<0.000000e+00> : vector<32xf32>
    %47 = vector.multi_reduction <add>, %46, %cst_19 [1] : vector<32x2xf32> to vector<32xf32>
    %48 = vector.shape_cast %47 : vector<32xf32> to vector<32x1xf32>
    %cst_20 = arith.constant 2.000000e+00 : f32
    %49 = vector.broadcast %cst_20 : f32 to vector<32x1xf32>
    %50 = arith.divf %48, %49 : vector<32x1xf32>
    %51 = vector.broadcast %50 : vector<32x1xf32> to vector<32x2xf32>
    %52 = arith.subf %46, %51 : vector<32x2xf32>
    %53 = arith.mulf %52, %52 : vector<32x2xf32>
    %cst_21 = arith.constant dense<0.000000e+00> : vector<32xf32>
    %54 = vector.multi_reduction <add>, %53, %cst_21 [1] : vector<32x2xf32> to vector<32xf32>
    %55 = vector.shape_cast %54 : vector<32xf32> to vector<32x1xf32>
    %cst_22 = arith.constant 2.000000e+00 : f32
    %56 = vector.broadcast %cst_22 : f32 to vector<32x1xf32>
    %57 = arith.divf %55, %56 : vector<32x1xf32>
    %58 = vector.broadcast %50 : vector<32x1xf32> to vector<32x2xf32>
    %59 = arith.subf %46, %58 : vector<32x2xf32>
    %cst_23 = arith.constant 9.99999974E-6 : f32
    %60 = vector.broadcast %cst_23 : f32 to vector<32x1xf32>
    %61 = arith.addf %57, %60 : vector<32x1xf32>
    %62 = math.rsqrt %61 : vector<32x1xf32>
    %63 = vector.broadcast %62 : vector<32x1xf32> to vector<32x2xf32>
    %64 = arith.mulf %59, %63 : vector<32x2xf32>
    %65 = vector.broadcast %8 : vector<32x1xf32> to vector<32x2xf32>
    %66 = arith.mulf %64, %65 : vector<32x2xf32>
    %67 = vector.broadcast %9 : vector<32x1xf32> to vector<32x2xf32>
    %68 = arith.addf %66, %67 : vector<32x2xf32>
    %69 = tpu.iota {dimensions = array<i32: 1>} : vector<1x512xi32>
    %c255_i32 = arith.constant 255 : i32
    %70 = vector.broadcast %c255_i32 : i32 to vector<1x512xi32>
    %71 = arith.andi %69, %70 : vector<1x512xi32>
    %c15_i32 = arith.constant 15 : i32
    %72 = vector.broadcast %c15_i32 : i32 to vector<1x512xi32>
    %73 = arith.andi %71, %72 : vector<1x512xi32>
    %c64_i32 = arith.constant 64 : i32
    %74 = vector.broadcast %c64_i32 : i32 to vector<1x512xi32>
    %75 = arith.cmpi sge, %71, %74 : vector<1x512xi32>
    %c320_i32 = arith.constant 320 : i32
    %76 = vector.broadcast %c320_i32 : i32 to vector<1x512xi32>
    %77 = arith.cmpi slt, %71, %76 : vector<1x512xi32>
    %78 = arith.andi %75, %77 : vector<1x512xi1>
    %c4_i32 = arith.constant 4 : i32
    %79 = vector.broadcast %c4_i32 : i32 to vector<1x512xi32>
    %80 = arith.cmpi sge, %73, %79 : vector<1x512xi32>
    %81 = arith.andi %78, %80 : vector<1x512xi1>
    %c20_i32 = arith.constant 20 : i32
    %82 = vector.broadcast %c20_i32 : i32 to vector<1x512xi32>
    %83 = arith.cmpi slt, %73, %82 : vector<1x512xi32>
    %84 = arith.andi %81, %83 : vector<1x512xi1>
    %cst_24 = arith.constant 1.000000e+00 : f32
    %cst_25 = arith.constant 0.000000e+00 : f32
    %85 = vector.broadcast %cst_24 : f32 to vector<1x512xf32>
    %86 = vector.broadcast %cst_25 : f32 to vector<1x512xf32>
    %87 = arith.select %84, %85, %86 : vector<1x512xi1>, vector<1x512xf32>
    %88 = vector.shape_cast %87 : vector<1x512xf32> to vector<1x512xf32>
    %89 = vector.broadcast %88 : vector<1x512xf32> to vector<2x512xf32>
    %c64_i32_26 = arith.constant 64 : i32
    %90 = vector.broadcast %c64_i32_26 : i32 to vector<1x512xi32>
    %91 = arith.cmpi sge, %71, %90 : vector<1x512xi32>
    %c320_i32_27 = arith.constant 320 : i32
    %92 = vector.broadcast %c320_i32_27 : i32 to vector<1x512xi32>
    %93 = arith.cmpi slt, %71, %92 : vector<1x512xi32>
    %94 = arith.andi %91, %93 : vector<1x512xi1>
    %c0_i32 = arith.constant 0 : i32
    %95 = vector.broadcast %c0_i32 : i32 to vector<1x512xi32>
    %96 = arith.cmpi sge, %73, %95 : vector<1x512xi32>
    %97 = arith.andi %94, %96 : vector<1x512xi1>
    %c16_i32 = arith.constant 16 : i32
    %98 = vector.broadcast %c16_i32 : i32 to vector<1x512xi32>
    %99 = arith.cmpi slt, %73, %98 : vector<1x512xi32>
    %100 = arith.andi %97, %99 : vector<1x512xi1>
    %cst_28 = arith.constant 1.000000e+00 : f32
    %cst_29 = arith.constant 0.000000e+00 : f32
    %101 = vector.broadcast %cst_28 : f32 to vector<1x512xf32>
    %102 = vector.broadcast %cst_29 : f32 to vector<1x512xf32>
    %103 = arith.select %100, %101, %102 : vector<1x512xi1>, vector<1x512xf32>
    %104 = vector.shape_cast %103 : vector<1x512xf32> to vector<1x512xf32>
    %105 = vector.broadcast %104 : vector<1x512xf32> to vector<2x512xf32>
    %c64_i32_30 = arith.constant 64 : i32
    %106 = vector.broadcast %c64_i32_30 : i32 to vector<1x512xi32>
    %107 = arith.cmpi sge, %71, %106 : vector<1x512xi32>
    %c320_i32_31 = arith.constant 320 : i32
    %108 = vector.broadcast %c320_i32_31 : i32 to vector<1x512xi32>
    %109 = arith.cmpi slt, %71, %108 : vector<1x512xi32>
    %110 = arith.andi %107, %109 : vector<1x512xi1>
    %c-4_i32 = arith.constant -4 : i32
    %111 = vector.broadcast %c-4_i32 : i32 to vector<1x512xi32>
    %112 = arith.cmpi sge, %73, %111 : vector<1x512xi32>
    %113 = arith.andi %110, %112 : vector<1x512xi1>
    %c12_i32 = arith.constant 12 : i32
    %114 = vector.broadcast %c12_i32 : i32 to vector<1x512xi32>
    %115 = arith.cmpi slt, %73, %114 : vector<1x512xi32>
    %116 = arith.andi %113, %115 : vector<1x512xi1>
    %cst_32 = arith.constant 1.000000e+00 : f32
    %cst_33 = arith.constant 0.000000e+00 : f32
    %117 = vector.broadcast %cst_32 : f32 to vector<1x512xf32>
    %118 = vector.broadcast %cst_33 : f32 to vector<1x512xf32>
    %119 = arith.select %116, %117, %118 : vector<1x512xi1>, vector<1x512xf32>
    %120 = vector.shape_cast %119 : vector<1x512xf32> to vector<1x512xf32>
    %121 = vector.broadcast %120 : vector<1x512xf32> to vector<2x512xf32>
    %c0_i32_34 = arith.constant 0 : i32
    %122 = vector.broadcast %c0_i32_34 : i32 to vector<1x512xi32>
    %123 = arith.cmpi sge, %71, %122 : vector<1x512xi32>
    %c256_i32 = arith.constant 256 : i32
    %124 = vector.broadcast %c256_i32 : i32 to vector<1x512xi32>
    %125 = arith.cmpi slt, %71, %124 : vector<1x512xi32>
    %126 = arith.andi %123, %125 : vector<1x512xi1>
    %c4_i32_35 = arith.constant 4 : i32
    %127 = vector.broadcast %c4_i32_35 : i32 to vector<1x512xi32>
    %128 = arith.cmpi sge, %73, %127 : vector<1x512xi32>
    %129 = arith.andi %126, %128 : vector<1x512xi1>
    %c20_i32_36 = arith.constant 20 : i32
    %130 = vector.broadcast %c20_i32_36 : i32 to vector<1x512xi32>
    %131 = arith.cmpi slt, %73, %130 : vector<1x512xi32>
    %132 = arith.andi %129, %131 : vector<1x512xi1>
    %cst_37 = arith.constant 1.000000e+00 : f32
    %cst_38 = arith.constant 0.000000e+00 : f32
    %133 = vector.broadcast %cst_37 : f32 to vector<1x512xf32>
    %134 = vector.broadcast %cst_38 : f32 to vector<1x512xf32>
    %135 = arith.select %132, %133, %134 : vector<1x512xi1>, vector<1x512xf32>
    %136 = vector.shape_cast %135 : vector<1x512xf32> to vector<1x512xf32>
    %137 = vector.broadcast %136 : vector<1x512xf32> to vector<2x512xf32>
    %c0_i32_39 = arith.constant 0 : i32
    %138 = vector.broadcast %c0_i32_39 : i32 to vector<1x512xi32>
    %139 = arith.cmpi sge, %71, %138 : vector<1x512xi32>
    %c256_i32_40 = arith.constant 256 : i32
    %140 = vector.broadcast %c256_i32_40 : i32 to vector<1x512xi32>
    %141 = arith.cmpi slt, %71, %140 : vector<1x512xi32>
    %142 = arith.andi %139, %141 : vector<1x512xi1>
    %c-4_i32_41 = arith.constant -4 : i32
    %143 = vector.broadcast %c-4_i32_41 : i32 to vector<1x512xi32>
    %144 = arith.cmpi sge, %73, %143 : vector<1x512xi32>
    %145 = arith.andi %142, %144 : vector<1x512xi1>
    %c12_i32_42 = arith.constant 12 : i32
    %146 = vector.broadcast %c12_i32_42 : i32 to vector<1x512xi32>
    %147 = arith.cmpi slt, %73, %146 : vector<1x512xi32>
    %148 = arith.andi %145, %147 : vector<1x512xi1>
    %cst_43 = arith.constant 1.000000e+00 : f32
    %cst_44 = arith.constant 0.000000e+00 : f32
    %149 = vector.broadcast %cst_43 : f32 to vector<1x512xf32>
    %150 = vector.broadcast %cst_44 : f32 to vector<1x512xf32>
    %151 = arith.select %148, %149, %150 : vector<1x512xi1>, vector<1x512xf32>
    %152 = vector.shape_cast %151 : vector<1x512xf32> to vector<1x512xf32>
    %153 = vector.broadcast %152 : vector<1x512xf32> to vector<2x512xf32>
    %c-64_i32 = arith.constant -64 : i32
    %154 = vector.broadcast %c-64_i32 : i32 to vector<1x512xi32>
    %155 = arith.cmpi sge, %71, %154 : vector<1x512xi32>
    %c192_i32 = arith.constant 192 : i32
    %156 = vector.broadcast %c192_i32 : i32 to vector<1x512xi32>
    %157 = arith.cmpi slt, %71, %156 : vector<1x512xi32>
    %158 = arith.andi %155, %157 : vector<1x512xi1>
    %c4_i32_45 = arith.constant 4 : i32
    %159 = vector.broadcast %c4_i32_45 : i32 to vector<1x512xi32>
    %160 = arith.cmpi sge, %73, %159 : vector<1x512xi32>
    %161 = arith.andi %158, %160 : vector<1x512xi1>
    %c20_i32_46 = arith.constant 20 : i32
    %162 = vector.broadcast %c20_i32_46 : i32 to vector<1x512xi32>
    %163 = arith.cmpi slt, %73, %162 : vector<1x512xi32>
    %164 = arith.andi %161, %163 : vector<1x512xi1>
    %cst_47 = arith.constant 1.000000e+00 : f32
    %cst_48 = arith.constant 0.000000e+00 : f32
    %165 = vector.broadcast %cst_47 : f32 to vector<1x512xf32>
    %166 = vector.broadcast %cst_48 : f32 to vector<1x512xf32>
    %167 = arith.select %164, %165, %166 : vector<1x512xi1>, vector<1x512xf32>
    %168 = vector.shape_cast %167 : vector<1x512xf32> to vector<1x512xf32>
    %169 = vector.broadcast %168 : vector<1x512xf32> to vector<2x512xf32>
    %c-64_i32_49 = arith.constant -64 : i32
    %170 = vector.broadcast %c-64_i32_49 : i32 to vector<1x512xi32>
    %171 = arith.cmpi sge, %71, %170 : vector<1x512xi32>
    %c192_i32_50 = arith.constant 192 : i32
    %172 = vector.broadcast %c192_i32_50 : i32 to vector<1x512xi32>
    %173 = arith.cmpi slt, %71, %172 : vector<1x512xi32>
    %174 = arith.andi %171, %173 : vector<1x512xi1>
    %c0_i32_51 = arith.constant 0 : i32
    %175 = vector.broadcast %c0_i32_51 : i32 to vector<1x512xi32>
    %176 = arith.cmpi sge, %73, %175 : vector<1x512xi32>
    %177 = arith.andi %174, %176 : vector<1x512xi1>
    %c16_i32_52 = arith.constant 16 : i32
    %178 = vector.broadcast %c16_i32_52 : i32 to vector<1x512xi32>
    %179 = arith.cmpi slt, %73, %178 : vector<1x512xi32>
    %180 = arith.andi %177, %179 : vector<1x512xi1>
    %cst_53 = arith.constant 1.000000e+00 : f32
    %cst_54 = arith.constant 0.000000e+00 : f32
    %181 = vector.broadcast %cst_53 : f32 to vector<1x512xf32>
    %182 = vector.broadcast %cst_54 : f32 to vector<1x512xf32>
    %183 = arith.select %180, %181, %182 : vector<1x512xi1>, vector<1x512xf32>
    %184 = vector.shape_cast %183 : vector<1x512xf32> to vector<1x512xf32>
    %185 = vector.broadcast %184 : vector<1x512xf32> to vector<2x512xf32>
    %c-64_i32_55 = arith.constant -64 : i32
    %186 = vector.broadcast %c-64_i32_55 : i32 to vector<1x512xi32>
    %187 = arith.cmpi sge, %71, %186 : vector<1x512xi32>
    %c192_i32_56 = arith.constant 192 : i32
    %188 = vector.broadcast %c192_i32_56 : i32 to vector<1x512xi32>
    %189 = arith.cmpi slt, %71, %188 : vector<1x512xi32>
    %190 = arith.andi %187, %189 : vector<1x512xi1>
    %c-4_i32_57 = arith.constant -4 : i32
    %191 = vector.broadcast %c-4_i32_57 : i32 to vector<1x512xi32>
    %192 = arith.cmpi sge, %73, %191 : vector<1x512xi32>
    %193 = arith.andi %190, %192 : vector<1x512xi1>
    %c12_i32_58 = arith.constant 12 : i32
    %194 = vector.broadcast %c12_i32_58 : i32 to vector<1x512xi32>
    %195 = arith.cmpi slt, %73, %194 : vector<1x512xi32>
    %196 = arith.andi %193, %195 : vector<1x512xi1>
    %cst_59 = arith.constant 1.000000e+00 : f32
    %cst_60 = arith.constant 0.000000e+00 : f32
    %197 = vector.broadcast %cst_59 : f32 to vector<1x512xf32>
    %198 = vector.broadcast %cst_60 : f32 to vector<1x512xf32>
    %199 = arith.select %196, %197, %198 : vector<1x512xi1>, vector<1x512xf32>
    %200 = vector.shape_cast %199 : vector<1x512xf32> to vector<1x512xf32>
    %201 = vector.broadcast %200 : vector<1x512xf32> to vector<2x512xf32>
    %cst_61 = arith.constant dense<0.000000e+00> : vector<2x512xf32>
    %202 = tpu.matmul %2, %27, %cst_61 {dimension_numbers = #tpu.dot_dimension_numbers<[1], [0], [0], [1], [0, 0, 1, 1], [], []>} : vector<2x32xf32>, vector<32x512xf32>, vector<2x512xf32> -> vector<2x512xf32>
    %203 = vector.broadcast %10 : vector<2x1xf32> to vector<2x512xf32>
    %204 = arith.addf %202, %203 : vector<2x512xf32>
    %c68_i32 = arith.constant 68 : i32
    %205 = tpu.dynamic_rotate %204 by %c68_i32 dim 1 : vector<2x512xf32>, i32 -> vector<2x512xf32>
    %206 = arith.mulf %205, %89 : vector<2x512xf32>
    %207 = vector.extract_strided_slice %4 {offsets = [0, 0, 0], sizes = [1, 2, 2], strides = [1, 1, 1]} : vector<18x2x2xf32> to vector<1x2x2xf32>
    %208 = vector.shape_cast %207 : vector<1x2x2xf32> to vector<2x2xf32>
    %cst_62 = arith.constant dense<0.000000e+00> : vector<2x512xf32>
    %209 = tpu.matmul %208, %206, %cst_62 {dimension_numbers = #tpu.dot_dimension_numbers<[1], [0], [0], [1], [0, 0, 1, 1], [], []>} : vector<2x2xf32>, vector<2x512xf32>, vector<2x512xf32> -> vector<2x512xf32>
    %c64_i32_63 = arith.constant 64 : i32
    %210 = tpu.dynamic_rotate %204 by %c64_i32_63 dim 1 : vector<2x512xf32>, i32 -> vector<2x512xf32>
    %211 = arith.mulf %210, %105 : vector<2x512xf32>
    %212 = vector.extract_strided_slice %4 {offsets = [1, 0, 0], sizes = [1, 2, 2], strides = [1, 1, 1]} : vector<18x2x2xf32> to vector<1x2x2xf32>
    %213 = vector.shape_cast %212 : vector<1x2x2xf32> to vector<2x2xf32>
    %cst_64 = arith.constant dense<0.000000e+00> : vector<2x512xf32>
    %214 = tpu.matmul %213, %211, %cst_64 {dimension_numbers = #tpu.dot_dimension_numbers<[1], [0], [0], [1], [0, 0, 1, 1], [], []>} : vector<2x2xf32>, vector<2x512xf32>, vector<2x512xf32> -> vector<2x512xf32>
    %215 = arith.addf %209, %214 : vector<2x512xf32>
    %c60_i32 = arith.constant 60 : i32
    %216 = tpu.dynamic_rotate %204 by %c60_i32 dim 1 : vector<2x512xf32>, i32 -> vector<2x512xf32>
    %217 = arith.mulf %216, %121 : vector<2x512xf32>
    %218 = vector.extract_strided_slice %4 {offsets = [2, 0, 0], sizes = [1, 2, 2], strides = [1, 1, 1]} : vector<18x2x2xf32> to vector<1x2x2xf32>
    %219 = vector.shape_cast %218 : vector<1x2x2xf32> to vector<2x2xf32>
    %cst_65 = arith.constant dense<0.000000e+00> : vector<2x512xf32>
    %220 = tpu.matmul %219, %217, %cst_65 {dimension_numbers = #tpu.dot_dimension_numbers<[1], [0], [0], [1], [0, 0, 1, 1], [], []>} : vector<2x2xf32>, vector<2x512xf32>, vector<2x512xf32> -> vector<2x512xf32>
    %221 = arith.addf %215, %220 : vector<2x512xf32>
    %c4_i32_66 = arith.constant 4 : i32
    %222 = tpu.dynamic_rotate %204 by %c4_i32_66 dim 1 : vector<2x512xf32>, i32 -> vector<2x512xf32>
    %223 = arith.mulf %222, %137 : vector<2x512xf32>
    %224 = vector.extract_strided_slice %4 {offsets = [3, 0, 0], sizes = [1, 2, 2], strides = [1, 1, 1]} : vector<18x2x2xf32> to vector<1x2x2xf32>
    %225 = vector.shape_cast %224 : vector<1x2x2xf32> to vector<2x2xf32>
    %cst_67 = arith.constant dense<0.000000e+00> : vector<2x512xf32>
    %226 = tpu.matmul %225, %223, %cst_67 {dimension_numbers = #tpu.dot_dimension_numbers<[1], [0], [0], [1], [0, 0, 1, 1], [], []>} : vector<2x2xf32>, vector<2x512xf32>, vector<2x512xf32> -> vector<2x512xf32>
    %227 = arith.addf %221, %226 : vector<2x512xf32>
    %228 = vector.extract_strided_slice %4 {offsets = [4, 0, 0], sizes = [1, 2, 2], strides = [1, 1, 1]} : vector<18x2x2xf32> to vector<1x2x2xf32>
    %229 = vector.shape_cast %228 : vector<1x2x2xf32> to vector<2x2xf32>
    %cst_68 = arith.constant dense<0.000000e+00> : vector<2x512xf32>
    %230 = tpu.matmul %229, %204, %cst_68 {dimension_numbers = #tpu.dot_dimension_numbers<[1], [0], [0], [1], [0, 0, 1, 1], [], []>} : vector<2x2xf32>, vector<2x512xf32>, vector<2x512xf32> -> vector<2x512xf32>
    %231 = arith.addf %227, %230 : vector<2x512xf32>
    %c508_i32 = arith.constant 508 : i32
    %232 = tpu.dynamic_rotate %204 by %c508_i32 dim 1 : vector<2x512xf32>, i32 -> vector<2x512xf32>
    %233 = arith.mulf %232, %153 : vector<2x512xf32>
    %234 = vector.extract_strided_slice %4 {offsets = [5, 0, 0], sizes = [1, 2, 2], strides = [1, 1, 1]} : vector<18x2x2xf32> to vector<1x2x2xf32>
    %235 = vector.shape_cast %234 : vector<1x2x2xf32> to vector<2x2xf32>
    %cst_69 = arith.constant dense<0.000000e+00> : vector<2x512xf32>
    %236 = tpu.matmul %235, %233, %cst_69 {dimension_numbers = #tpu.dot_dimension_numbers<[1], [0], [0], [1], [0, 0, 1, 1], [], []>} : vector<2x2xf32>, vector<2x512xf32>, vector<2x512xf32> -> vector<2x512xf32>
    %237 = arith.addf %231, %236 : vector<2x512xf32>
    %c452_i32 = arith.constant 452 : i32
    %238 = tpu.dynamic_rotate %204 by %c452_i32 dim 1 : vector<2x512xf32>, i32 -> vector<2x512xf32>
    %239 = arith.mulf %238, %169 : vector<2x512xf32>
    %240 = vector.extract_strided_slice %4 {offsets = [6, 0, 0], sizes = [1, 2, 2], strides = [1, 1, 1]} : vector<18x2x2xf32> to vector<1x2x2xf32>
    %241 = vector.shape_cast %240 : vector<1x2x2xf32> to vector<2x2xf32>
    %cst_70 = arith.constant dense<0.000000e+00> : vector<2x512xf32>
    %242 = tpu.matmul %241, %239, %cst_70 {dimension_numbers = #tpu.dot_dimension_numbers<[1], [0], [0], [1], [0, 0, 1, 1], [], []>} : vector<2x2xf32>, vector<2x512xf32>, vector<2x512xf32> -> vector<2x512xf32>
    %243 = arith.addf %237, %242 : vector<2x512xf32>
    %c448_i32 = arith.constant 448 : i32
    %244 = tpu.dynamic_rotate %204 by %c448_i32 dim 1 : vector<2x512xf32>, i32 -> vector<2x512xf32>
    %245 = arith.mulf %244, %185 : vector<2x512xf32>
    %246 = vector.extract_strided_slice %4 {offsets = [7, 0, 0], sizes = [1, 2, 2], strides = [1, 1, 1]} : vector<18x2x2xf32> to vector<1x2x2xf32>
    %247 = vector.shape_cast %246 : vector<1x2x2xf32> to vector<2x2xf32>
    %cst_71 = arith.constant dense<0.000000e+00> : vector<2x512xf32>
    %248 = tpu.matmul %247, %245, %cst_71 {dimension_numbers = #tpu.dot_dimension_numbers<[1], [0], [0], [1], [0, 0, 1, 1], [], []>} : vector<2x2xf32>, vector<2x512xf32>, vector<2x512xf32> -> vector<2x512xf32>
    %249 = arith.addf %243, %248 : vector<2x512xf32>
    %c444_i32 = arith.constant 444 : i32
    %250 = tpu.dynamic_rotate %204 by %c444_i32 dim 1 : vector<2x512xf32>, i32 -> vector<2x512xf32>
    %251 = arith.mulf %250, %201 : vector<2x512xf32>
    %252 = vector.extract_strided_slice %4 {offsets = [8, 0, 0], sizes = [1, 2, 2], strides = [1, 1, 1]} : vector<18x2x2xf32> to vector<1x2x2xf32>
    %253 = vector.shape_cast %252 : vector<1x2x2xf32> to vector<2x2xf32>
    %cst_72 = arith.constant dense<0.000000e+00> : vector<2x512xf32>
    %254 = tpu.matmul %253, %251, %cst_72 {dimension_numbers = #tpu.dot_dimension_numbers<[1], [0], [0], [1], [0, 0, 1, 1], [], []>} : vector<2x2xf32>, vector<2x512xf32>, vector<2x512xf32> -> vector<2x512xf32>
    %255 = arith.addf %249, %254 : vector<2x512xf32>
    %256 = vector.broadcast %11 : vector<2x1xf32> to vector<2x512xf32>
    %257 = arith.addf %255, %256 : vector<2x512xf32>
    %cst_73 = arith.constant dense<0.000000e+00> : vector<2xf32>
    %258 = vector.multi_reduction <add>, %257, %cst_73 [1] : vector<2x512xf32> to vector<2xf32>
    %259 = vector.shape_cast %258 : vector<2xf32> to vector<2x1xf32>
    %cst_74 = arith.constant 5.120000e+02 : f32
    %260 = vector.broadcast %cst_74 : f32 to vector<2x1xf32>
    %261 = arith.divf %259, %260 : vector<2x1xf32>
    %262 = vector.broadcast %261 : vector<2x1xf32> to vector<2x512xf32>
    %263 = arith.subf %257, %262 : vector<2x512xf32>
    %264 = arith.mulf %263, %263 : vector<2x512xf32>
    %cst_75 = arith.constant dense<0.000000e+00> : vector<2xf32>
    %265 = vector.multi_reduction <add>, %264, %cst_75 [1] : vector<2x512xf32> to vector<2xf32>
    %266 = vector.shape_cast %265 : vector<2xf32> to vector<2x1xf32>
    %cst_76 = arith.constant 5.120000e+02 : f32
    %267 = vector.broadcast %cst_76 : f32 to vector<2x1xf32>
    %268 = arith.divf %266, %267 : vector<2x1xf32>
    %269 = vector.broadcast %261 : vector<2x1xf32> to vector<2x512xf32>
    %270 = arith.subf %257, %269 : vector<2x512xf32>
    %cst_77 = arith.constant 9.99999974E-6 : f32
    %271 = vector.broadcast %cst_77 : f32 to vector<2x1xf32>
    %272 = arith.addf %268, %271 : vector<2x1xf32>
    %273 = math.rsqrt %272 : vector<2x1xf32>
    %274 = vector.broadcast %273 : vector<2x1xf32> to vector<2x512xf32>
    %275 = arith.mulf %270, %274 : vector<2x512xf32>
    %276 = vector.broadcast %13 : vector<2x1xf32> to vector<2x512xf32>
    %277 = arith.mulf %275, %276 : vector<2x512xf32>
    %278 = vector.broadcast %15 : vector<2x1xf32> to vector<2x512xf32>
    %279 = arith.addf %277, %278 : vector<2x512xf32>
    %cst_78 = arith.constant 0.000000e+00 : f32
    %280 = vector.broadcast %cst_78 : f32 to vector<2x512xf32>
    %281 = arith.maximumf %279, %280 : vector<2x512xf32>
    %c68_i32_79 = arith.constant 68 : i32
    %282 = tpu.dynamic_rotate %281 by %c68_i32_79 dim 1 : vector<2x512xf32>, i32 -> vector<2x512xf32>
    %283 = arith.mulf %282, %89 : vector<2x512xf32>
    %284 = vector.extract_strided_slice %4 {offsets = [9, 0, 0], sizes = [1, 2, 2], strides = [1, 1, 1]} : vector<18x2x2xf32> to vector<1x2x2xf32>
    %285 = vector.shape_cast %284 : vector<1x2x2xf32> to vector<2x2xf32>
    %cst_80 = arith.constant dense<0.000000e+00> : vector<2x512xf32>
    %286 = tpu.matmul %285, %283, %cst_80 {dimension_numbers = #tpu.dot_dimension_numbers<[1], [0], [0], [1], [0, 0, 1, 1], [], []>} : vector<2x2xf32>, vector<2x512xf32>, vector<2x512xf32> -> vector<2x512xf32>
    %c64_i32_81 = arith.constant 64 : i32
    %287 = tpu.dynamic_rotate %281 by %c64_i32_81 dim 1 : vector<2x512xf32>, i32 -> vector<2x512xf32>
    %288 = arith.mulf %287, %105 : vector<2x512xf32>
    %289 = vector.extract_strided_slice %4 {offsets = [10, 0, 0], sizes = [1, 2, 2], strides = [1, 1, 1]} : vector<18x2x2xf32> to vector<1x2x2xf32>
    %290 = vector.shape_cast %289 : vector<1x2x2xf32> to vector<2x2xf32>
    %cst_82 = arith.constant dense<0.000000e+00> : vector<2x512xf32>
    %291 = tpu.matmul %290, %288, %cst_82 {dimension_numbers = #tpu.dot_dimension_numbers<[1], [0], [0], [1], [0, 0, 1, 1], [], []>} : vector<2x2xf32>, vector<2x512xf32>, vector<2x512xf32> -> vector<2x512xf32>
    %292 = arith.addf %286, %291 : vector<2x512xf32>
    %c60_i32_83 = arith.constant 60 : i32
    %293 = tpu.dynamic_rotate %281 by %c60_i32_83 dim 1 : vector<2x512xf32>, i32 -> vector<2x512xf32>
    %294 = arith.mulf %293, %121 : vector<2x512xf32>
    %295 = vector.extract_strided_slice %4 {offsets = [11, 0, 0], sizes = [1, 2, 2], strides = [1, 1, 1]} : vector<18x2x2xf32> to vector<1x2x2xf32>
    %296 = vector.shape_cast %295 : vector<1x2x2xf32> to vector<2x2xf32>
    %cst_84 = arith.constant dense<0.000000e+00> : vector<2x512xf32>
    %297 = tpu.matmul %296, %294, %cst_84 {dimension_numbers = #tpu.dot_dimension_numbers<[1], [0], [0], [1], [0, 0, 1, 1], [], []>} : vector<2x2xf32>, vector<2x512xf32>, vector<2x512xf32> -> vector<2x512xf32>
    %298 = arith.addf %292, %297 : vector<2x512xf32>
    %c4_i32_85 = arith.constant 4 : i32
    %299 = tpu.dynamic_rotate %281 by %c4_i32_85 dim 1 : vector<2x512xf32>, i32 -> vector<2x512xf32>
    %300 = arith.mulf %299, %137 : vector<2x512xf32>
    %301 = vector.extract_strided_slice %4 {offsets = [12, 0, 0], sizes = [1, 2, 2], strides = [1, 1, 1]} : vector<18x2x2xf32> to vector<1x2x2xf32>
    %302 = vector.shape_cast %301 : vector<1x2x2xf32> to vector<2x2xf32>
    %cst_86 = arith.constant dense<0.000000e+00> : vector<2x512xf32>
    %303 = tpu.matmul %302, %300, %cst_86 {dimension_numbers = #tpu.dot_dimension_numbers<[1], [0], [0], [1], [0, 0, 1, 1], [], []>} : vector<2x2xf32>, vector<2x512xf32>, vector<2x512xf32> -> vector<2x512xf32>
    %304 = arith.addf %298, %303 : vector<2x512xf32>
    %305 = vector.extract_strided_slice %4 {offsets = [13, 0, 0], sizes = [1, 2, 2], strides = [1, 1, 1]} : vector<18x2x2xf32> to vector<1x2x2xf32>
    %306 = vector.shape_cast %305 : vector<1x2x2xf32> to vector<2x2xf32>
    %cst_87 = arith.constant dense<0.000000e+00> : vector<2x512xf32>
    %307 = tpu.matmul %306, %281, %cst_87 {dimension_numbers = #tpu.dot_dimension_numbers<[1], [0], [0], [1], [0, 0, 1, 1], [], []>} : vector<2x2xf32>, vector<2x512xf32>, vector<2x512xf32> -> vector<2x512xf32>
    %308 = arith.addf %304, %307 : vector<2x512xf32>
    %c508_i32_88 = arith.constant 508 : i32
    %309 = tpu.dynamic_rotate %281 by %c508_i32_88 dim 1 : vector<2x512xf32>, i32 -> vector<2x512xf32>
    %310 = arith.mulf %309, %153 : vector<2x512xf32>
    %311 = vector.extract_strided_slice %4 {offsets = [14, 0, 0], sizes = [1, 2, 2], strides = [1, 1, 1]} : vector<18x2x2xf32> to vector<1x2x2xf32>
    %312 = vector.shape_cast %311 : vector<1x2x2xf32> to vector<2x2xf32>
    %cst_89 = arith.constant dense<0.000000e+00> : vector<2x512xf32>
    %313 = tpu.matmul %312, %310, %cst_89 {dimension_numbers = #tpu.dot_dimension_numbers<[1], [0], [0], [1], [0, 0, 1, 1], [], []>} : vector<2x2xf32>, vector<2x512xf32>, vector<2x512xf32> -> vector<2x512xf32>
    %314 = arith.addf %308, %313 : vector<2x512xf32>
    %c452_i32_90 = arith.constant 452 : i32
    %315 = tpu.dynamic_rotate %281 by %c452_i32_90 dim 1 : vector<2x512xf32>, i32 -> vector<2x512xf32>
    %316 = arith.mulf %315, %169 : vector<2x512xf32>
    %317 = vector.extract_strided_slice %4 {offsets = [15, 0, 0], sizes = [1, 2, 2], strides = [1, 1, 1]} : vector<18x2x2xf32> to vector<1x2x2xf32>
    %318 = vector.shape_cast %317 : vector<1x2x2xf32> to vector<2x2xf32>
    %cst_91 = arith.constant dense<0.000000e+00> : vector<2x512xf32>
    %319 = tpu.matmul %318, %316, %cst_91 {dimension_numbers = #tpu.dot_dimension_numbers<[1], [0], [0], [1], [0, 0, 1, 1], [], []>} : vector<2x2xf32>, vector<2x512xf32>, vector<2x512xf32> -> vector<2x512xf32>
    %320 = arith.addf %314, %319 : vector<2x512xf32>
    %c448_i32_92 = arith.constant 448 : i32
    %321 = tpu.dynamic_rotate %281 by %c448_i32_92 dim 1 : vector<2x512xf32>, i32 -> vector<2x512xf32>
    %322 = arith.mulf %321, %185 : vector<2x512xf32>
    %323 = vector.extract_strided_slice %4 {offsets = [16, 0, 0], sizes = [1, 2, 2], strides = [1, 1, 1]} : vector<18x2x2xf32> to vector<1x2x2xf32>
    %324 = vector.shape_cast %323 : vector<1x2x2xf32> to vector<2x2xf32>
    %cst_93 = arith.constant dense<0.000000e+00> : vector<2x512xf32>
    %325 = tpu.matmul %324, %322, %cst_93 {dimension_numbers = #tpu.dot_dimension_numbers<[1], [0], [0], [1], [0, 0, 1, 1], [], []>} : vector<2x2xf32>, vector<2x512xf32>, vector<2x512xf32> -> vector<2x512xf32>
    %326 = arith.addf %320, %325 : vector<2x512xf32>
    %c444_i32_94 = arith.constant 444 : i32
    %327 = tpu.dynamic_rotate %281 by %c444_i32_94 dim 1 : vector<2x512xf32>, i32 -> vector<2x512xf32>
    %328 = arith.mulf %327, %201 : vector<2x512xf32>
    %329 = vector.extract_strided_slice %4 {offsets = [17, 0, 0], sizes = [1, 2, 2], strides = [1, 1, 1]} : vector<18x2x2xf32> to vector<1x2x2xf32>
    %330 = vector.shape_cast %329 : vector<1x2x2xf32> to vector<2x2xf32>
    %cst_95 = arith.constant dense<0.000000e+00> : vector<2x512xf32>
    %331 = tpu.matmul %330, %328, %cst_95 {dimension_numbers = #tpu.dot_dimension_numbers<[1], [0], [0], [1], [0, 0, 1, 1], [], []>} : vector<2x2xf32>, vector<2x512xf32>, vector<2x512xf32> -> vector<2x512xf32>
    %332 = arith.addf %326, %331 : vector<2x512xf32>
    %333 = vector.broadcast %12 : vector<2x1xf32> to vector<2x512xf32>
    %334 = arith.addf %332, %333 : vector<2x512xf32>
    %cst_96 = arith.constant dense<0.000000e+00> : vector<2xf32>
    %335 = vector.multi_reduction <add>, %334, %cst_96 [1] : vector<2x512xf32> to vector<2xf32>
    %336 = vector.shape_cast %335 : vector<2xf32> to vector<2x1xf32>
    %cst_97 = arith.constant 5.120000e+02 : f32
    %337 = vector.broadcast %cst_97 : f32 to vector<2x1xf32>
    %338 = arith.divf %336, %337 : vector<2x1xf32>
    %339 = vector.broadcast %338 : vector<2x1xf32> to vector<2x512xf32>
    %340 = arith.subf %334, %339 : vector<2x512xf32>
    %341 = arith.mulf %340, %340 : vector<2x512xf32>
    %cst_98 = arith.constant dense<0.000000e+00> : vector<2xf32>
    %342 = vector.multi_reduction <add>, %341, %cst_98 [1] : vector<2x512xf32> to vector<2xf32>
    %343 = vector.shape_cast %342 : vector<2xf32> to vector<2x1xf32>
    %cst_99 = arith.constant 5.120000e+02 : f32
    %344 = vector.broadcast %cst_99 : f32 to vector<2x1xf32>
    %345 = arith.divf %343, %344 : vector<2x1xf32>
    %346 = vector.broadcast %338 : vector<2x1xf32> to vector<2x512xf32>
    %347 = arith.subf %334, %346 : vector<2x512xf32>
    %cst_100 = arith.constant 9.99999974E-6 : f32
    %348 = vector.broadcast %cst_100 : f32 to vector<2x1xf32>
    %349 = arith.addf %345, %348 : vector<2x1xf32>
    %350 = math.rsqrt %349 : vector<2x1xf32>
    %351 = vector.broadcast %350 : vector<2x1xf32> to vector<2x512xf32>
    %352 = arith.mulf %347, %351 : vector<2x512xf32>
    %353 = vector.broadcast %14 : vector<2x1xf32> to vector<2x512xf32>
    %354 = arith.mulf %352, %353 : vector<2x512xf32>
    %355 = vector.broadcast %16 : vector<2x1xf32> to vector<2x512xf32>
    %356 = arith.addf %354, %355 : vector<2x512xf32>
    %cst_101 = arith.constant 0.000000e+00 : f32
    %357 = vector.broadcast %cst_101 : f32 to vector<2x512xf32>
    %358 = arith.maximumf %356, %357 : vector<2x512xf32>
    %359 = vector.broadcast %17 : vector<2x1xf32> to vector<2x512xf32>
    %360 = arith.mulf %359, %358 : vector<2x512xf32>
    %cst_102 = arith.constant dense<0.000000e+00> : vector<512xf32>
    %361 = vector.multi_reduction <add>, %360, %cst_102 [0] : vector<2x512xf32> to vector<512xf32>
    %362 = vector.shape_cast %361 : vector<512xf32> to vector<1x512xf32>
    %363 = vector.broadcast %18 : vector<1x1xf32> to vector<1x512xf32>
    %364 = arith.addf %362, %363 : vector<1x512xf32>
    %cst_103 = arith.constant dense<0.000000e+00> : vector<1xf32>
    %365 = vector.multi_reduction <add>, %364, %cst_103 [1] : vector<1x512xf32> to vector<1xf32>
    %366 = vector.shape_cast %365 : vector<1xf32> to vector<1x1xf32>
    %cst_104 = arith.constant 5.120000e+02 : f32
    %367 = vector.broadcast %cst_104 : f32 to vector<1x1xf32>
    %368 = arith.divf %366, %367 : vector<1x1xf32>
    %369 = vector.broadcast %368 : vector<1x1xf32> to vector<1x512xf32>
    %370 = arith.subf %364, %369 : vector<1x512xf32>
    %371 = arith.mulf %370, %370 : vector<1x512xf32>
    %cst_105 = arith.constant dense<0.000000e+00> : vector<1xf32>
    %372 = vector.multi_reduction <add>, %371, %cst_105 [1] : vector<1x512xf32> to vector<1xf32>
    %373 = vector.shape_cast %372 : vector<1xf32> to vector<1x1xf32>
    %cst_106 = arith.constant 5.120000e+02 : f32
    %374 = vector.broadcast %cst_106 : f32 to vector<1x1xf32>
    %375 = arith.divf %373, %374 : vector<1x1xf32>
    %376 = vector.broadcast %368 : vector<1x1xf32> to vector<1x512xf32>
    %377 = arith.subf %364, %376 : vector<1x512xf32>
    %cst_107 = arith.constant 9.99999974E-6 : f32
    %378 = vector.broadcast %cst_107 : f32 to vector<1x1xf32>
    %379 = arith.addf %375, %378 : vector<1x1xf32>
    %380 = math.rsqrt %379 : vector<1x1xf32>
    %381 = vector.broadcast %380 : vector<1x1xf32> to vector<1x512xf32>
    %382 = arith.mulf %377, %381 : vector<1x512xf32>
    %383 = vector.broadcast %19 : vector<1x1xf32> to vector<1x512xf32>
    %384 = arith.mulf %382, %383 : vector<1x512xf32>
    %385 = vector.broadcast %20 : vector<1x1xf32> to vector<1x512xf32>
    %386 = arith.addf %384, %385 : vector<1x512xf32>
    %c0_108 = arith.constant 0 : index
    %c0_109 = arith.constant 0 : index
    %c0_110 = arith.constant 0 : index
    %387 = vector.load %arg0[%c0_108, %c0_109, %c0_110] : memref<2x32x256xbf16, #tpu.memory_space<vmem>>, vector<1x32x256xbf16>
    %388 = vector.shape_cast %387 : vector<1x32x256xbf16> to vector<32x256xbf16>
    %389 = arith.extf %388 : vector<32x256xbf16> to vector<32x256xf32>
    %390 = vector.extract_strided_slice %68 {offsets = [0, 0], sizes = [32, 1], strides = [1, 1]} : vector<32x2xf32> to vector<32x1xf32>
    %391 = vector.extract_strided_slice %386 {offsets = [0, 0], sizes = [1, 256], strides = [1, 1]} : vector<1x512xf32> to vector<1x256xf32>
    %392 = vector.broadcast %390 : vector<32x1xf32> to vector<32x256xf32>
    %393 = vector.broadcast %391 : vector<1x256xf32> to vector<32x256xf32>
    %394 = arith.addf %392, %393 : vector<32x256xf32>
    %cst_111 = arith.constant 5.000000e-01 : f32
    %395 = vector.broadcast %cst_111 : f32 to vector<32x256xf32>
    %396 = arith.mulf %395, %394 : vector<32x256xf32>
    %397 = math.tanh %396 : vector<32x256xf32>
    %cst_112 = arith.constant 5.000000e-01 : f32
    %398 = vector.broadcast %cst_112 : f32 to vector<32x256xf32>
    %399 = arith.mulf %398, %397 : vector<32x256xf32>
    %cst_113 = arith.constant 5.000000e-01 : f32
    %400 = vector.broadcast %cst_113 : f32 to vector<32x256xf32>
    %401 = arith.addf %399, %400 : vector<32x256xf32>
    %cst_114 = arith.constant 1.000000e+00 : f32
    %402 = vector.broadcast %cst_114 : f32 to vector<32x256xf32>
    %403 = arith.addf %402, %401 : vector<32x256xf32>
    %404 = arith.mulf %389, %403 : vector<32x256xf32>
    %405 = arith.truncf %404 : vector<32x256xf32> to vector<32x256xbf16>
    %c0_115 = arith.constant 0 : index
    %c0_116 = arith.constant 0 : index
    %c0_117 = arith.constant 0 : index
    %406 = vector.load %arg5[%c0_115, %c0_116, %c0_117] : memref<2x32x256xbf16, #tpu.memory_space<vmem>>, vector<1x32x256xbf16>
    %407 = vector.shape_cast %406 : vector<1x32x256xbf16> to vector<32x256xbf16>
    %408 = vector.shape_cast %405 : vector<32x256xbf16> to vector<1x32x256xbf16>
    tpu.vector_store %arg5[%c0_115, %c0_116, %c0_117], %408 {strides = array<i32>} : memref<2x32x256xbf16, #tpu.memory_space<vmem>>, vector<1x32x256xbf16>,
    %c1_118 = arith.constant 1 : index
    %c0_119 = arith.constant 0 : index
    %c0_120 = arith.constant 0 : index
    %409 = vector.load %arg0[%c1_118, %c0_119, %c0_120] : memref<2x32x256xbf16, #tpu.memory_space<vmem>>, vector<1x32x256xbf16>
    %410 = vector.shape_cast %409 : vector<1x32x256xbf16> to vector<32x256xbf16>
    %411 = arith.extf %410 : vector<32x256xbf16> to vector<32x256xf32>
    %412 = vector.extract_strided_slice %68 {offsets = [0, 1], sizes = [32, 1], strides = [1, 1]} : vector<32x2xf32> to vector<32x1xf32>
    %413 = vector.extract_strided_slice %386 {offsets = [0, 256], sizes = [1, 256], strides = [1, 1]} : vector<1x512xf32> to vector<1x256xf32>
    %414 = vector.broadcast %412 : vector<32x1xf32> to vector<32x256xf32>
    %415 = vector.broadcast %413 : vector<1x256xf32> to vector<32x256xf32>
    %416 = arith.addf %414, %415 : vector<32x256xf32>
    %cst_121 = arith.constant 5.000000e-01 : f32
    %417 = vector.broadcast %cst_121 : f32 to vector<32x256xf32>
    %418 = arith.mulf %417, %416 : vector<32x256xf32>
    %419 = math.tanh %418 : vector<32x256xf32>
    %cst_122 = arith.constant 5.000000e-01 : f32
    %420 = vector.broadcast %cst_122 : f32 to vector<32x256xf32>
    %421 = arith.mulf %420, %419 : vector<32x256xf32>
    %cst_123 = arith.constant 5.000000e-01 : f32
    %422 = vector.broadcast %cst_123 : f32 to vector<32x256xf32>
    %423 = arith.addf %421, %422 : vector<32x256xf32>
    %cst_124 = arith.constant 1.000000e+00 : f32
    %424 = vector.broadcast %cst_124 : f32 to vector<32x256xf32>
    %425 = arith.addf %424, %423 : vector<32x256xf32>
    %426 = arith.mulf %411, %425 : vector<32x256xf32>
    %427 = arith.truncf %426 : vector<32x256xf32> to vector<32x256xbf16>
    %c1_125 = arith.constant 1 : index
    %c0_126 = arith.constant 0 : index
    %c0_127 = arith.constant 0 : index
    %428 = vector.load %arg5[%c1_125, %c0_126, %c0_127] : memref<2x32x256xbf16, #tpu.memory_space<vmem>>, vector<1x32x256xbf16>
    %429 = vector.shape_cast %428 : vector<1x32x256xbf16> to vector<32x256xbf16>
    %430 = vector.shape_cast %427 : vector<32x256xbf16> to vector<1x32x256xbf16>
    tpu.vector_store %arg5[%c1_125, %c0_126, %c0_127], %430 {strides = array<i32>} : memref<2x32x256xbf16, #tpu.memory_space<vmem>>, vector<1x32x256xbf16>,
    return
  }
}

</mosaic_0001>

<llo_original>
// kernel: tpu_custom_call.1
$region0: #{tpu_custom_call.1}
  #allocation0 [shape = 'u32[]', space=smem, size = 0x4, offset = 0x4, fixed_abs, tag = 'smem constant byte address 0x4 - core index']
  #allocation1 [shape = 'u32[72,128]{1,0:T(1,128)}', space=vmem, size = 0x9000, scoped, tag = 'internal scratch']
  %s0 = inlined_call_operand.vmem [shape: bf16[2,32,256], index: 0, kind: input, shape index: {}]
  %s1 = inlined_call_operand.vmem [shape: f32[4,32], index: 1, kind: input, shape index: {}]
  %s2 = inlined_call_operand.vmem [shape: f32[32,2], index: 2, kind: input, shape index: {}]
  %s3 = inlined_call_operand.vmem [shape: f32[18,2,2], index: 3, kind: input, shape index: {}]
  %s4 = inlined_call_operand.vmem [shape: f32[32,15], index: 4, kind: input, shape index: {}]
  %s5 = inlined_call_operand.hbm [shape: bf16[2,32,256], index: 5, kind: output, shape index: {}]
  %s6 = sld [smem:[#allocation0]]
  $region30: #{tpu_custom_call.1} parent=0
    _
  %s8 = ssub.s32 1, %s6
  %s9 = scalar_select 0, %s8, %s6
  $region1: #{tpu_custom_call.1} parent=0
    #allocation2 [shape = 'u8[32768]{0}', space=vmem, size = 0x8000, scoped, tag = 'output window, operand 0, single buffered']
    #allocation3 [shape = 's32[1]{0}', space=sflag, size = 0x4, scoped, tag = 'scoped memory for tpu_custom_call.1']
    %10 = vsyncpa [#allocation3], 0
    // Predicated region
    $region2: #{tpu_custom_call.1} parent=1 // pred_check
      _
    $region3: #{tpu_custom_call.1} parent=1 // pred_check_branch
      %12 = sbr.rel (0) target = $region5
    $region4: #{tpu_custom_call.1} parent=1 // pred_region
      _
    $region5: #{tpu_custom_call.1} parent=1 // pred_fallthru
      _
    // Predicated region
    $region6: #{tpu_custom_call.1} parent=1 // pred_check
      _
    $region7: #{tpu_custom_call.1} parent=1 // pred_check_branch
      %14 = sbr.rel (0) target = $region9
    $region8: #{tpu_custom_call.1} parent=1 // pred_region
      _
    $region9: #{tpu_custom_call.1} parent=1 // pred_fallthru
      _
    // Predicated region
    $region10: #{tpu_custom_call.1} parent=1 // pred_check
      _
    $region11: #{tpu_custom_call.1} parent=1 // pred_check_branch
      %16 = sbr.rel (0) target = $region13
    $region12: #{tpu_custom_call.1} parent=1 // pred_region
      _
    $region13: #{tpu_custom_call.1} parent=1 // pred_fallthru
      _
    // Predicated region
    $region14: #{tpu_custom_call.1} parent=1 // pred_check
      _
    $region15: #{tpu_custom_call.1} parent=1 // pred_check_branch
      %18 = sbr.rel (0) target = $region17
    $region16: #{tpu_custom_call.1} parent=1 // pred_region
      _
    $region17: #{tpu_custom_call.1} parent=1 // pred_fallthru
      _
    // Predicated region
    $region18: #{tpu_custom_call.1} parent=1 // pred_check
      _
    $region19: #{tpu_custom_call.1} parent=1 // pred_check_branch
      %20 = sbr.rel (0) target = $region21
    $region20: #{tpu_custom_call.1} parent=1 // pred_region
      _
    $region21: #{tpu_custom_call.1} parent=1 // pred_fallthru
      _
    %v21 = vld [vmem:[%s1] sm:$0xf]
    %v22 = vld [vmem:[%s2] sm:$0xff]
    %v23 = vld [vmem:[%s2 + $0x8] sm:$0xff]
    %v24 = vld [vmem:[%s2 + $0x10] sm:$0xff]
    %v25 = vld [vmem:[%s2 + $0x18] sm:$0xff]
    %v26 = vld [vmem:[%s3] sm:$0x3]
    %v27 = vld [vmem:[%s3 + $0x2] sm:$0x3]
    %v28 = vld [vmem:[%s3 + $0x4] sm:$0x3]
    %v29 = vld [vmem:[%s3 + $0x6] sm:$0x3]
    %v30 = vld [vmem:[%s3 + $0x8] sm:$0x3]
    %v31 = vld [vmem:[%s3 + $0xa] sm:$0x3]
    %v32 = vld [vmem:[%s3 + $0xc] sm:$0x3]
    %v33 = vld [vmem:[%s3 + $0xe] sm:$0x3]
    %v34 = vld [vmem:[%s3 + $0x10] sm:$0x3]
    %v35 = vld [vmem:[%s3 + $0x12] sm:$0x3]
    %v36 = vld [vmem:[%s3 + $0x14] sm:$0x3]
    %v37 = vld [vmem:[%s3 + $0x16] sm:$0x3]
    %v38 = vld [vmem:[%s3 + $0x18] sm:$0x3]
    %v39 = vld [vmem:[%s3 + $0x1a] sm:$0x3]
    %v40 = vld [vmem:[%s3 + $0x1c] sm:$0x3]
    %v41 = vld [vmem:[%s3 + $0x1e] sm:$0x3]
    %v42 = vld [vmem:[%s3 + $0x20] sm:$0x3]
    %v43 = vld [vmem:[%s3 + $0x22] sm:$0x3]
    %v44 = vld [vmem:[%s4] sm:$0xff]
    %v45 = vld [vmem:[%s4 + $0x8] sm:$0xff]
    %v46 = vld [vmem:[%s4 + $0x10] sm:$0xff]
    %v47 = vld [vmem:[%s4 + $0x18] sm:$0xff]
    %v48 = vld [vmem:[%s0] sm:$0xff]
    %v49 = vld [vmem:[%s0 + $0x8] sm:$0xff]
    %v50 = vld [vmem:[%s0 + $0x10] sm:$0xff]
    %v51 = vld [vmem:[%s0 + $0x18] sm:$0xff]
    %v52 = vunpack.c.l.bf16 %v48
    %v53 = vunpack.c.h.bf16 %v48
    %v54 = vunpack.c.l.bf16 %v49
    %v55 = vunpack.c.h.bf16 %v49
    %v56 = vunpack.c.l.bf16 %v50
    %v57 = vunpack.c.h.bf16 %v50
    %v58 = vunpack.c.l.bf16 %v51
    %v59 = vunpack.c.h.bf16 %v51
    %s60 = scalar_lea.vmem %s0, 32
    %v61 = vld [vmem:[%s60] sm:$0xff]
    %v62 = vld [vmem:[%s60 + $0x8] sm:$0xff]
    %v63 = vld [vmem:[%s60 + $0x10] sm:$0xff]
    %v64 = vld [vmem:[%s60 + $0x18] sm:$0xff]
    %v65 = vunpack.c.l.bf16 %v61
    %v66 = vunpack.c.h.bf16 %v61
    %v67 = vunpack.c.l.bf16 %v62
    %v68 = vunpack.c.h.bf16 %v62
    %v69 = vunpack.c.l.bf16 %v63
    %v70 = vunpack.c.h.bf16 %v63
    %v71 = vunpack.c.l.bf16 %v64
    %v72 = vunpack.c.h.bf16 %v64
    %v73 = vadd.f32 %v52, %v53
    %74 = vadd.xlane.f32.xlu0 %v73
    %v75 = vpop.xlane.xlu0 %74
    %v76 = vadd.f32 %v54, %v55
    %77 = vadd.xlane.f32.xlu0 %v76
    %v78 = vpop.xlane.xlu0 %77
    %v79 = vadd.f32 %v56, %v57
    %80 = vadd.xlane.f32.xlu0 %v79
    %v81 = vpop.xlane.xlu0 %80
    %v82 = vadd.f32 %v58, %v59
    %83 = vadd.xlane.f32.xlu0 %v82
    %v84 = vpop.xlane.xlu0 %83
    %v85 = vrcp.pop 256.0
    %v86 = vmul.f32 256.0, %v85
    %v87 = vsub.f32 1.0, %v86
    %v88 = vmul.f32 %v85, %v87
    %v89 = vadd.f32 %v85, %v88
    %vm90 = vweird.f32 %v85
    %v91 = vsel %vm90, %v85, %v89
    %v92 = vmul.f32 %v75, %v91
    %v93 = vmul.f32 %v78, %v91
    %v94 = vmul.f32 %v81, %v91
    %v95 = vmul.f32 %v84, %v91
    %v96 = vadd.f32 %v65, %v66
    %97 = vadd.xlane.f32.xlu0 %v96
    %v98 = vpop.xlane.xlu0 %97
    %v99 = vadd.f32 %v67, %v68
    %100 = vadd.xlane.f32.xlu0 %v99
    %v101 = vpop.xlane.xlu0 %100
    %v102 = vadd.f32 %v69, %v70
    %103 = vadd.xlane.f32.xlu0 %v102
    %v104 = vpop.xlane.xlu0 %103
    %v105 = vadd.f32 %v71, %v72
    %106 = vadd.xlane.f32.xlu0 %v105
    %v107 = vpop.xlane.xlu0 %106
    %v108 = vmul.f32 %v98, %v91
    %v109 = vmul.f32 %v101, %v91
    %v110 = vmul.f32 %v104, %v91
    %v111 = vmul.f32 %v107, %v91
    %vm112 = vcmask 7168
    %v113 = vsel %vm112, %v92, %v108
    %v114 = vsel %vm112, %v93, %v109
    %v115 = vsel %vm112, %v94, %v110
    %v116 = vsel %vm112, %v95, %v111
    %118 = vset.pattern.permute.xlu0 0
    %119 = vperm.xlu0 %118, %v44
    %v120 = vpop.permute.xlu0 %119
    %vm122 = vcmask 261120
    %v124 = vsel %vm122, %v21, 0
    %126 = vmatpush.msra.mxu0 0.0
    %127 = vmatpush.msra.mxu0 0.0
    %128 = vmatpush.msra.mxu0 0.0
    %129 = vmatpush.msra.mxu0 0.0
    %130 = vmatpush.msra.mxu0 0.0
    %131 = vmatpush.msra.mxu0 0.0
    %132 = vmatpush.msra.mxu0 0.0
    %133 = vmatpush.msra.mxu0 0.0
    %134 = vmatpush.msra.mxu0 0.0
    %135 = vmatpush.msra.mxu0 0.0
    %136 = vmatpush.msra.mxu0 0.0
    %137 = vmatpush.msra.mxu0 0.0
    %138 = vmatpush.msra.mxu0 %v116
    %139 = vmatpush.msra.mxu0 %v115
    %140 = vmatpush.msra.mxu0 %v114
    %141 = vmatpush.msra.mxu0 %v113
    %142 = vmatmul.f32.gmra.mxu0 %v124
    %v143 = vpop.f32.mrf.mxu0
    %v144 = vadd.f32 %v120, %v143
    %145 = vdwg.mxu0
    %v146 = vmax.f32 %v144, 0.0
    %147 = vset.pattern.permute.xlu0 1
    %148 = vperm.xlu0 %147, %v44
    %v149 = vpop.permute.xlu0 %148
    %152 = vset.pattern.permute.xlu0 1
    %153 = vperm.xlu0 %152, %v45
    %v154 = vpop.permute.xlu0 %153
    %157 = vset.pattern.permute.xlu0 1
    %158 = vperm.xlu0 %157, %v46
    %v159 = vpop.permute.xlu0 %158
    %162 = vset.pattern.permute.xlu0 1
    %163 = vperm.xlu0 %162, %v47
    %v164 = vpop.permute.xlu0 %163
    %vm166 = vcmask 15360
    %v168 = vsel %vm166, %v22, 0
    %v171 = vsel %vm166, %v23, 0
    %v174 = vsel %vm166, %v24, 0
    %v177 = vsel %vm166, %v25, 0
    %vm179 = vcmask 1041408
    %v181 = vsel %vm179, %v146, 0
    %183 = vmatpush.msra.mxu0 0.0
    %184 = vmatpush.msra.mxu0 0.0
    %185 = vmatpush.msra.mxu0 0.0
    %186 = vmatpush.msra.mxu0 0.0
    %187 = vmatpush.msra.mxu0 0.0
    %188 = vmatpush.msra.mxu0 0.0
    %189 = vmatpush.msra.mxu0 0.0
    %190 = vmatpush.msra.mxu0 0.0
    %191 = vmatpush.msra.mxu0 0.0
    %192 = vmatpush.msra.mxu0 0.0
    %193 = vmatpush.msra.mxu0 0.0
    %194 = vmatpush.msra.mxu0 0.0
    %195 = vmatpush.msra.mxu0 0.0
    %196 = vmatpush.msra.mxu0 0.0
    %197 = vmatpush.msra.mxu0 0.0
    %198 = vmatpush.msra.mxu0 %v181
    %199 = vmatmul.f32.gmra.mxu0 %v168
    %v200 = vpop.f32.mrf.mxu0
    %v201 = vadd.f32 %v149, %v200
    %202 = vmatmul.f32.gmra.mxu0 %v171
    %v203 = vpop.f32.mrf.mxu0
    %v204 = vadd.f32 %v154, %v203
    %205 = vmatmul.f32.gmra.mxu0 %v174
    %v206 = vpop.f32.mrf.mxu0
    %v207 = vadd.f32 %v159, %v206
    %208 = vmatmul.f32.gmra.mxu0 %v177
    %v209 = vpop.f32.mrf.mxu0
    %v210 = vadd.f32 %v164, %v209
    %211 = vdwg.mxu0
    %v212 = vsel %vm166, %v201, 0.0
    %213 = vadd.xlane.f32.xlu0 %v212
    %v214 = vpop.xlane.xlu0 %213
    %v215 = vsel %vm166, %v204, 0.0
    %216 = vadd.xlane.f32.xlu0 %v215
    %v217 = vpop.xlane.xlu0 %216
    %v218 = vsel %vm166, %v207, 0.0
    %219 = vadd.xlane.f32.xlu0 %v218
    %v220 = vpop.xlane.xlu0 %219
    %v221 = vsel %vm166, %v210, 0.0
    %222 = vadd.xlane.f32.xlu0 %v221
    %v223 = vpop.xlane.xlu0 %222
    %v224 = vrcp.pop 2.0
    %v225 = vmul.f32 2.0, %v224
    %v226 = vsub.f32 1.0, %v225
    %v227 = vmul.f32 %v224, %v226
    %v228 = vadd.f32 %v224, %v227
    %vm229 = vweird.f32 %v224
    %v230 = vsel %vm229, %v224, %v228
    %v231 = vmul.f32 %v214, %v230
    %v232 = vmul.f32 %v217, %v230
    %v233 = vmul.f32 %v220, %v230
    %v234 = vmul.f32 %v223, %v230
    %v235 = vsub.f32 %v201, %v231
    %v236 = vsub.f32 %v204, %v232
    %v237 = vsub.f32 %v207, %v233
    %v238 = vsub.f32 %v210, %v234
    %v239 = vmul.f32 %v235, %v235
    %v240 = vmul.f32 %v236, %v236
    %v241 = vmul.f32 %v237, %v237
    %v242 = vmul.f32 %v238, %v238
    %v243 = vsel %vm166, %v239, 0.0
    %244 = vadd.xlane.f32.xlu0 %v243
    %v245 = vpop.xlane.xlu0 %244
    %v246 = vsel %vm166, %v240, 0.0
    %247 = vadd.xlane.f32.xlu0 %v246
    %v248 = vpop.xlane.xlu0 %247
    %v249 = vsel %vm166, %v241, 0.0
    %250 = vadd.xlane.f32.xlu0 %v249
    %v251 = vpop.xlane.xlu0 %250
    %v252 = vsel %vm166, %v242, 0.0
    %253 = vadd.xlane.f32.xlu0 %v252
    %v254 = vpop.xlane.xlu0 %253
    %v255 = vmul.f32 %v245, %v230
    %v256 = vmul.f32 %v248, %v230
    %v257 = vmul.f32 %v251, %v230
    %v258 = vmul.f32 %v254, %v230
    %v259 = vadd.f32 %v255, 1e-05
    %v260 = vadd.f32 %v256, 1e-05
    %v261 = vadd.f32 %v257, 1e-05
    %v262 = vadd.f32 %v258, 1e-05
    %v263 = vrsqrt.pop %v259
    %v264 = vmul.f32 %v263, %v259
    %v265 = vmul.f32 %v264, %v263
    %v266 = vmul.f32 0.5, %v265
    %v267 = vsub.f32 1.5, %v266
    %v268 = vmul.f32 %v263, %v267
    %vm269 = vweird.f32 %v259
    %vm270 = vweird.f32 %v263
    %vm271 = vmor %vm269, %vm270
    %v272 = vsel %vm271, %v263, %v268
    %v273 = vrsqrt.pop %v260
    %v274 = vmul.f32 %v273, %v260
    %v275 = vmul.f32 %v274, %v273
    %v276 = vmul.f32 0.5, %v275
    %v277 = vsub.f32 1.5, %v276
    %v278 = vmul.f32 %v273, %v277
    %vm279 = vweird.f32 %v260
    %vm280 = vweird.f32 %v273
    %vm281 = vmor %vm279, %vm280
    %v282 = vsel %vm281, %v273, %v278
    %v283 = vrsqrt.pop %v261
    %v284 = vmul.f32 %v283, %v261
    %v285 = vmul.f32 %v284, %v283
    %v286 = vmul.f32 0.5, %v285
    %v287 = vsub.f32 1.5, %v286
    %v288 = vmul.f32 %v283, %v287
    %vm289 = vweird.f32 %v261
    %vm290 = vweird.f32 %v283
    %vm291 = vmor %vm289, %vm290
    %v292 = vsel %vm291, %v283, %v288
    %v293 = vrsqrt.pop %v262
    %v294 = vmul.f32 %v293, %v262
    %v295 = vmul.f32 %v294, %v293
    %v296 = vmul.f32 0.5, %v295
    %v297 = vsub.f32 1.5, %v296
    %v298 = vmul.f32 %v293, %v297
    %vm299 = vweird.f32 %v262
    %vm300 = vweird.f32 %v293
    %vm301 = vmor %vm299, %vm300
    %v302 = vsel %vm301, %v293, %v298
    %v303 = vmul.f32 %v235, %v272
    %v304 = vmul.f32 %v236, %v282
    %v305 = vmul.f32 %v237, %v292
    %v306 = vmul.f32 %v238, %v302
    %307 = vset.pattern.permute.xlu0 2
    %308 = vperm.xlu0 %307, %v44
    %v309 = vpop.permute.xlu0 %308
    %311 = vset.pattern.permute.xlu0 2
    %312 = vperm.xlu0 %311, %v45
    %v313 = vpop.permute.xlu0 %312
    %315 = vset.pattern.permute.xlu0 2
    %316 = vperm.xlu0 %315, %v46
    %v317 = vpop.permute.xlu0 %316
    %319 = vset.pattern.permute.xlu0 2
    %320 = vperm.xlu0 %319, %v47
    %v321 = vpop.permute.xlu0 %320
    %v323 = vmul.f32 %v303, %v309
    %v324 = vmul.f32 %v304, %v313
    %v325 = vmul.f32 %v305, %v317
    %v326 = vmul.f32 %v306, %v321
    %327 = vset.pattern.permute.xlu0 3
    %328 = vperm.xlu0 %327, %v44
    %v329 = vpop.permute.xlu0 %328
    %331 = vset.pattern.permute.xlu0 3
    %332 = vperm.xlu0 %331, %v45
    %v333 = vpop.permute.xlu0 %332
    %335 = vset.pattern.permute.xlu0 3
    %336 = vperm.xlu0 %335, %v46
    %v337 = vpop.permute.xlu0 %336
    %339 = vset.pattern.permute.xlu0 3
    %340 = vperm.xlu0 %339, %v47
    %v341 = vpop.permute.xlu0 %340
    %v343 = vadd.f32 %v323, %v329
    %v344 = vadd.f32 %v324, %v333
    %v345 = vadd.f32 %v325, %v337
    %v346 = vadd.f32 %v326, %v341
    %v347 = vlaneseq
    %v348 = vand.u32 %v347, 127
    %v349 = vadd.s32 %v348, 128
    %v350 = vadd.s32 %v348, 256
    %v351 = vadd.s32 %v348, 384
    %v352 = vand.u32 %v348, 255
    %v353 = vand.u32 %v349, 255
    %v354 = vand.u32 %v350, 255
    %v355 = vand.u32 %v351, 255
    %v356 = vand.u32 %v352, 15
    %v357 = vand.u32 %v353, 15
    %v358 = vand.u32 %v354, 15
    %v359 = vand.u32 %v355, 15
    %vm360 = vcmp.ge.s32.totalorder %v352, 64
    %vm361 = vcmp.ge.s32.totalorder %v353, 64
    %vm362 = vcmp.ge.s32.totalorder %v354, 64
    %vm363 = vcmp.ge.s32.totalorder %v355, 64
    %vm364 = vcmp.lt.s32.totalorder %v352, 320
    %vm365 = vcmp.lt.s32.totalorder %v353, 320
    %vm366 = vcmp.lt.s32.totalorder %v354, 320
    %vm367 = vcmp.lt.s32.totalorder %v355, 320
    %vm368 = vmand %vm360, %vm364
    %vm369 = vmand %vm361, %vm365
    %vm370 = vmand %vm362, %vm366
    %vm371 = vmand %vm363, %vm367
    %vm372 = vcmp.ge.s32.totalorder %v356, 4
    %vm373 = vcmp.ge.s32.totalorder %v357, 4
    %vm374 = vcmp.ge.s32.totalorder %v358, 4
    %vm375 = vcmp.ge.s32.totalorder %v359, 4
    %vm376 = vmand %vm368, %vm372
    %vm377 = vmand %vm369, %vm373
    %vm378 = vmand %vm370, %vm374
    %vm379 = vmand %vm371, %vm375
    %vm380 = vcmp.lt.s32.totalorder %v356, 20
    %vm381 = vcmp.lt.s32.totalorder %v357, 20
    %vm382 = vcmp.lt.s32.totalorder %v358, 20
    %vm383 = vcmp.lt.s32.totalorder %v359, 20
    %vm384 = vmand %vm376, %vm380
    %vm385 = vmand %vm377, %vm381
    %vm386 = vmand %vm378, %vm382
    %vm387 = vmand %vm379, %vm383
    %v388 = vsel %vm384, 1.0, 0.0
    %v389 = vsel %vm385, 1.0, 0.0
    %v390 = vsel %vm386, 1.0, 0.0
    %v391 = vsel %vm387, 1.0, 0.0
    %vm392 = vcmp.ge.s32.totalorder %v356, 0
    %vm393 = vcmp.ge.s32.totalorder %v357, 0
    %vm394 = vcmp.ge.s32.totalorder %v358, 0
    %vm395 = vcmp.ge.s32.totalorder %v359, 0
    %vm396 = vmand %vm368, %vm392
    %vm397 = vmand %vm369, %vm393
    %vm398 = vmand %vm370, %vm394
    %vm399 = vmand %vm371, %vm395
    %vm400 = vcmp.lt.s32.totalorder %v356, 16
    %vm401 = vcmp.lt.s32.totalorder %v357, 16
    %vm402 = vcmp.lt.s32.totalorder %v358, 16
    %vm403 = vcmp.lt.s32.totalorder %v359, 16
    %vm404 = vmand %vm396, %vm400
    %vm405 = vmand %vm397, %vm401
    %vm406 = vmand %vm398, %vm402
    %vm407 = vmand %vm399, %vm403
    %v408 = vsel %vm404, 1.0, 0.0
    %v409 = vsel %vm405, 1.0, 0.0
    %v410 = vsel %vm406, 1.0, 0.0
    %v411 = vsel %vm407, 1.0, 0.0
    %vm412 = vcmp.ge.s32.totalorder %v356, 4294967292
    %vm413 = vcmp.ge.s32.totalorder %v357, 4294967292
    %vm414 = vcmp.ge.s32.totalorder %v358, 4294967292
    %vm415 = vcmp.ge.s32.totalorder %v359, 4294967292
    %vm416 = vmand %vm368, %vm412
    %vm417 = vmand %vm369, %vm413
    %vm418 = vmand %vm370, %vm414
    %vm419 = vmand %vm371, %vm415
    %vm420 = vcmp.lt.s32.totalorder %v356, 12
    %vm421 = vcmp.lt.s32.totalorder %v357, 12
    %vm422 = vcmp.lt.s32.totalorder %v358, 12
    %vm423 = vcmp.lt.s32.totalorder %v359, 12
    %vm424 = vmand %vm416, %vm420
    %vm425 = vmand %vm417, %vm421
    %vm426 = vmand %vm418, %vm422
    %vm427 = vmand %vm419, %vm423
    %v428 = vsel %vm424, 1.0, 0.0
    %v429 = vsel %vm425, 1.0, 0.0
    %v430 = vsel %vm426, 1.0, 0.0
    %v431 = vsel %vm427, 1.0, 0.0
    %vm432 = vcmp.ge.s32.totalorder %v352, 0
    %vm433 = vcmp.ge.s32.totalorder %v353, 0
    %vm434 = vcmp.ge.s32.totalorder %v354, 0
    %vm435 = vcmp.ge.s32.totalorder %v355, 0
    %vm436 = vcmp.lt.s32.totalorder %v352, 256
    %vm437 = vcmp.lt.s32.totalorder %v353, 256
    %vm438 = vcmp.lt.s32.totalorder %v354, 256
    %vm439 = vcmp.lt.s32.totalorder %v355, 256
    %vm440 = vmand %vm432, %vm436
    %vm441 = vmand %vm433, %vm437
    %vm442 = vmand %vm434, %vm438
    %vm443 = vmand %vm435, %vm439
    %vm444 = vmand %vm440, %vm372
    %vm445 = vmand %vm441, %vm373
    %vm446 = vmand %vm442, %vm374
    %vm447 = vmand %vm443, %vm375
    %vm448 = vmand %vm444, %vm380
    %vm449 = vmand %vm445, %vm381
    %vm450 = vmand %vm446, %vm382
    %vm451 = vmand %vm447, %vm383
    %v452 = vsel %vm448, 1.0, 0.0
    %v453 = vsel %vm449, 1.0, 0.0
    %v454 = vsel %vm450, 1.0, 0.0
    %v455 = vsel %vm451, 1.0, 0.0
    %vm456 = vmand %vm440, %vm412
    %vm457 = vmand %vm441, %vm413
    %vm458 = vmand %vm442, %vm414
    %vm459 = vmand %vm443, %vm415
    %vm460 = vmand %vm456, %vm420
    %vm461 = vmand %vm457, %vm421
    %vm462 = vmand %vm458, %vm422
    %vm463 = vmand %vm459, %vm423
    %v464 = vsel %vm460, 1.0, 0.0
    %v465 = vsel %vm461, 1.0, 0.0
    %v466 = vsel %vm462, 1.0, 0.0
    %v467 = vsel %vm463, 1.0, 0.0
    %vm468 = vcmp.ge.s32.totalorder %v352, 4294967232
    %vm469 = vcmp.ge.s32.totalorder %v353, 4294967232
    %vm470 = vcmp.ge.s32.totalorder %v354, 4294967232
    %vm471 = vcmp.ge.s32.totalorder %v355, 4294967232
    %vm472 = vcmp.lt.s32.totalorder %v352, 192
    %vm473 = vcmp.lt.s32.totalorder %v353, 192
    %vm474 = vcmp.lt.s32.totalorder %v354, 192
    %vm475 = vcmp.lt.s32.totalorder %v355, 192
    %vm476 = vmand %vm468, %vm472
    %vm477 = vmand %vm469, %vm473
    %vm478 = vmand %vm470, %vm474
    %vm479 = vmand %vm471, %vm475
    %vm480 = vmand %vm476, %vm372
    %vm481 = vmand %vm477, %vm373
    %vm482 = vmand %vm478, %vm374
    %vm483 = vmand %vm479, %vm375
    %vm484 = vmand %vm480, %vm380
    %vm485 = vmand %vm481, %vm381
    %vm486 = vmand %vm482, %vm382
    %vm487 = vmand %vm483, %vm383
    %v488 = vsel %vm484, 1.0, 0.0
    %v489 = vsel %vm485, 1.0, 0.0
    %v490 = vsel %vm486, 1.0, 0.0
    %v491 = vsel %vm487, 1.0, 0.0
    %vm492 = vmand %vm476, %vm392
    %vm493 = vmand %vm477, %vm393
    %vm494 = vmand %vm478, %vm394
    %vm495 = vmand %vm479, %vm395
    %vm496 = vmand %vm492, %vm400
    %vm497 = vmand %vm493, %vm401
    %vm498 = vmand %vm494, %vm402
    %vm499 = vmand %vm495, %vm403
    %v500 = vsel %vm496, 1.0, 0.0
    %v501 = vsel %vm497, 1.0, 0.0
    %v502 = vsel %vm498, 1.0, 0.0
    %v503 = vsel %vm499, 1.0, 0.0
    %vm504 = vmand %vm476, %vm412
    %vm505 = vmand %vm477, %vm413
    %vm506 = vmand %vm478, %vm414
    %vm507 = vmand %vm479, %vm415
    %vm508 = vmand %vm504, %vm420
    %vm509 = vmand %vm505, %vm421
    %vm510 = vmand %vm506, %vm422
    %vm511 = vmand %vm507, %vm423
    %v512 = vsel %vm508, 1.0, 0.0
    %v513 = vsel %vm509, 1.0, 0.0
    %v514 = vsel %vm510, 1.0, 0.0
    %v515 = vsel %vm511, 1.0, 0.0
    %516 = vset.pattern.permute.xlu0 4
    %517 = vperm.xlu0 %516, %v44
    %v518 = vpop.permute.xlu0 %517
    %v520 = vrot.slane %v21, 2
    %v521 = vsel %vm122, %v520, 0
    %523 = vmatpush.msra.mxu0 0.0
    %524 = vmatpush.msra.mxu0 0.0
    %525 = vmatpush.msra.mxu0 0.0
    %526 = vmatpush.msra.mxu0 0.0
    %527 = vmatpush.msra.mxu0 0.0
    %528 = vmatpush.msra.mxu0 0.0
    %529 = vmatpush.msra.mxu0 0.0
    %530 = vmatpush.msra.mxu0 0.0
    %531 = vmatpush.msra.mxu0 0.0
    %532 = vmatpush.msra.mxu0 0.0
    %533 = vmatpush.msra.mxu0 0.0
    %534 = vmatpush.msra.mxu0 0.0
    %535 = vmatpush.msra.mxu0 %v58
    %536 = vmatpush.msra.mxu0 %v56
    %537 = vmatpush.msra.mxu0 %v54
    %538 = vmatpush.msra.mxu0 %v52
    %539 = vmatmul.f32.gmra.mxu0 %v521
    %v540 = vpop.f32.mrf.mxu0
    %v541 = vadd.f32 %v518, %v540
    %542 = vdwg.mxu0
    %543 = vmatpush.msra.mxu0 0.0
    %544 = vmatpush.msra.mxu0 0.0
    %545 = vmatpush.msra.mxu0 0.0
    %546 = vmatpush.msra.mxu0 0.0
    %547 = vmatpush.msra.mxu0 0.0
    %548 = vmatpush.msra.mxu0 0.0
    %549 = vmatpush.msra.mxu0 0.0
    %550 = vmatpush.msra.mxu0 0.0
    %551 = vmatpush.msra.mxu0 0.0
    %552 = vmatpush.msra.mxu0 0.0
    %553 = vmatpush.msra.mxu0 0.0
    %554 = vmatpush.msra.mxu0 0.0
    %555 = vmatpush.msra.mxu0 %v59
    %556 = vmatpush.msra.mxu0 %v57
    %557 = vmatpush.msra.mxu0 %v55
    %558 = vmatpush.msra.mxu0 %v53
    %559 = vmatmul.f32.gmra.mxu0 %v521
    %v560 = vpop.f32.mrf.mxu0
    %v561 = vadd.f32 %v518, %v560
    %562 = vdwg.mxu0
    %563 = vmatpush.msra.mxu0 0.0
    %564 = vmatpush.msra.mxu0 0.0
    %565 = vmatpush.msra.mxu0 0.0
    %566 = vmatpush.msra.mxu0 0.0
    %567 = vmatpush.msra.mxu0 0.0
    %568 = vmatpush.msra.mxu0 0.0
    %569 = vmatpush.msra.mxu0 0.0
    %570 = vmatpush.msra.mxu0 0.0
    %571 = vmatpush.msra.mxu0 0.0
    %572 = vmatpush.msra.mxu0 0.0
    %573 = vmatpush.msra.mxu0 0.0
    %574 = vmatpush.msra.mxu0 0.0
    %575 = vmatpush.msra.mxu0 %v71
    %576 = vmatpush.msra.mxu0 %v69
    %577 = vmatpush.msra.mxu0 %v67
    %578 = vmatpush.msra.mxu0 %v65
    %579 = vmatmul.f32.gmra.mxu0 %v521
    %v580 = vpop.f32.mrf.mxu0
    %v581 = vadd.f32 %v518, %v580
    %582 = vdwg.mxu0
    %583 = vmatpush.msra.mxu0 0.0
    %584 = vmatpush.msra.mxu0 0.0
    %585 = vmatpush.msra.mxu0 0.0
    %586 = vmatpush.msra.mxu0 0.0
    %587 = vmatpush.msra.mxu0 0.0
    %588 = vmatpush.msra.mxu0 0.0
    %589 = vmatpush.msra.mxu0 0.0
    %590 = vmatpush.msra.mxu0 0.0
    %591 = vmatpush.msra.mxu0 0.0
    %592 = vmatpush.msra.mxu0 0.0
    %593 = vmatpush.msra.mxu0 0.0
    %594 = vmatpush.msra.mxu0 0.0
    %595 = vmatpush.msra.mxu0 %v72
    %596 = vmatpush.msra.mxu0 %v70
    %597 = vmatpush.msra.mxu0 %v68
    %598 = vmatpush.msra.mxu0 %v66
    %599 = vmatmul.f32.gmra.mxu0 %v521
    %v600 = vpop.f32.mrf.mxu0
    %v601 = vadd.f32 %v518, %v600
    %602 = vdwg.mxu0
    %603 = vrot.lane.b32.xlu0 %v541, 68
    %v604 = vpop.permute.xlu0 %603
    %605 = vrot.lane.b32.xlu0 %v561, 68
    %v606 = vpop.permute.xlu0 %605
    %607 = vrot.lane.b32.xlu0 %v581, 68
    %v608 = vpop.permute.xlu0 %607
    %609 = vrot.lane.b32.xlu0 %v601, 68
    %v610 = vpop.permute.xlu0 %609
    %vm611 = vcmp.lt.s32.totalorder %v348, 68
    %v612 = vsel %vm611, %v608, %v610
    %v613 = vsel %vm611, %v606, %v608
    %v614 = vsel %vm611, %v604, %v606
    %v615 = vsel %vm611, %v610, %v604
    %v616 = vmul.f32 %v615, %v388
    %v617 = vmul.f32 %v614, %v389
    %v618 = vmul.f32 %v613, %v390
    %v619 = vmul.f32 %v612, %v391
    %620 = vrot.lane.b32.xlu0 %v541, 64
    %v621 = vpop.permute.xlu0 %620
    %622 = vrot.lane.b32.xlu0 %v561, 64
    %v623 = vpop.permute.xlu0 %622
    %624 = vrot.lane.b32.xlu0 %v581, 64
    %v625 = vpop.permute.xlu0 %624
    %626 = vrot.lane.b32.xlu0 %v601, 64
    %v627 = vpop.permute.xlu0 %626
    %vm628 = vcmp.lt.s32.totalorder %v348, 64
    %v629 = vsel %vm628, %v625, %v627
    %v630 = vsel %vm628, %v623, %v625
    %v631 = vsel %vm628, %v621, %v623
    %v632 = vsel %vm628, %v627, %v621
    %v633 = vmul.f32 %v632, %v408
    %v634 = vmul.f32 %v631, %v409
    %v635 = vmul.f32 %v630, %v410
    %v636 = vmul.f32 %v629, %v411
    %v638 = vsel %vm166, %v27, 0
    %v641 = vsel %vm179, %v633, 0
    %v644 = vsel %vm179, %v634, 0
    %v647 = vsel %vm179, %v635, 0
    %v650 = vsel %vm179, %v636, 0
    %652 = vmatpush.msra.mxu0 0.0
    %653 = vmatpush.msra.mxu0 0.0
    %654 = vmatpush.msra.mxu0 0.0
    %655 = vmatpush.msra.mxu0 0.0
    %656 = vmatpush.msra.mxu0 0.0
    %657 = vmatpush.msra.mxu0 0.0
    %658 = vmatpush.msra.mxu0 0.0
    %659 = vmatpush.msra.mxu0 0.0
    %660 = vmatpush.msra.mxu0 0.0
    %661 = vmatpush.msra.mxu0 0.0
    %662 = vmatpush.msra.mxu0 0.0
    %663 = vmatpush.msra.mxu0 0.0
    %664 = vmatpush.msra.mxu0 0.0
    %665 = vmatpush.msra.mxu0 0.0
    %666 = vmatpush.msra.mxu0 0.0
    %667 = vmatpush.msra.mxu0 %v641
    %668 = vmatmul.f32.gmra.mxu0 %v638
    %v669 = vpop.f32.mrf.mxu0
    %v670 = vadd.f32 0.0, %v669
    %671 = vdwg.mxu0
    %672 = vmatpush.msra.mxu0 0.0
    %673 = vmatpush.msra.mxu0 0.0
    %674 = vmatpush.msra.mxu0 0.0
    %675 = vmatpush.msra.mxu0 0.0
    %676 = vmatpush.msra.mxu0 0.0
    %677 = vmatpush.msra.mxu0 0.0
    %678 = vmatpush.msra.mxu0 0.0
    %679 = vmatpush.msra.mxu0 0.0
    %680 = vmatpush.msra.mxu0 0.0
    %681 = vmatpush.msra.mxu0 0.0
    %682 = vmatpush.msra.mxu0 0.0
    %683 = vmatpush.msra.mxu0 0.0
    %684 = vmatpush.msra.mxu0 0.0
    %685 = vmatpush.msra.mxu0 0.0
    %686 = vmatpush.msra.mxu0 0.0
    %687 = vmatpush.msra.mxu0 %v644
    %688 = vmatmul.f32.gmra.mxu0 %v638
    %v689 = vpop.f32.mrf.mxu0
    %v690 = vadd.f32 0.0, %v689
    %691 = vdwg.mxu0
    %692 = vmatpush.msra.mxu0 0.0
    %693 = vmatpush.msra.mxu0 0.0
    %694 = vmatpush.msra.mxu0 0.0
    %695 = vmatpush.msra.mxu0 0.0
    %696 = vmatpush.msra.mxu0 0.0
    %697 = vmatpush.msra.mxu0 0.0
    %698 = vmatpush.msra.mxu0 0.0
    %699 = vmatpush.msra.mxu0 0.0
    %700 = vmatpush.msra.mxu0 0.0
    %701 = vmatpush.msra.mxu0 0.0
    %702 = vmatpush.msra.mxu0 0.0
    %703 = vmatpush.msra.mxu0 0.0
    %704 = vmatpush.msra.mxu0 0.0
    %705 = vmatpush.msra.mxu0 0.0
    %706 = vmatpush.msra.mxu0 0.0
    %707 = vmatpush.msra.mxu0 %v647
    %708 = vmatmul.f32.gmra.mxu0 %v638
    %v709 = vpop.f32.mrf.mxu0
    %v710 = vadd.f32 0.0, %v709
    %711 = vdwg.mxu0
    %712 = vmatpush.msra.mxu0 0.0
    %713 = vmatpush.msra.mxu0 0.0
    %714 = vmatpush.msra.mxu0 0.0
    %715 = vmatpush.msra.mxu0 0.0
    %716 = vmatpush.msra.mxu0 0.0
    %717 = vmatpush.msra.mxu0 0.0
    %718 = vmatpush.msra.mxu0 0.0
    %719 = vmatpush.msra.mxu0 0.0
    %720 = vmatpush.msra.mxu0 0.0
    %721 = vmatpush.msra.mxu0 0.0
    %722 = vmatpush.msra.mxu0 0.0
    %723 = vmatpush.msra.mxu0 0.0
    %724 = vmatpush.msra.mxu0 0.0
    %725 = vmatpush.msra.mxu0 0.0
    %726 = vmatpush.msra.mxu0 0.0
    %727 = vmatpush.msra.mxu0 %v650
    %728 = vmatmul.f32.gmra.mxu0 %v638
    %v729 = vpop.f32.mrf.mxu0
    %v730 = vadd.f32 0.0, %v729
    %731 = vdwg.mxu0
    %v733 = vsel %vm166, %v26, 0
    %v736 = vsel %vm179, %v616, 0
    %v739 = vsel %vm179, %v617, 0
    %v742 = vsel %vm179, %v618, 0
    %v745 = vsel %vm179, %v619, 0
    %747 = vmatpush.msra.mxu0 0.0
    %748 = vmatpush.msra.mxu0 0.0
    %749 = vmatpush.msra.mxu0 0.0
    %750 = vmatpush.msra.mxu0 0.0
    %751 = vmatpush.msra.mxu0 0.0
    %752 = vmatpush.msra.mxu0 0.0
    %753 = vmatpush.msra.mxu0 0.0
    %754 = vmatpush.msra.mxu0 0.0
    %755 = vmatpush.msra.mxu0 0.0
    %756 = vmatpush.msra.mxu0 0.0
    %757 = vmatpush.msra.mxu0 0.0
    %758 = vmatpush.msra.mxu0 0.0
    %759 = vmatpush.msra.mxu0 0.0
    %760 = vmatpush.msra.mxu0 0.0
    %761 = vmatpush.msra.mxu0 0.0
    %762 = vmatpush.msra.mxu0 %v736
    %763 = vmatmul.f32.gmra.mxu0 %v733
    %v764 = vpop.f32.mrf.mxu0
    %v765 = vadd.f32 %v670, %v764
    %766 = vdwg.mxu0
    %767 = vmatpush.msra.mxu0 0.0
    %768 = vmatpush.msra.mxu0 0.0
    %769 = vmatpush.msra.mxu0 0.0
    %770 = vmatpush.msra.mxu0 0.0
    %771 = vmatpush.msra.mxu0 0.0
    %772 = vmatpush.msra.mxu0 0.0
    %773 = vmatpush.msra.mxu0 0.0
    %774 = vmatpush.msra.mxu0 0.0
    %775 = vmatpush.msra.mxu0 0.0
    %776 = vmatpush.msra.mxu0 0.0
    %777 = vmatpush.msra.mxu0 0.0
    %778 = vmatpush.msra.mxu0 0.0
    %779 = vmatpush.msra.mxu0 0.0
    %780 = vmatpush.msra.mxu0 0.0
    %781 = vmatpush.msra.mxu0 0.0
    %782 = vmatpush.msra.mxu0 %v739
    %783 = vmatmul.f32.gmra.mxu0 %v733
    %v784 = vpop.f32.mrf.mxu0
    %v785 = vadd.f32 %v690, %v784
    %786 = vdwg.mxu0
    %787 = vmatpush.msra.mxu0 0.0
    %788 = vmatpush.msra.mxu0 0.0
    %789 = vmatpush.msra.mxu0 0.0
    %790 = vmatpush.msra.mxu0 0.0
    %791 = vmatpush.msra.mxu0 0.0
    %792 = vmatpush.msra.mxu0 0.0
    %793 = vmatpush.msra.mxu0 0.0
    %794 = vmatpush.msra.mxu0 0.0
    %795 = vmatpush.msra.mxu0 0.0
    %796 = vmatpush.msra.mxu0 0.0
    %797 = vmatpush.msra.mxu0 0.0
    %798 = vmatpush.msra.mxu0 0.0
    %799 = vmatpush.msra.mxu0 0.0
    %800 = vmatpush.msra.mxu0 0.0
    %801 = vmatpush.msra.mxu0 0.0
    %802 = vmatpush.msra.mxu0 %v742
    %803 = vmatmul.f32.gmra.mxu0 %v733
    %v804 = vpop.f32.mrf.mxu0
    %v805 = vadd.f32 %v710, %v804
    %806 = vdwg.mxu0
    %807 = vmatpush.msra.mxu0 0.0
    %808 = vmatpush.msra.mxu0 0.0
    %809 = vmatpush.msra.mxu0 0.0
    %810 = vmatpush.msra.mxu0 0.0
    %811 = vmatpush.msra.mxu0 0.0
    %812 = vmatpush.msra.mxu0 0.0
    %813 = vmatpush.msra.mxu0 0.0
    %814 = vmatpush.msra.mxu0 0.0
    %815 = vmatpush.msra.mxu0 0.0
    %816 = vmatpush.msra.mxu0 0.0
    %817 = vmatpush.msra.mxu0 0.0
    %818 = vmatpush.msra.mxu0 0.0
    %819 = vmatpush.msra.mxu0 0.0
    %820 = vmatpush.msra.mxu0 0.0
    %821 = vmatpush.msra.mxu0 0.0
    %822 = vmatpush.msra.mxu0 %v745
    %823 = vmatmul.f32.gmra.mxu0 %v733
    %v824 = vpop.f32.mrf.mxu0
    %v825 = vadd.f32 %v730, %v824
    %826 = vdwg.mxu0
    %827 = vrot.lane.b32.xlu0 %v541, 60
    %v828 = vpop.permute.xlu0 %827
    %829 = vrot.lane.b32.xlu0 %v561, 60
    %v830 = vpop.permute.xlu0 %829
    %831 = vrot.lane.b32.xlu0 %v581, 60
    %v832 = vpop.permute.xlu0 %831
    %833 = vrot.lane.b32.xlu0 %v601, 60
    %v834 = vpop.permute.xlu0 %833
    %vm835 = vcmp.lt.s32.totalorder %v348, 60
    %v836 = vsel %vm835, %v832, %v834
    %v837 = vsel %vm835, %v830, %v832
    %v838 = vsel %vm835, %v828, %v830
    %v839 = vsel %vm835, %v834, %v828
    %v840 = vmul.f32 %v839, %v428
    %v841 = vmul.f32 %v838, %v429
    %v842 = vmul.f32 %v837, %v430
    %v843 = vmul.f32 %v836, %v431
    %v845 = vsel %vm166, %v28, 0
    %v848 = vsel %vm179, %v840, 0
    %v851 = vsel %vm179, %v841, 0
    %v854 = vsel %vm179, %v842, 0
    %v857 = vsel %vm179, %v843, 0
    %859 = vmatpush.msra.mxu0 0.0
    %860 = vmatpush.msra.mxu0 0.0
    %861 = vmatpush.msra.mxu0 0.0
    %862 = vmatpush.msra.mxu0 0.0
    %863 = vmatpush.msra.mxu0 0.0
    %864 = vmatpush.msra.mxu0 0.0
    %865 = vmatpush.msra.mxu0 0.0
    %866 = vmatpush.msra.mxu0 0.0
    %867 = vmatpush.msra.mxu0 0.0
    %868 = vmatpush.msra.mxu0 0.0
    %869 = vmatpush.msra.mxu0 0.0
    %870 = vmatpush.msra.mxu0 0.0
    %871 = vmatpush.msra.mxu0 0.0
    %872 = vmatpush.msra.mxu0 0.0
    %873 = vmatpush.msra.mxu0 0.0
    %874 = vmatpush.msra.mxu0 %v848
    %875 = vmatmul.f32.gmra.mxu0 %v845
    %v876 = vpop.f32.mrf.mxu0
    %v877 = vadd.f32 0.0, %v876
    %878 = vdwg.mxu0
    %879 = vmatpush.msra.mxu0 0.0
    %880 = vmatpush.msra.mxu0 0.0
    %881 = vmatpush.msra.mxu0 0.0
    %882 = vmatpush.msra.mxu0 0.0
    %883 = vmatpush.msra.mxu0 0.0
    %884 = vmatpush.msra.mxu0 0.0
    %885 = vmatpush.msra.mxu0 0.0
    %886 = vmatpush.msra.mxu0 0.0
    %887 = vmatpush.msra.mxu0 0.0
    %888 = vmatpush.msra.mxu0 0.0
    %889 = vmatpush.msra.mxu0 0.0
    %890 = vmatpush.msra.mxu0 0.0
    %891 = vmatpush.msra.mxu0 0.0
    %892 = vmatpush.msra.mxu0 0.0
    %893 = vmatpush.msra.mxu0 0.0
    %894 = vmatpush.msra.mxu0 %v851
    %895 = vmatmul.f32.gmra.mxu0 %v845
    %v896 = vpop.f32.mrf.mxu0
    %v897 = vadd.f32 0.0, %v896
    %898 = vdwg.mxu0
    %899 = vmatpush.msra.mxu0 0.0
    %900 = vmatpush.msra.mxu0 0.0
    %901 = vmatpush.msra.mxu0 0.0
    %902 = vmatpush.msra.mxu0 0.0
    %903 = vmatpush.msra.mxu0 0.0
    %904 = vmatpush.msra.mxu0 0.0
    %905 = vmatpush.msra.mxu0 0.0
    %906 = vmatpush.msra.mxu0 0.0
    %907 = vmatpush.msra.mxu0 0.0
    %908 = vmatpush.msra.mxu0 0.0
    %909 = vmatpush.msra.mxu0 0.0
    %910 = vmatpush.msra.mxu0 0.0
    %911 = vmatpush.msra.mxu0 0.0
    %912 = vmatpush.msra.mxu0 0.0
    %913 = vmatpush.msra.mxu0 0.0
    %914 = vmatpush.msra.mxu0 %v854
    %915 = vmatmul.f32.gmra.mxu0 %v845
    %v916 = vpop.f32.mrf.mxu0
    %v917 = vadd.f32 0.0, %v916
    %918 = vdwg.mxu0
    %919 = vmatpush.msra.mxu0 0.0
    %920 = vmatpush.msra.mxu0 0.0
    %921 = vmatpush.msra.mxu0 0.0
    %922 = vmatpush.msra.mxu0 0.0
    %923 = vmatpush.msra.mxu0 0.0
    %924 = vmatpush.msra.mxu0 0.0
    %925 = vmatpush.msra.mxu0 0.0
    %926 = vmatpush.msra.mxu0 0.0
    %927 = vmatpush.msra.mxu0 0.0
    %928 = vmatpush.msra.mxu0 0.0
    %929 = vmatpush.msra.mxu0 0.0
    %930 = vmatpush.msra.mxu0 0.0
    %931 = vmatpush.msra.mxu0 0.0
    %932 = vmatpush.msra.mxu0 0.0
    %933 = vmatpush.msra.mxu0 0.0
    %934 = vmatpush.msra.mxu0 %v857
    %935 = vmatmul.f32.gmra.mxu0 %v845
    %v936 = vpop.f32.mrf.mxu0
    %v937 = vadd.f32 0.0, %v936
    %938 = vdwg.mxu0
    %v939 = vadd.f32 %v765, %v877
    %v940 = vadd.f32 %v785, %v897
    %v941 = vadd.f32 %v805, %v917
    %v942 = vadd.f32 %v825, %v937
    %943 = vrot.lane.b32.xlu0 %v541, 4
    %v944 = vpop.permute.xlu0 %943
    %945 = vrot.lane.b32.xlu0 %v561, 4
    %v946 = vpop.permute.xlu0 %945
    %947 = vrot.lane.b32.xlu0 %v581, 4
    %v948 = vpop.permute.xlu0 %947
    %949 = vrot.lane.b32.xlu0 %v601, 4
    %v950 = vpop.permute.xlu0 %949
    %vm951 = vcmp.lt.s32.totalorder %v348, 4
    %v952 = vsel %vm951, %v948, %v950
    %v953 = vsel %vm951, %v946, %v948
    %v954 = vsel %vm951, %v944, %v946
    %v955 = vsel %vm951, %v950, %v944
    %v956 = vmul.f32 %v955, %v452
    %v957 = vmul.f32 %v954, %v453
    %v958 = vmul.f32 %v953, %v454
    %v959 = vmul.f32 %v952, %v455
    %v961 = vsel %vm166, %v29, 0
    %v964 = vsel %vm179, %v956, 0
    %v967 = vsel %vm179, %v957, 0
    %v970 = vsel %vm179, %v958, 0
    %v973 = vsel %vm179, %v959, 0
    %975 = vmatpush.msra.mxu0 0.0
    %976 = vmatpush.msra.mxu0 0.0
    %977 = vmatpush.msra.mxu0 0.0
    %978 = vmatpush.msra.mxu0 0.0
    %979 = vmatpush.msra.mxu0 0.0
    %980 = vmatpush.msra.mxu0 0.0
    %981 = vmatpush.msra.mxu0 0.0
    %982 = vmatpush.msra.mxu0 0.0
    %983 = vmatpush.msra.mxu0 0.0
    %984 = vmatpush.msra.mxu0 0.0
    %985 = vmatpush.msra.mxu0 0.0
    %986 = vmatpush.msra.mxu0 0.0
    %987 = vmatpush.msra.mxu0 0.0
    %988 = vmatpush.msra.mxu0 0.0
    %989 = vmatpush.msra.mxu0 0.0
    %990 = vmatpush.msra.mxu0 %v964
    %991 = vmatmul.f32.gmra.mxu0 %v961
    %v992 = vpop.f32.mrf.mxu0
    %v993 = vadd.f32 0.0, %v992
    %994 = vdwg.mxu0
    %995 = vmatpush.msra.mxu0 0.0
    %996 = vmatpush.msra.mxu0 0.0
    %997 = vmatpush.msra.mxu0 0.0
    %998 = vmatpush.msra.mxu0 0.0
    %999 = vmatpush.msra.mxu0 0.0
    %1000 = vmatpush.msra.mxu0 0.0
    %1001 = vmatpush.msra.mxu0 0.0
    %1002 = vmatpush.msra.mxu0 0.0
    %1003 = vmatpush.msra.mxu0 0.0
    %1004 = vmatpush.msra.mxu0 0.0
    %1005 = vmatpush.msra.mxu0 0.0
    %1006 = vmatpush.msra.mxu0 0.0
    %1007 = vmatpush.msra.mxu0 0.0
    %1008 = vmatpush.msra.mxu0 0.0
    %1009 = vmatpush.msra.mxu0 0.0
    %1010 = vmatpush.msra.mxu0 %v967
    %1011 = vmatmul.f32.gmra.mxu0 %v961
    %v1012 = vpop.f32.mrf.mxu0
    %v1013 = vadd.f32 0.0, %v1012
    %1014 = vdwg.mxu0
    %1015 = vmatpush.msra.mxu0 0.0
    %1016 = vmatpush.msra.mxu0 0.0
    %1017 = vmatpush.msra.mxu0 0.0
    %1018 = vmatpush.msra.mxu0 0.0
    %1019 = vmatpush.msra.mxu0 0.0
    %1020 = vmatpush.msra.mxu0 0.0
    %1021 = vmatpush.msra.mxu0 0.0
    %1022 = vmatpush.msra.mxu0 0.0
    %1023 = vmatpush.msra.mxu0 0.0
    %1024 = vmatpush.msra.mxu0 0.0
    %1025 = vmatpush.msra.mxu0 0.0
    %1026 = vmatpush.msra.mxu0 0.0
    %1027 = vmatpush.msra.mxu0 0.0
    %1028 = vmatpush.msra.mxu0 0.0
    %1029 = vmatpush.msra.mxu0 0.0
    %1030 = vmatpush.msra.mxu0 %v970
    %1031 = vmatmul.f32.gmra.mxu0 %v961
    %v1032 = vpop.f32.mrf.mxu0
    %v1033 = vadd.f32 0.0, %v1032
    %1034 = vdwg.mxu0
    %1035 = vmatpush.msra.mxu0 0.0
    %1036 = vmatpush.msra.mxu0 0.0
    %1037 = vmatpush.msra.mxu0 0.0
    %1038 = vmatpush.msra.mxu0 0.0
    %1039 = vmatpush.msra.mxu0 0.0
    %1040 = vmatpush.msra.mxu0 0.0
    %1041 = vmatpush.msra.mxu0 0.0
    %1042 = vmatpush.msra.mxu0 0.0
    %1043 = vmatpush.msra.mxu0 0.0
    %1044 = vmatpush.msra.mxu0 0.0
    %1045 = vmatpush.msra.mxu0 0.0
    %1046 = vmatpush.msra.mxu0 0.0
    %1047 = vmatpush.msra.mxu0 0.0
    %1048 = vmatpush.msra.mxu0 0.0
    %1049 = vmatpush.msra.mxu0 0.0
    %1050 = vmatpush.msra.mxu0 %v973
    %1051 = vmatmul.f32.gmra.mxu0 %v961
    %v1052 = vpop.f32.mrf.mxu0
    %v1053 = vadd.f32 0.0, %v1052
    %1054 = vdwg.mxu0
    %v1055 = vadd.f32 %v939, %v993
    %v1056 = vadd.f32 %v940, %v1013
    %v1057 = vadd.f32 %v941, %v1033
    %v1058 = vadd.f32 %v942, %v1053
    %v1060 = vsel %vm166, %v30, 0
    %v1063 = vsel %vm179, %v541, 0
    %v1066 = vsel %vm179, %v561, 0
    %v1069 = vsel %vm179, %v581, 0
    %v1072 = vsel %vm179, %v601, 0
    %1074 = vmatpush.msra.mxu0 0.0
    %1075 = vmatpush.msra.mxu0 0.0
    %1076 = vmatpush.msra.mxu0 0.0
    %1077 = vmatpush.msra.mxu0 0.0
    %1078 = vmatpush.msra.mxu0 0.0
    %1079 = vmatpush.msra.mxu0 0.0
    %1080 = vmatpush.msra.mxu0 0.0
    %1081 = vmatpush.msra.mxu0 0.0
    %1082 = vmatpush.msra.mxu0 0.0
    %1083 = vmatpush.msra.mxu0 0.0
    %1084 = vmatpush.msra.mxu0 0.0
    %1085 = vmatpush.msra.mxu0 0.0
    %1086 = vmatpush.msra.mxu0 0.0
    %1087 = vmatpush.msra.mxu0 0.0
    %1088 = vmatpush.msra.mxu0 0.0
    %1089 = vmatpush.msra.mxu0 %v1063
    %1090 = vmatmul.f32.gmra.mxu0 %v1060
    %v1091 = vpop.f32.mrf.mxu0
    %v1092 = vadd.f32 0.0, %v1091
    %1093 = vdwg.mxu0
    %1094 = vmatpush.msra.mxu0 0.0
    %1095 = vmatpush.msra.mxu0 0.0
    %1096 = vmatpush.msra.mxu0 0.0
    %1097 = vmatpush.msra.mxu0 0.0
    %1098 = vmatpush.msra.mxu0 0.0
    %1099 = vmatpush.msra.mxu0 0.0
    %1100 = vmatpush.msra.mxu0 0.0
    %1101 = vmatpush.msra.mxu0 0.0
    %1102 = vmatpush.msra.mxu0 0.0
    %1103 = vmatpush.msra.mxu0 0.0
    %1104 = vmatpush.msra.mxu0 0.0
    %1105 = vmatpush.msra.mxu0 0.0
    %1106 = vmatpush.msra.mxu0 0.0
    %1107 = vmatpush.msra.mxu0 0.0
    %1108 = vmatpush.msra.mxu0 0.0
    %1109 = vmatpush.msra.mxu0 %v1066
    %1110 = vmatmul.f32.gmra.mxu0 %v1060
    %v1111 = vpop.f32.mrf.mxu0
    %v1112 = vadd.f32 0.0, %v1111
    %1113 = vdwg.mxu0
    %1114 = vmatpush.msra.mxu0 0.0
    %1115 = vmatpush.msra.mxu0 0.0
    %1116 = vmatpush.msra.mxu0 0.0
    %1117 = vmatpush.msra.mxu0 0.0
    %1118 = vmatpush.msra.mxu0 0.0
    %1119 = vmatpush.msra.mxu0 0.0
    %1120 = vmatpush.msra.mxu0 0.0
    %1121 = vmatpush.msra.mxu0 0.0
    %1122 = vmatpush.msra.mxu0 0.0
    %1123 = vmatpush.msra.mxu0 0.0
    %1124 = vmatpush.msra.mxu0 0.0
    %1125 = vmatpush.msra.mxu0 0.0
    %1126 = vmatpush.msra.mxu0 0.0
    %1127 = vmatpush.msra.mxu0 0.0
    %1128 = vmatpush.msra.mxu0 0.0
    %1129 = vmatpush.msra.mxu0 %v1069
    %1130 = vmatmul.f32.gmra.mxu0 %v1060
    %v1131 = vpop.f32.mrf.mxu0
    %v1132 = vadd.f32 0.0, %v1131
    %1133 = vdwg.mxu0
    %1134 = vmatpush.msra.mxu0 0.0
    %1135 = vmatpush.msra.mxu0 0.0
    %1136 = vmatpush.msra.mxu0 0.0
    %1137 = vmatpush.msra.mxu0 0.0
    %1138 = vmatpush.msra.mxu0 0.0
    %1139 = vmatpush.msra.mxu0 0.0
    %1140 = vmatpush.msra.mxu0 0.0
    %1141 = vmatpush.msra.mxu0 0.0
    %1142 = vmatpush.msra.mxu0 0.0
    %1143 = vmatpush.msra.mxu0 0.0
    %1144 = vmatpush.msra.mxu0 0.0
    %1145 = vmatpush.msra.mxu0 0.0
    %1146 = vmatpush.msra.mxu0 0.0
    %1147 = vmatpush.msra.mxu0 0.0
    %1148 = vmatpush.msra.mxu0 0.0
    %1149 = vmatpush.msra.mxu0 %v1072
    %1150 = vmatmul.f32.gmra.mxu0 %v1060
    %v1151 = vpop.f32.mrf.mxu0
    %v1152 = vadd.f32 0.0, %v1151
    %1153 = vdwg.mxu0
    %v1154 = vadd.f32 %v1055, %v1092
    %v1155 = vadd.f32 %v1056, %v1112
    %v1156 = vadd.f32 %v1057, %v1132
    %v1157 = vadd.f32 %v1058, %v1152
    %1158 = vrot.lane.b32.xlu0 %v541, 124
    %v1159 = vpop.permute.xlu0 %1158
    %1160 = vrot.lane.b32.xlu0 %v561, 124
    %v1161 = vpop.permute.xlu0 %1160
    %1162 = vrot.lane.b32.xlu0 %v581, 124
    %v1163 = vpop.permute.xlu0 %1162
    %1164 = vrot.lane.b32.xlu0 %v601, 124
    %v1165 = vpop.permute.xlu0 %1164
    %vm1166 = vcmp.lt.s32.totalorder %v348, 124
    %v1167 = vsel %vm1166, %v1163, %v1165
    %v1168 = vsel %vm1166, %v1161, %v1163
    %v1169 = vsel %vm1166, %v1159, %v1161
    %v1170 = vsel %vm1166, %v1165, %v1159
    %v1171 = vmul.f32 %v1169, %v464
    %v1172 = vmul.f32 %v1168, %v465
    %v1173 = vmul.f32 %v1167, %v466
    %v1174 = vmul.f32 %v1170, %v467
    %v1176 = vsel %vm166, %v31, 0
    %v1179 = vsel %vm179, %v1171, 0
    %v1182 = vsel %vm179, %v1172, 0
    %v1185 = vsel %vm179, %v1173, 0
    %v1188 = vsel %vm179, %v1174, 0
    %1190 = vmatpush.msra.mxu0 0.0
    %1191 = vmatpush.msra.mxu0 0.0
    %1192 = vmatpush.msra.mxu0 0.0
    %1193 = vmatpush.msra.mxu0 0.0
    %1194 = vmatpush.msra.mxu0 0.0
    %1195 = vmatpush.msra.mxu0 0.0
    %1196 = vmatpush.msra.mxu0 0.0
    %1197 = vmatpush.msra.mxu0 0.0
    %1198 = vmatpush.msra.mxu0 0.0
    %1199 = vmatpush.msra.mxu0 0.0
    %1200 = vmatpush.msra.mxu0 0.0
    %1201 = vmatpush.msra.mxu0 0.0
    %1202 = vmatpush.msra.mxu0 0.0
    %1203 = vmatpush.msra.mxu0 0.0
    %1204 = vmatpush.msra.mxu0 0.0
    %1205 = vmatpush.msra.mxu0 %v1179
    %1206 = vmatmul.f32.gmra.mxu0 %v1176
    %v1207 = vpop.f32.mrf.mxu0
    %v1208 = vadd.f32 0.0, %v1207
    %1209 = vdwg.mxu0
    %1210 = vmatpush.msra.mxu0 0.0
    %1211 = vmatpush.msra.mxu0 0.0
    %1212 = vmatpush.msra.mxu0 0.0
    %1213 = vmatpush.msra.mxu0 0.0
    %1214 = vmatpush.msra.mxu0 0.0
    %1215 = vmatpush.msra.mxu0 0.0
    %1216 = vmatpush.msra.mxu0 0.0
    %1217 = vmatpush.msra.mxu0 0.0
    %1218 = vmatpush.msra.mxu0 0.0
    %1219 = vmatpush.msra.mxu0 0.0
    %1220 = vmatpush.msra.mxu0 0.0
    %1221 = vmatpush.msra.mxu0 0.0
    %1222 = vmatpush.msra.mxu0 0.0
    %1223 = vmatpush.msra.mxu0 0.0
    %1224 = vmatpush.msra.mxu0 0.0
    %1225 = vmatpush.msra.mxu0 %v1182
    %1226 = vmatmul.f32.gmra.mxu0 %v1176
    %v1227 = vpop.f32.mrf.mxu0
    %v1228 = vadd.f32 0.0, %v1227
    %1229 = vdwg.mxu0
    %1230 = vmatpush.msra.mxu0 0.0
    %1231 = vmatpush.msra.mxu0 0.0
    %1232 = vmatpush.msra.mxu0 0.0
    %1233 = vmatpush.msra.mxu0 0.0
    %1234 = vmatpush.msra.mxu0 0.0
    %1235 = vmatpush.msra.mxu0 0.0
    %1236 = vmatpush.msra.mxu0 0.0
    %1237 = vmatpush.msra.mxu0 0.0
    %1238 = vmatpush.msra.mxu0 0.0
    %1239 = vmatpush.msra.mxu0 0.0
    %1240 = vmatpush.msra.mxu0 0.0
    %1241 = vmatpush.msra.mxu0 0.0
    %1242 = vmatpush.msra.mxu0 0.0
    %1243 = vmatpush.msra.mxu0 0.0
    %1244 = vmatpush.msra.mxu0 0.0
    %1245 = vmatpush.msra.mxu0 %v1185
    %1246 = vmatmul.f32.gmra.mxu0 %v1176
    %v1247 = vpop.f32.mrf.mxu0
    %v1248 = vadd.f32 0.0, %v1247
    %1249 = vdwg.mxu0
    %1250 = vmatpush.msra.mxu0 0.0
    %1251 = vmatpush.msra.mxu0 0.0
    %1252 = vmatpush.msra.mxu0 0.0
    %1253 = vmatpush.msra.mxu0 0.0
    %1254 = vmatpush.msra.mxu0 0.0
    %1255 = vmatpush.msra.mxu0 0.0
    %1256 = vmatpush.msra.mxu0 0.0
    %1257 = vmatpush.msra.mxu0 0.0
    %1258 = vmatpush.msra.mxu0 0.0
    %1259 = vmatpush.msra.mxu0 0.0
    %1260 = vmatpush.msra.mxu0 0.0
    %1261 = vmatpush.msra.mxu0 0.0
    %1262 = vmatpush.msra.mxu0 0.0
    %1263 = vmatpush.msra.mxu0 0.0
    %1264 = vmatpush.msra.mxu0 0.0
    %1265 = vmatpush.msra.mxu0 %v1188
    %1266 = vmatmul.f32.gmra.mxu0 %v1176
    %v1267 = vpop.f32.mrf.mxu0
    %v1268 = vadd.f32 0.0, %v1267
    %1269 = vdwg.mxu0
    %v1270 = vadd.f32 %v1154, %v1208
    %v1271 = vadd.f32 %v1155, %v1228
    %v1272 = vadd.f32 %v1156, %v1248
    %v1273 = vadd.f32 %v1157, %v1268
    %v1274 = vmul.f32 %v614, %v488
    %v1275 = vmul.f32 %v613, %v489
    %v1276 = vmul.f32 %v612, %v490
    %v1277 = vmul.f32 %v615, %v491
    %v1279 = vsel %vm166, %v32, 0
    %v1282 = vsel %vm179, %v1274, 0
    %v1285 = vsel %vm179, %v1275, 0
    %v1288 = vsel %vm179, %v1276, 0
    %v1291 = vsel %vm179, %v1277, 0
    %1293 = vmatpush.msra.mxu0 0.0
    %1294 = vmatpush.msra.mxu0 0.0
    %1295 = vmatpush.msra.mxu0 0.0
    %1296 = vmatpush.msra.mxu0 0.0
    %1297 = vmatpush.msra.mxu0 0.0
    %1298 = vmatpush.msra.mxu0 0.0
    %1299 = vmatpush.msra.mxu0 0.0
    %1300 = vmatpush.msra.mxu0 0.0
    %1301 = vmatpush.msra.mxu0 0.0
    %1302 = vmatpush.msra.mxu0 0.0
    %1303 = vmatpush.msra.mxu0 0.0
    %1304 = vmatpush.msra.mxu0 0.0
    %1305 = vmatpush.msra.mxu0 0.0
    %1306 = vmatpush.msra.mxu0 0.0
    %1307 = vmatpush.msra.mxu0 0.0
    %1308 = vmatpush.msra.mxu0 %v1282
    %1309 = vmatmul.f32.gmra.mxu0 %v1279
    %v1310 = vpop.f32.mrf.mxu0
    %v1311 = vadd.f32 0.0, %v1310
    %1312 = vdwg.mxu0
    %1313 = vmatpush.msra.mxu0 0.0
    %1314 = vmatpush.msra.mxu0 0.0
    %1315 = vmatpush.msra.mxu0 0.0
    %1316 = vmatpush.msra.mxu0 0.0
    %1317 = vmatpush.msra.mxu0 0.0
    %1318 = vmatpush.msra.mxu0 0.0
    %1319 = vmatpush.msra.mxu0 0.0
    %1320 = vmatpush.msra.mxu0 0.0
    %1321 = vmatpush.msra.mxu0 0.0
    %1322 = vmatpush.msra.mxu0 0.0
    %1323 = vmatpush.msra.mxu0 0.0
    %1324 = vmatpush.msra.mxu0 0.0
    %1325 = vmatpush.msra.mxu0 0.0
    %1326 = vmatpush.msra.mxu0 0.0
    %1327 = vmatpush.msra.mxu0 0.0
    %1328 = vmatpush.msra.mxu0 %v1285
    %1329 = vmatmul.f32.gmra.mxu0 %v1279
    %v1330 = vpop.f32.mrf.mxu0
    %v1331 = vadd.f32 0.0, %v1330
    %1332 = vdwg.mxu0
    %1333 = vmatpush.msra.mxu0 0.0
    %1334 = vmatpush.msra.mxu0 0.0
    %1335 = vmatpush.msra.mxu0 0.0
    %1336 = vmatpush.msra.mxu0 0.0
    %1337 = vmatpush.msra.mxu0 0.0
    %1338 = vmatpush.msra.mxu0 0.0
    %1339 = vmatpush.msra.mxu0 0.0
    %1340 = vmatpush.msra.mxu0 0.0
    %1341 = vmatpush.msra.mxu0 0.0
    %1342 = vmatpush.msra.mxu0 0.0
    %1343 = vmatpush.msra.mxu0 0.0
    %1344 = vmatpush.msra.mxu0 0.0
    %1345 = vmatpush.msra.mxu0 0.0
    %1346 = vmatpush.msra.mxu0 0.0
    %1347 = vmatpush.msra.mxu0 0.0
    %1348 = vmatpush.msra.mxu0 %v1288
    %1349 = vmatmul.f32.gmra.mxu0 %v1279
    %v1350 = vpop.f32.mrf.mxu0
    %v1351 = vadd.f32 0.0, %v1350
    %1352 = vdwg.mxu0
    %1353 = vmatpush.msra.mxu0 0.0
    %1354 = vmatpush.msra.mxu0 0.0
    %1355 = vmatpush.msra.mxu0 0.0
    %1356 = vmatpush.msra.mxu0 0.0
    %1357 = vmatpush.msra.mxu0 0.0
    %1358 = vmatpush.msra.mxu0 0.0
    %1359 = vmatpush.msra.mxu0 0.0
    %1360 = vmatpush.msra.mxu0 0.0
    %1361 = vmatpush.msra.mxu0 0.0
    %1362 = vmatpush.msra.mxu0 0.0
    %1363 = vmatpush.msra.mxu0 0.0
    %1364 = vmatpush.msra.mxu0 0.0
    %1365 = vmatpush.msra.mxu0 0.0
    %1366 = vmatpush.msra.mxu0 0.0
    %1367 = vmatpush.msra.mxu0 0.0
    %1368 = vmatpush.msra.mxu0 %v1291
    %1369 = vmatmul.f32.gmra.mxu0 %v1279
    %v1370 = vpop.f32.mrf.mxu0
    %v1371 = vadd.f32 0.0, %v1370
    %1372 = vdwg.mxu0
    %v1373 = vadd.f32 %v1270, %v1311
    %v1374 = vadd.f32 %v1271, %v1331
    %v1375 = vadd.f32 %v1272, %v1351
    %v1376 = vadd.f32 %v1273, %v1371
    %v1377 = vmul.f32 %v631, %v500
    %v1378 = vmul.f32 %v630, %v501
    %v1379 = vmul.f32 %v629, %v502
    %v1380 = vmul.f32 %v632, %v503
    %v1382 = vsel %vm166, %v33, 0
    %v1385 = vsel %vm179, %v1377, 0
    %v1388 = vsel %vm179, %v1378, 0
    %v1391 = vsel %vm179, %v1379, 0
    %v1394 = vsel %vm179, %v1380, 0
    %1396 = vmatpush.msra.mxu0 0.0
    %1397 = vmatpush.msra.mxu0 0.0
    %1398 = vmatpush.msra.mxu0 0.0
    %1399 = vmatpush.msra.mxu0 0.0
    %1400 = vmatpush.msra.mxu0 0.0
    %1401 = vmatpush.msra.mxu0 0.0
    %1402 = vmatpush.msra.mxu0 0.0
    %1403 = vmatpush.msra.mxu0 0.0
    %1404 = vmatpush.msra.mxu0 0.0
    %1405 = vmatpush.msra.mxu0 0.0
    %1406 = vmatpush.msra.mxu0 0.0
    %1407 = vmatpush.msra.mxu0 0.0
    %1408 = vmatpush.msra.mxu0 0.0
    %1409 = vmatpush.msra.mxu0 0.0
    %1410 = vmatpush.msra.mxu0 0.0
    %1411 = vmatpush.msra.mxu0 %v1385
    %1412 = vmatmul.f32.gmra.mxu0 %v1382
    %v1413 = vpop.f32.mrf.mxu0
    %v1414 = vadd.f32 0.0, %v1413
    %1415 = vdwg.mxu0
    %1416 = vmatpush.msra.mxu0 0.0
    %1417 = vmatpush.msra.mxu0 0.0
    %1418 = vmatpush.msra.mxu0 0.0
    %1419 = vmatpush.msra.mxu0 0.0
    %1420 = vmatpush.msra.mxu0 0.0
    %1421 = vmatpush.msra.mxu0 0.0
    %1422 = vmatpush.msra.mxu0 0.0
    %1423 = vmatpush.msra.mxu0 0.0
    %1424 = vmatpush.msra.mxu0 0.0
    %1425 = vmatpush.msra.mxu0 0.0
    %1426 = vmatpush.msra.mxu0 0.0
    %1427 = vmatpush.msra.mxu0 0.0
    %1428 = vmatpush.msra.mxu0 0.0
    %1429 = vmatpush.msra.mxu0 0.0
    %1430 = vmatpush.msra.mxu0 0.0
    %1431 = vmatpush.msra.mxu0 %v1388
    %1432 = vmatmul.f32.gmra.mxu0 %v1382
    %v1433 = vpop.f32.mrf.mxu0
    %v1434 = vadd.f32 0.0, %v1433
    %1435 = vdwg.mxu0
    %1436 = vmatpush.msra.mxu0 0.0
    %1437 = vmatpush.msra.mxu0 0.0
    %1438 = vmatpush.msra.mxu0 0.0
    %1439 = vmatpush.msra.mxu0 0.0
    %1440 = vmatpush.msra.mxu0 0.0
    %1441 = vmatpush.msra.mxu0 0.0
    %1442 = vmatpush.msra.mxu0 0.0
    %1443 = vmatpush.msra.mxu0 0.0
    %1444 = vmatpush.msra.mxu0 0.0
    %1445 = vmatpush.msra.mxu0 0.0
    %1446 = vmatpush.msra.mxu0 0.0
    %1447 = vmatpush.msra.mxu0 0.0
    %1448 = vmatpush.msra.mxu0 0.0
    %1449 = vmatpush.msra.mxu0 0.0
    %1450 = vmatpush.msra.mxu0 0.0
    %1451 = vmatpush.msra.mxu0 %v1391
    %1452 = vmatmul.f32.gmra.mxu0 %v1382
    %v1453 = vpop.f32.mrf.mxu0
    %v1454 = vadd.f32 0.0, %v1453
    %1455 = vdwg.mxu0
    %1456 = vmatpush.msra.mxu0 0.0
    %1457 = vmatpush.msra.mxu0 0.0
    %1458 = vmatpush.msra.mxu0 0.0
    %1459 = vmatpush.msra.mxu0 0.0
    %1460 = vmatpush.msra.mxu0 0.0
    %1461 = vmatpush.msra.mxu0 0.0
    %1462 = vmatpush.msra.mxu0 0.0
    %1463 = vmatpush.msra.mxu0 0.0
    %1464 = vmatpush.msra.mxu0 0.0
    %1465 = vmatpush.msra.mxu0 0.0
    %1466 = vmatpush.msra.mxu0 0.0
    %1467 = vmatpush.msra.mxu0 0.0
    %1468 = vmatpush.msra.mxu0 0.0
    %1469 = vmatpush.msra.mxu0 0.0
    %1470 = vmatpush.msra.mxu0 0.0
    %1471 = vmatpush.msra.mxu0 %v1394
    %1472 = vmatmul.f32.gmra.mxu0 %v1382
    %v1473 = vpop.f32.mrf.mxu0
    %v1474 = vadd.f32 0.0, %v1473
    %1475 = vdwg.mxu0
    %v1476 = vadd.f32 %v1373, %v1414
    %v1477 = vadd.f32 %v1374, %v1434
    %v1478 = vadd.f32 %v1375, %v1454
    %v1479 = vadd.f32 %v1376, %v1474
    %v1480 = vmul.f32 %v838, %v512
    %v1481 = vmul.f32 %v837, %v513
    %v1482 = vmul.f32 %v836, %v514
    %v1483 = vmul.f32 %v839, %v515
    %v1485 = vsel %vm166, %v34, 0
    %v1488 = vsel %vm179, %v1480, 0
    %v1491 = vsel %vm179, %v1481, 0
    %v1494 = vsel %vm179, %v1482, 0
    %v1497 = vsel %vm179, %v1483, 0
    %1499 = vmatpush.msra.mxu0 0.0
    %1500 = vmatpush.msra.mxu0 0.0
    %1501 = vmatpush.msra.mxu0 0.0
    %1502 = vmatpush.msra.mxu0 0.0
    %1503 = vmatpush.msra.mxu0 0.0
    %1504 = vmatpush.msra.mxu0 0.0
    %1505 = vmatpush.msra.mxu0 0.0
    %1506 = vmatpush.msra.mxu0 0.0
    %1507 = vmatpush.msra.mxu0 0.0
    %1508 = vmatpush.msra.mxu0 0.0
    %1509 = vmatpush.msra.mxu0 0.0
    %1510 = vmatpush.msra.mxu0 0.0
    %1511 = vmatpush.msra.mxu0 0.0
    %1512 = vmatpush.msra.mxu0 0.0
    %1513 = vmatpush.msra.mxu0 0.0
    %1514 = vmatpush.msra.mxu0 %v1488
    %1515 = vmatmul.f32.gmra.mxu0 %v1485
    %v1516 = vpop.f32.mrf.mxu0
    %v1517 = vadd.f32 0.0, %v1516
    %1518 = vdwg.mxu0
    %1519 = vmatpush.msra.mxu0 0.0
    %1520 = vmatpush.msra.mxu0 0.0
    %1521 = vmatpush.msra.mxu0 0.0
    %1522 = vmatpush.msra.mxu0 0.0
    %1523 = vmatpush.msra.mxu0 0.0
    %1524 = vmatpush.msra.mxu0 0.0
    %1525 = vmatpush.msra.mxu0 0.0
    %1526 = vmatpush.msra.mxu0 0.0
    %1527 = vmatpush.msra.mxu0 0.0
    %1528 = vmatpush.msra.mxu0 0.0
    %1529 = vmatpush.msra.mxu0 0.0
    %1530 = vmatpush.msra.mxu0 0.0
    %1531 = vmatpush.msra.mxu0 0.0
    %1532 = vmatpush.msra.mxu0 0.0
    %1533 = vmatpush.msra.mxu0 0.0
    %1534 = vmatpush.msra.mxu0 %v1491
    %1535 = vmatmul.f32.gmra.mxu0 %v1485
    %v1536 = vpop.f32.mrf.mxu0
    %v1537 = vadd.f32 0.0, %v1536
    %1538 = vdwg.mxu0
    %1539 = vmatpush.msra.mxu0 0.0
    %1540 = vmatpush.msra.mxu0 0.0
    %1541 = vmatpush.msra.mxu0 0.0
    %1542 = vmatpush.msra.mxu0 0.0
    %1543 = vmatpush.msra.mxu0 0.0
    %1544 = vmatpush.msra.mxu0 0.0
    %1545 = vmatpush.msra.mxu0 0.0
    %1546 = vmatpush.msra.mxu0 0.0
    %1547 = vmatpush.msra.mxu0 0.0
    %1548 = vmatpush.msra.mxu0 0.0
    %1549 = vmatpush.msra.mxu0 0.0
    %1550 = vmatpush.msra.mxu0 0.0
    %1551 = vmatpush.msra.mxu0 0.0
    %1552 = vmatpush.msra.mxu0 0.0
    %1553 = vmatpush.msra.mxu0 0.0
    %1554 = vmatpush.msra.mxu0 %v1494
    %1555 = vmatmul.f32.gmra.mxu0 %v1485
    %v1556 = vpop.f32.mrf.mxu0
    %v1557 = vadd.f32 0.0, %v1556
    %1558 = vdwg.mxu0
    %1559 = vmatpush.msra.mxu0 0.0
    %1560 = vmatpush.msra.mxu0 0.0
    %1561 = vmatpush.msra.mxu0 0.0
    %1562 = vmatpush.msra.mxu0 0.0
    %1563 = vmatpush.msra.mxu0 0.0
    %1564 = vmatpush.msra.mxu0 0.0
    %1565 = vmatpush.msra.mxu0 0.0
    %1566 = vmatpush.msra.mxu0 0.0
    %1567 = vmatpush.msra.mxu0 0.0
    %1568 = vmatpush.msra.mxu0 0.0
    %1569 = vmatpush.msra.mxu0 0.0
    %1570 = vmatpush.msra.mxu0 0.0
    %1571 = vmatpush.msra.mxu0 0.0
    %1572 = vmatpush.msra.mxu0 0.0
    %1573 = vmatpush.msra.mxu0 0.0
    %1574 = vmatpush.msra.mxu0 %v1497
    %1575 = vmatmul.f32.gmra.mxu0 %v1485
    %v1576 = vpop.f32.mrf.mxu0
    %v1577 = vadd.f32 0.0, %v1576
    %1578 = vdwg.mxu0
    %v1579 = vadd.f32 %v1476, %v1517
    %v1580 = vadd.f32 %v1477, %v1537
    %v1581 = vadd.f32 %v1478, %v1557
    %v1582 = vadd.f32 %v1479, %v1577
    %1583 = vset.pattern.permute.xlu0 5
    %1584 = vperm.xlu0 %1583, %v44
    %v1585 = vpop.permute.xlu0 %1584
    %v1587 = vadd.f32 %v1579, %v1585
    %v1588 = vadd.f32 %v1580, %v1585
    %v1589 = vadd.f32 %v1581, %v1585
    %v1590 = vadd.f32 %v1582, %v1585
    %v1591 = vsel %vm179, %v1587, 0.0
    %v1592 = vsel %vm179, %v1588, 0.0
    %v1593 = vadd.f32 %v1591, %v1592
    %v1594 = vsel %vm179, %v1589, 0.0
    %v1595 = vadd.f32 %v1593, %v1594
    %v1596 = vsel %vm179, %v1590, 0.0
    %v1597 = vadd.f32 %v1595, %v1596
    %1598 = vadd.xlane.f32.xlu0 %v1597
    %v1599 = vpop.xlane.xlu0 %1598
    %v1600 = vrcp.pop 512.0
    %v1601 = vmul.f32 512.0, %v1600
    %v1602 = vsub.f32 1.0, %v1601
    %v1603 = vmul.f32 %v1600, %v1602
    %v1604 = vadd.f32 %v1600, %v1603
    %vm1605 = vweird.f32 %v1600
    %v1606 = vsel %vm1605, %v1600, %v1604
    %v1607 = vmul.f32 %v1599, %v1606
    %v1608 = vsub.f32 %v1587, %v1607
    %v1609 = vsub.f32 %v1588, %v1607
    %v1610 = vsub.f32 %v1589, %v1607
    %v1611 = vsub.f32 %v1590, %v1607
    %v1612 = vmul.f32 %v1608, %v1608
    %v1613 = vmul.f32 %v1609, %v1609
    %v1614 = vmul.f32 %v1610, %v1610
    %v1615 = vmul.f32 %v1611, %v1611
    %v1616 = vsel %vm179, %v1612, 0.0
    %v1617 = vsel %vm179, %v1613, 0.0
    %v1618 = vadd.f32 %v1616, %v1617
    %v1619 = vsel %vm179, %v1614, 0.0
    %v1620 = vadd.f32 %v1618, %v1619
    %v1621 = vsel %vm179, %v1615, 0.0
    %v1622 = vadd.f32 %v1620, %v1621
    %1623 = vadd.xlane.f32.xlu0 %v1622
    %v1624 = vpop.xlane.xlu0 %1623
    %v1625 = vmul.f32 %v1624, %v1606
    %v1626 = vadd.f32 %v1625, 1e-05
    %v1627 = vrsqrt.pop %v1626
    %v1628 = vmul.f32 %v1627, %v1626
    %v1629 = vmul.f32 %v1628, %v1627
    %v1630 = vmul.f32 0.5, %v1629
    %v1631 = vsub.f32 1.5, %v1630
    %v1632 = vmul.f32 %v1627, %v1631
    %vm1633 = vweird.f32 %v1626
    %vm1634 = vweird.f32 %v1627
    %vm1635 = vmor %vm1633, %vm1634
    %v1636 = vsel %vm1635, %v1627, %v1632
    %v1637 = vmul.f32 %v1608, %v1636
    %v1638 = vmul.f32 %v1609, %v1636
    %v1639 = vmul.f32 %v1610, %v1636
    %v1640 = vmul.f32 %v1611, %v1636
    %1641 = vset.pattern.permute.xlu0 6
    %1642 = vperm.xlu0 %1641, %v44
    %v1643 = vpop.permute.xlu0 %1642
    %v1645 = vmul.f32 %v1637, %v1643
    %v1646 = vmul.f32 %v1638, %v1643
    %v1647 = vmul.f32 %v1639, %v1643
    %v1648 = vmul.f32 %v1640, %v1643
    %1649 = vset.pattern.permute.xlu0 7
    %1650 = vperm.xlu0 %1649, %v44
    %v1651 = vpop.permute.xlu0 %1650
    %v1653 = vadd.f32 %v1645, %v1651
    %v1654 = vadd.f32 %v1646, %v1651
    %v1655 = vadd.f32 %v1647, %v1651
    %v1656 = vadd.f32 %v1648, %v1651
    %v1657 = vmax.f32 %v1653, 0.0
    %v1658 = vmax.f32 %v1654, 0.0
    %v1659 = vmax.f32 %v1655, 0.0
    %v1660 = vmax.f32 %v1656, 0.0
    %1661 = vrot.lane.b32.xlu0 %v1657, 68
    %v1662 = vpop.permute.xlu0 %1661
    %1663 = vrot.lane.b32.xlu0 %v1658, 68
    %v1664 = vpop.permute.xlu0 %1663
    %1665 = vrot.lane.b32.xlu0 %v1659, 68
    %v1666 = vpop.permute.xlu0 %1665
    %1667 = vrot.lane.b32.xlu0 %v1660, 68
    %v1668 = vpop.permute.xlu0 %1667
    %v1669 = vsel %vm611, %v1666, %v1668
    %v1670 = vsel %vm611, %v1664, %v1666
    %v1671 = vsel %vm611, %v1662, %v1664
    %v1672 = vsel %vm611, %v1668, %v1662
    %v1673 = vmul.f32 %v1672, %v388
    %v1674 = vmul.f32 %v1671, %v389
    %v1675 = vmul.f32 %v1670, %v390
    %v1676 = vmul.f32 %v1669, %v391
    %1677 = vrot.lane.b32.xlu0 %v1657, 64
    %v1678 = vpop.permute.xlu0 %1677
    %1679 = vrot.lane.b32.xlu0 %v1658, 64
    %v1680 = vpop.permute.xlu0 %1679
    %1681 = vrot.lane.b32.xlu0 %v1659, 64
    %v1682 = vpop.permute.xlu0 %1681
    %1683 = vrot.lane.b32.xlu0 %v1660, 64
    %v1684 = vpop.permute.xlu0 %1683
    %v1685 = vsel %vm628, %v1682, %v1684
    %v1686 = vsel %vm628, %v1680, %v1682
    %v1687 = vsel %vm628, %v1678, %v1680
    %v1688 = vsel %vm628, %v1684, %v1678
    %v1689 = vmul.f32 %v1688, %v408
    %v1690 = vmul.f32 %v1687, %v409
    %v1691 = vmul.f32 %v1686, %v410
    %v1692 = vmul.f32 %v1685, %v411
    %v1694 = vsel %vm166, %v36, 0
    %v1697 = vsel %vm179, %v1689, 0
    %v1700 = vsel %vm179, %v1690, 0
    %v1703 = vsel %vm179, %v1691, 0
    %v1706 = vsel %vm179, %v1692, 0
    %1708 = vmatpush.msra.mxu0 0.0
    %1709 = vmatpush.msra.mxu0 0.0
    %1710 = vmatpush.msra.mxu0 0.0
    %1711 = vmatpush.msra.mxu0 0.0
    %1712 = vmatpush.msra.mxu0 0.0
    %1713 = vmatpush.msra.mxu0 0.0
    %1714 = vmatpush.msra.mxu0 0.0
    %1715 = vmatpush.msra.mxu0 0.0
    %1716 = vmatpush.msra.mxu0 0.0
    %1717 = vmatpush.msra.mxu0 0.0
    %1718 = vmatpush.msra.mxu0 0.0
    %1719 = vmatpush.msra.mxu0 0.0
    %1720 = vmatpush.msra.mxu0 0.0
    %1721 = vmatpush.msra.mxu0 0.0
    %1722 = vmatpush.msra.mxu0 0.0
    %1723 = vmatpush.msra.mxu0 %v1697
    %1724 = vmatmul.f32.gmra.mxu0 %v1694
    %v1725 = vpop.f32.mrf.mxu0
    %v1726 = vadd.f32 0.0, %v1725
    %1727 = vdwg.mxu0
    %1728 = vmatpush.msra.mxu0 0.0
    %1729 = vmatpush.msra.mxu0 0.0
    %1730 = vmatpush.msra.mxu0 0.0
    %1731 = vmatpush.msra.mxu0 0.0
    %1732 = vmatpush.msra.mxu0 0.0
    %1733 = vmatpush.msra.mxu0 0.0
    %1734 = vmatpush.msra.mxu0 0.0
    %1735 = vmatpush.msra.mxu0 0.0
    %1736 = vmatpush.msra.mxu0 0.0
    %1737 = vmatpush.msra.mxu0 0.0
    %1738 = vmatpush.msra.mxu0 0.0
    %1739 = vmatpush.msra.mxu0 0.0
    %1740 = vmatpush.msra.mxu0 0.0
    %1741 = vmatpush.msra.mxu0 0.0
    %1742 = vmatpush.msra.mxu0 0.0
    %1743 = vmatpush.msra.mxu0 %v1700
    %1744 = vmatmul.f32.gmra.mxu0 %v1694
    %v1745 = vpop.f32.mrf.mxu0
    %v1746 = vadd.f32 0.0, %v1745
    %1747 = vdwg.mxu0
    %1748 = vmatpush.msra.mxu0 0.0
    %1749 = vmatpush.msra.mxu0 0.0
    %1750 = vmatpush.msra.mxu0 0.0
    %1751 = vmatpush.msra.mxu0 0.0
    %1752 = vmatpush.msra.mxu0 0.0
    %1753 = vmatpush.msra.mxu0 0.0
    %1754 = vmatpush.msra.mxu0 0.0
    %1755 = vmatpush.msra.mxu0 0.0
    %1756 = vmatpush.msra.mxu0 0.0
    %1757 = vmatpush.msra.mxu0 0.0
    %1758 = vmatpush.msra.mxu0 0.0
    %1759 = vmatpush.msra.mxu0 0.0
    %1760 = vmatpush.msra.mxu0 0.0
    %1761 = vmatpush.msra.mxu0 0.0
    %1762 = vmatpush.msra.mxu0 0.0
    %1763 = vmatpush.msra.mxu0 %v1703
    %1764 = vmatmul.f32.gmra.mxu0 %v1694
    %v1765 = vpop.f32.mrf.mxu0
    %v1766 = vadd.f32 0.0, %v1765
    %1767 = vdwg.mxu0
    %1768 = vmatpush.msra.mxu0 0.0
    %1769 = vmatpush.msra.mxu0 0.0
    %1770 = vmatpush.msra.mxu0 0.0
    %1771 = vmatpush.msra.mxu0 0.0
    %1772 = vmatpush.msra.mxu0 0.0
    %1773 = vmatpush.msra.mxu0 0.0
    %1774 = vmatpush.msra.mxu0 0.0
    %1775 = vmatpush.msra.mxu0 0.0
    %1776 = vmatpush.msra.mxu0 0.0
    %1777 = vmatpush.msra.mxu0 0.0
    %1778 = vmatpush.msra.mxu0 0.0
    %1779 = vmatpush.msra.mxu0 0.0
    %1780 = vmatpush.msra.mxu0 0.0
    %1781 = vmatpush.msra.mxu0 0.0
    %1782 = vmatpush.msra.mxu0 0.0
    %1783 = vmatpush.msra.mxu0 %v1706
    %1784 = vmatmul.f32.gmra.mxu0 %v1694
    %v1785 = vpop.f32.mrf.mxu0
    %v1786 = vadd.f32 0.0, %v1785
    %1787 = vdwg.mxu0
    %v1789 = vsel %vm166, %v35, 0
    %v1792 = vsel %vm179, %v1673, 0
    %v1795 = vsel %vm179, %v1674, 0
    %v1798 = vsel %vm179, %v1675, 0
    %v1801 = vsel %vm179, %v1676, 0
    %1803 = vmatpush.msra.mxu0 0.0
    %1804 = vmatpush.msra.mxu0 0.0
    %1805 = vmatpush.msra.mxu0 0.0
    %1806 = vmatpush.msra.mxu0 0.0
    %1807 = vmatpush.msra.mxu0 0.0
    %1808 = vmatpush.msra.mxu0 0.0
    %1809 = vmatpush.msra.mxu0 0.0
    %1810 = vmatpush.msra.mxu0 0.0
    %1811 = vmatpush.msra.mxu0 0.0
    %1812 = vmatpush.msra.mxu0 0.0
    %1813 = vmatpush.msra.mxu0 0.0
    %1814 = vmatpush.msra.mxu0 0.0
    %1815 = vmatpush.msra.mxu0 0.0
    %1816 = vmatpush.msra.mxu0 0.0
    %1817 = vmatpush.msra.mxu0 0.0
    %1818 = vmatpush.msra.mxu0 %v1792
    %1819 = vmatmul.f32.gmra.mxu0 %v1789
    %v1820 = vpop.f32.mrf.mxu0
    %v1821 = vadd.f32 %v1726, %v1820
    %1822 = vdwg.mxu0
    %1823 = vmatpush.msra.mxu0 0.0
    %1824 = vmatpush.msra.mxu0 0.0
    %1825 = vmatpush.msra.mxu0 0.0
    %1826 = vmatpush.msra.mxu0 0.0
    %1827 = vmatpush.msra.mxu0 0.0
    %1828 = vmatpush.msra.mxu0 0.0
    %1829 = vmatpush.msra.mxu0 0.0
    %1830 = vmatpush.msra.mxu0 0.0
    %1831 = vmatpush.msra.mxu0 0.0
    %1832 = vmatpush.msra.mxu0 0.0
    %1833 = vmatpush.msra.mxu0 0.0
    %1834 = vmatpush.msra.mxu0 0.0
    %1835 = vmatpush.msra.mxu0 0.0
    %1836 = vmatpush.msra.mxu0 0.0
    %1837 = vmatpush.msra.mxu0 0.0
    %1838 = vmatpush.msra.mxu0 %v1795
    %1839 = vmatmul.f32.gmra.mxu0 %v1789
    %v1840 = vpop.f32.mrf.mxu0
    %v1841 = vadd.f32 %v1746, %v1840
    %1842 = vdwg.mxu0
    %1843 = vmatpush.msra.mxu0 0.0
    %1844 = vmatpush.msra.mxu0 0.0
    %1845 = vmatpush.msra.mxu0 0.0
    %1846 = vmatpush.msra.mxu0 0.0
    %1847 = vmatpush.msra.mxu0 0.0
    %1848 = vmatpush.msra.mxu0 0.0
    %1849 = vmatpush.msra.mxu0 0.0
    %1850 = vmatpush.msra.mxu0 0.0
    %1851 = vmatpush.msra.mxu0 0.0
    %1852 = vmatpush.msra.mxu0 0.0
    %1853 = vmatpush.msra.mxu0 0.0
    %1854 = vmatpush.msra.mxu0 0.0
    %1855 = vmatpush.msra.mxu0 0.0
    %1856 = vmatpush.msra.mxu0 0.0
    %1857 = vmatpush.msra.mxu0 0.0
    %1858 = vmatpush.msra.mxu0 %v1798
    %1859 = vmatmul.f32.gmra.mxu0 %v1789
    %v1860 = vpop.f32.mrf.mxu0
    %v1861 = vadd.f32 %v1766, %v1860
    %1862 = vdwg.mxu0
    %1863 = vmatpush.msra.mxu0 0.0
    %1864 = vmatpush.msra.mxu0 0.0
    %1865 = vmatpush.msra.mxu0 0.0
    %1866 = vmatpush.msra.mxu0 0.0
    %1867 = vmatpush.msra.mxu0 0.0
    %1868 = vmatpush.msra.mxu0 0.0
    %1869 = vmatpush.msra.mxu0 0.0
    %1870 = vmatpush.msra.mxu0 0.0
    %1871 = vmatpush.msra.mxu0 0.0
    %1872 = vmatpush.msra.mxu0 0.0
    %1873 = vmatpush.msra.mxu0 0.0
    %1874 = vmatpush.msra.mxu0 0.0
    %1875 = vmatpush.msra.mxu0 0.0
    %1876 = vmatpush.msra.mxu0 0.0
    %1877 = vmatpush.msra.mxu0 0.0
    %1878 = vmatpush.msra.mxu0 %v1801
    %1879 = vmatmul.f32.gmra.mxu0 %v1789
    %v1880 = vpop.f32.mrf.mxu0
    %v1881 = vadd.f32 %v1786, %v1880
    %1882 = vdwg.mxu0
    %1883 = vrot.lane.b32.xlu0 %v1657, 60
    %v1884 = vpop.permute.xlu0 %1883
    %1885 = vrot.lane.b32.xlu0 %v1658, 60
    %v1886 = vpop.permute.xlu0 %1885
    %1887 = vrot.lane.b32.xlu0 %v1659, 60
    %v1888 = vpop.permute.xlu0 %1887
    %1889 = vrot.lane.b32.xlu0 %v1660, 60
    %v1890 = vpop.permute.xlu0 %1889
    %v1891 = vsel %vm835, %v1888, %v1890
    %v1892 = vsel %vm835, %v1886, %v1888
    %v1893 = vsel %vm835, %v1884, %v1886
    %v1894 = vsel %vm835, %v1890, %v1884
    %v1895 = vmul.f32 %v1894, %v428
    %v1896 = vmul.f32 %v1893, %v429
    %v1897 = vmul.f32 %v1892, %v430
    %v1898 = vmul.f32 %v1891, %v431
    %v1900 = vsel %vm166, %v37, 0
    %v1903 = vsel %vm179, %v1895, 0
    %v1906 = vsel %vm179, %v1896, 0
    %v1909 = vsel %vm179, %v1897, 0
    %v1912 = vsel %vm179, %v1898, 0
    %1914 = vmatpush.msra.mxu0 0.0
    %1915 = vmatpush.msra.mxu0 0.0
    %1916 = vmatpush.msra.mxu0 0.0
    %1917 = vmatpush.msra.mxu0 0.0
    %1918 = vmatpush.msra.mxu0 0.0
    %1919 = vmatpush.msra.mxu0 0.0
    %1920 = vmatpush.msra.mxu0 0.0
    %1921 = vmatpush.msra.mxu0 0.0
    %1922 = vmatpush.msra.mxu0 0.0
    %1923 = vmatpush.msra.mxu0 0.0
    %1924 = vmatpush.msra.mxu0 0.0
    %1925 = vmatpush.msra.mxu0 0.0
    %1926 = vmatpush.msra.mxu0 0.0
    %1927 = vmatpush.msra.mxu0 0.0
    %1928 = vmatpush.msra.mxu0 0.0
    %1929 = vmatpush.msra.mxu0 %v1903
    %1930 = vmatmul.f32.gmra.mxu0 %v1900
    %v1931 = vpop.f32.mrf.mxu0
    %v1932 = vadd.f32 0.0, %v1931
    %1933 = vdwg.mxu0
    %1934 = vmatpush.msra.mxu0 0.0
    %1935 = vmatpush.msra.mxu0 0.0
    %1936 = vmatpush.msra.mxu0 0.0
    %1937 = vmatpush.msra.mxu0 0.0
    %1938 = vmatpush.msra.mxu0 0.0
    %1939 = vmatpush.msra.mxu0 0.0
    %1940 = vmatpush.msra.mxu0 0.0
    %1941 = vmatpush.msra.mxu0 0.0
    %1942 = vmatpush.msra.mxu0 0.0
    %1943 = vmatpush.msra.mxu0 0.0
    %1944 = vmatpush.msra.mxu0 0.0
    %1945 = vmatpush.msra.mxu0 0.0
    %1946 = vmatpush.msra.mxu0 0.0
    %1947 = vmatpush.msra.mxu0 0.0
    %1948 = vmatpush.msra.mxu0 0.0
    %1949 = vmatpush.msra.mxu0 %v1906
    %1950 = vmatmul.f32.gmra.mxu0 %v1900
    %v1951 = vpop.f32.mrf.mxu0
    %v1952 = vadd.f32 0.0, %v1951
    %1953 = vdwg.mxu0
    %1954 = vmatpush.msra.mxu0 0.0
    %1955 = vmatpush.msra.mxu0 0.0
    %1956 = vmatpush.msra.mxu0 0.0
    %1957 = vmatpush.msra.mxu0 0.0
    %1958 = vmatpush.msra.mxu0 0.0
    %1959 = vmatpush.msra.mxu0 0.0
    %1960 = vmatpush.msra.mxu0 0.0
    %1961 = vmatpush.msra.mxu0 0.0
    %1962 = vmatpush.msra.mxu0 0.0
    %1963 = vmatpush.msra.mxu0 0.0
    %1964 = vmatpush.msra.mxu0 0.0
    %1965 = vmatpush.msra.mxu0 0.0
    %1966 = vmatpush.msra.mxu0 0.0
    %1967 = vmatpush.msra.mxu0 0.0
    %1968 = vmatpush.msra.mxu0 0.0
    %1969 = vmatpush.msra.mxu0 %v1909
    %1970 = vmatmul.f32.gmra.mxu0 %v1900
    %v1971 = vpop.f32.mrf.mxu0
    %v1972 = vadd.f32 0.0, %v1971
    %1973 = vdwg.mxu0
    %1974 = vmatpush.msra.mxu0 0.0
    %1975 = vmatpush.msra.mxu0 0.0
    %1976 = vmatpush.msra.mxu0 0.0
    %1977 = vmatpush.msra.mxu0 0.0
    %1978 = vmatpush.msra.mxu0 0.0
    %1979 = vmatpush.msra.mxu0 0.0
    %1980 = vmatpush.msra.mxu0 0.0
    %1981 = vmatpush.msra.mxu0 0.0
    %1982 = vmatpush.msra.mxu0 0.0
    %1983 = vmatpush.msra.mxu0 0.0
    %1984 = vmatpush.msra.mxu0 0.0
    %1985 = vmatpush.msra.mxu0 0.0
    %1986 = vmatpush.msra.mxu0 0.0
    %1987 = vmatpush.msra.mxu0 0.0
    %1988 = vmatpush.msra.mxu0 0.0
    %1989 = vmatpush.msra.mxu0 %v1912
    %1990 = vmatmul.f32.gmra.mxu0 %v1900
    %v1991 = vpop.f32.mrf.mxu0
    %v1992 = vadd.f32 0.0, %v1991
    %1993 = vdwg.mxu0
    %v1994 = vadd.f32 %v1821, %v1932
    %v1995 = vadd.f32 %v1841, %v1952
    %v1996 = vadd.f32 %v1861, %v1972
    %v1997 = vadd.f32 %v1881, %v1992
    %1998 = vrot.lane.b32.xlu0 %v1657, 4
    %v1999 = vpop.permute.xlu0 %1998
    %2000 = vrot.lane.b32.xlu0 %v1658, 4
    %v2001 = vpop.permute.xlu0 %2000
    %2002 = vrot.lane.b32.xlu0 %v1659, 4
    %v2003 = vpop.permute.xlu0 %2002
    %2004 = vrot.lane.b32.xlu0 %v1660, 4
    %v2005 = vpop.permute.xlu0 %2004
    %v2006 = vsel %vm951, %v2003, %v2005
    %v2007 = vsel %vm951, %v2001, %v2003
    %v2008 = vsel %vm951, %v1999, %v2001
    %v2009 = vsel %vm951, %v2005, %v1999
    %v2010 = vmul.f32 %v2009, %v452
    %v2011 = vmul.f32 %v2008, %v453
    %v2012 = vmul.f32 %v2007, %v454
    %v2013 = vmul.f32 %v2006, %v455
    %v2015 = vsel %vm166, %v38, 0
    %v2018 = vsel %vm179, %v2010, 0
    %v2021 = vsel %vm179, %v2011, 0
    %v2024 = vsel %vm179, %v2012, 0
    %v2027 = vsel %vm179, %v2013, 0
    %2029 = vmatpush.msra.mxu0 0.0
    %2030 = vmatpush.msra.mxu0 0.0
    %2031 = vmatpush.msra.mxu0 0.0
    %2032 = vmatpush.msra.mxu0 0.0
    %2033 = vmatpush.msra.mxu0 0.0
    %2034 = vmatpush.msra.mxu0 0.0
    %2035 = vmatpush.msra.mxu0 0.0
    %2036 = vmatpush.msra.mxu0 0.0
    %2037 = vmatpush.msra.mxu0 0.0
    %2038 = vmatpush.msra.mxu0 0.0
    %2039 = vmatpush.msra.mxu0 0.0
    %2040 = vmatpush.msra.mxu0 0.0
    %2041 = vmatpush.msra.mxu0 0.0
    %2042 = vmatpush.msra.mxu0 0.0
    %2043 = vmatpush.msra.mxu0 0.0
    %2044 = vmatpush.msra.mxu0 %v2018
    %2045 = vmatmul.f32.gmra.mxu0 %v2015
    %v2046 = vpop.f32.mrf.mxu0
    %v2047 = vadd.f32 0.0, %v2046
    %2048 = vdwg.mxu0
    %2049 = vmatpush.msra.mxu0 0.0
    %2050 = vmatpush.msra.mxu0 0.0
    %2051 = vmatpush.msra.mxu0 0.0
    %2052 = vmatpush.msra.mxu0 0.0
    %2053 = vmatpush.msra.mxu0 0.0
    %2054 = vmatpush.msra.mxu0 0.0
    %2055 = vmatpush.msra.mxu0 0.0
    %2056 = vmatpush.msra.mxu0 0.0
    %2057 = vmatpush.msra.mxu0 0.0
    %2058 = vmatpush.msra.mxu0 0.0
    %2059 = vmatpush.msra.mxu0 0.0
    %2060 = vmatpush.msra.mxu0 0.0
    %2061 = vmatpush.msra.mxu0 0.0
    %2062 = vmatpush.msra.mxu0 0.0
    %2063 = vmatpush.msra.mxu0 0.0
    %2064 = vmatpush.msra.mxu0 %v2021
    %2065 = vmatmul.f32.gmra.mxu0 %v2015
    %v2066 = vpop.f32.mrf.mxu0
    %v2067 = vadd.f32 0.0, %v2066
    %2068 = vdwg.mxu0
    %2069 = vmatpush.msra.mxu0 0.0
    %2070 = vmatpush.msra.mxu0 0.0
    %2071 = vmatpush.msra.mxu0 0.0
    %2072 = vmatpush.msra.mxu0 0.0
    %2073 = vmatpush.msra.mxu0 0.0
    %2074 = vmatpush.msra.mxu0 0.0
    %2075 = vmatpush.msra.mxu0 0.0
    %2076 = vmatpush.msra.mxu0 0.0
    %2077 = vmatpush.msra.mxu0 0.0
    %2078 = vmatpush.msra.mxu0 0.0
    %2079 = vmatpush.msra.mxu0 0.0
    %2080 = vmatpush.msra.mxu0 0.0
    %2081 = vmatpush.msra.mxu0 0.0
    %2082 = vmatpush.msra.mxu0 0.0
    %2083 = vmatpush.msra.mxu0 0.0
    %2084 = vmatpush.msra.mxu0 %v2024
    %2085 = vmatmul.f32.gmra.mxu0 %v2015
    %v2086 = vpop.f32.mrf.mxu0
    %v2087 = vadd.f32 0.0, %v2086
    %2088 = vdwg.mxu0
    %2089 = vmatpush.msra.mxu0 0.0
    %2090 = vmatpush.msra.mxu0 0.0
    %2091 = vmatpush.msra.mxu0 0.0
    %2092 = vmatpush.msra.mxu0 0.0
    %2093 = vmatpush.msra.mxu0 0.0
    %2094 = vmatpush.msra.mxu0 0.0
    %2095 = vmatpush.msra.mxu0 0.0
    %2096 = vmatpush.msra.mxu0 0.0
    %2097 = vmatpush.msra.mxu0 0.0
    %2098 = vmatpush.msra.mxu0 0.0
    %2099 = vmatpush.msra.mxu0 0.0
    %2100 = vmatpush.msra.mxu0 0.0
    %2101 = vmatpush.msra.mxu0 0.0
    %2102 = vmatpush.msra.mxu0 0.0
    %2103 = vmatpush.msra.mxu0 0.0
    %2104 = vmatpush.msra.mxu0 %v2027
    %2105 = vmatmul.f32.gmra.mxu0 %v2015
    %v2106 = vpop.f32.mrf.mxu0
    %v2107 = vadd.f32 0.0, %v2106
    %2108 = vdwg.mxu0
    %v2109 = vadd.f32 %v1994, %v2047
    %v2110 = vadd.f32 %v1995, %v2067
    %v2111 = vadd.f32 %v1996, %v2087
    %v2112 = vadd.f32 %v1997, %v2107
    %v2114 = vsel %vm166, %v39, 0
    %v2117 = vsel %vm179, %v1657, 0
    %v2120 = vsel %vm179, %v1658, 0
    %v2123 = vsel %vm179, %v1659, 0
    %v2126 = vsel %vm179, %v1660, 0
    %2128 = vmatpush.msra.mxu0 0.0
    %2129 = vmatpush.msra.mxu0 0.0
    %2130 = vmatpush.msra.mxu0 0.0
    %2131 = vmatpush.msra.mxu0 0.0
    %2132 = vmatpush.msra.mxu0 0.0
    %2133 = vmatpush.msra.mxu0 0.0
    %2134 = vmatpush.msra.mxu0 0.0
    %2135 = vmatpush.msra.mxu0 0.0
    %2136 = vmatpush.msra.mxu0 0.0
    %2137 = vmatpush.msra.mxu0 0.0
    %2138 = vmatpush.msra.mxu0 0.0
    %2139 = vmatpush.msra.mxu0 0.0
    %2140 = vmatpush.msra.mxu0 0.0
    %2141 = vmatpush.msra.mxu0 0.0
    %2142 = vmatpush.msra.mxu0 0.0
    %2143 = vmatpush.msra.mxu0 %v2117
    %2144 = vmatmul.f32.gmra.mxu0 %v2114
    %v2145 = vpop.f32.mrf.mxu0
    %v2146 = vadd.f32 0.0, %v2145
    %2147 = vdwg.mxu0
    %2148 = vmatpush.msra.mxu0 0.0
    %2149 = vmatpush.msra.mxu0 0.0
    %2150 = vmatpush.msra.mxu0 0.0
    %2151 = vmatpush.msra.mxu0 0.0
    %2152 = vmatpush.msra.mxu0 0.0
    %2153 = vmatpush.msra.mxu0 0.0
    %2154 = vmatpush.msra.mxu0 0.0
    %2155 = vmatpush.msra.mxu0 0.0
    %2156 = vmatpush.msra.mxu0 0.0
    %2157 = vmatpush.msra.mxu0 0.0
    %2158 = vmatpush.msra.mxu0 0.0
    %2159 = vmatpush.msra.mxu0 0.0
    %2160 = vmatpush.msra.mxu0 0.0
    %2161 = vmatpush.msra.mxu0 0.0
    %2162 = vmatpush.msra.mxu0 0.0
    %2163 = vmatpush.msra.mxu0 %v2120
    %2164 = vmatmul.f32.gmra.mxu0 %v2114
    %v2165 = vpop.f32.mrf.mxu0
    %v2166 = vadd.f32 0.0, %v2165
    %2167 = vdwg.mxu0
    %2168 = vmatpush.msra.mxu0 0.0
    %2169 = vmatpush.msra.mxu0 0.0
    %2170 = vmatpush.msra.mxu0 0.0
    %2171 = vmatpush.msra.mxu0 0.0
    %2172 = vmatpush.msra.mxu0 0.0
    %2173 = vmatpush.msra.mxu0 0.0
    %2174 = vmatpush.msra.mxu0 0.0
    %2175 = vmatpush.msra.mxu0 0.0
    %2176 = vmatpush.msra.mxu0 0.0
    %2177 = vmatpush.msra.mxu0 0.0
    %2178 = vmatpush.msra.mxu0 0.0
    %2179 = vmatpush.msra.mxu0 0.0
    %2180 = vmatpush.msra.mxu0 0.0
    %2181 = vmatpush.msra.mxu0 0.0
    %2182 = vmatpush.msra.mxu0 0.0
    %2183 = vmatpush.msra.mxu0 %v2123
    %2184 = vmatmul.f32.gmra.mxu0 %v2114
    %v2185 = vpop.f32.mrf.mxu0
    %v2186 = vadd.f32 0.0, %v2185
    %2187 = vdwg.mxu0
    %2188 = vmatpush.msra.mxu0 0.0
    %2189 = vmatpush.msra.mxu0 0.0
    %2190 = vmatpush.msra.mxu0 0.0
    %2191 = vmatpush.msra.mxu0 0.0
    %2192 = vmatpush.msra.mxu0 0.0
    %2193 = vmatpush.msra.mxu0 0.0
    %2194 = vmatpush.msra.mxu0 0.0
    %2195 = vmatpush.msra.mxu0 0.0
    %2196 = vmatpush.msra.mxu0 0.0
    %2197 = vmatpush.msra.mxu0 0.0
    %2198 = vmatpush.msra.mxu0 0.0
    %2199 = vmatpush.msra.mxu0 0.0
    %2200 = vmatpush.msra.mxu0 0.0
    %2201 = vmatpush.msra.mxu0 0.0
    %2202 = vmatpush.msra.mxu0 0.0
    %2203 = vmatpush.msra.mxu0 %v2126
    %2204 = vmatmul.f32.gmra.mxu0 %v2114
    %v2205 = vpop.f32.mrf.mxu0
    %v2206 = vadd.f32 0.0, %v2205
    %2207 = vdwg.mxu0
    %v2208 = vadd.f32 %v2109, %v2146
    %v2209 = vadd.f32 %v2110, %v2166
    %v2210 = vadd.f32 %v2111, %v2186
    %v2211 = vadd.f32 %v2112, %v2206
    %2212 = vrot.lane.b32.xlu0 %v1657, 124
    %v2213 = vpop.permute.xlu0 %2212
    %2214 = vrot.lane.b32.xlu0 %v1658, 124
    %v2215 = vpop.permute.xlu0 %2214
    %2216 = vrot.lane.b32.xlu0 %v1659, 124
    %v2217 = vpop.permute.xlu0 %2216
    %2218 = vrot.lane.b32.xlu0 %v1660, 124
    %v2219 = vpop.permute.xlu0 %2218
    %v2220 = vsel %vm1166, %v2217, %v2219
    %v2221 = vsel %vm1166, %v2215, %v2217
    %v2222 = vsel %vm1166, %v2213, %v2215
    %v2223 = vsel %vm1166, %v2219, %v2213
    %v2224 = vmul.f32 %v2222, %v464
    %v2225 = vmul.f32 %v2221, %v465
    %v2226 = vmul.f32 %v2220, %v466
    %v2227 = vmul.f32 %v2223, %v467
    %v2229 = vsel %vm166, %v40, 0
    %v2232 = vsel %vm179, %v2224, 0
    %v2235 = vsel %vm179, %v2225, 0
    %v2238 = vsel %vm179, %v2226, 0
    %v2241 = vsel %vm179, %v2227, 0
    %2243 = vmatpush.msra.mxu0 0.0
    %2244 = vmatpush.msra.mxu0 0.0
    %2245 = vmatpush.msra.mxu0 0.0
    %2246 = vmatpush.msra.mxu0 0.0
    %2247 = vmatpush.msra.mxu0 0.0
    %2248 = vmatpush.msra.mxu0 0.0
    %2249 = vmatpush.msra.mxu0 0.0
    %2250 = vmatpush.msra.mxu0 0.0
    %2251 = vmatpush.msra.mxu0 0.0
    %2252 = vmatpush.msra.mxu0 0.0
    %2253 = vmatpush.msra.mxu0 0.0
    %2254 = vmatpush.msra.mxu0 0.0
    %2255 = vmatpush.msra.mxu0 0.0
    %2256 = vmatpush.msra.mxu0 0.0
    %2257 = vmatpush.msra.mxu0 0.0
    %2258 = vmatpush.msra.mxu0 %v2232
    %2259 = vmatmul.f32.gmra.mxu0 %v2229
    %v2260 = vpop.f32.mrf.mxu0
    %v2261 = vadd.f32 0.0, %v2260
    %2262 = vdwg.mxu0
    %2263 = vmatpush.msra.mxu0 0.0
    %2264 = vmatpush.msra.mxu0 0.0
    %2265 = vmatpush.msra.mxu0 0.0
    %2266 = vmatpush.msra.mxu0 0.0
    %2267 = vmatpush.msra.mxu0 0.0
    %2268 = vmatpush.msra.mxu0 0.0
    %2269 = vmatpush.msra.mxu0 0.0
    %2270 = vmatpush.msra.mxu0 0.0
    %2271 = vmatpush.msra.mxu0 0.0
    %2272 = vmatpush.msra.mxu0 0.0
    %2273 = vmatpush.msra.mxu0 0.0
    %2274 = vmatpush.msra.mxu0 0.0
    %2275 = vmatpush.msra.mxu0 0.0
    %2276 = vmatpush.msra.mxu0 0.0
    %2277 = vmatpush.msra.mxu0 0.0
    %2278 = vmatpush.msra.mxu0 %v2235
    %2279 = vmatmul.f32.gmra.mxu0 %v2229
    %v2280 = vpop.f32.mrf.mxu0
    %v2281 = vadd.f32 0.0, %v2280
    %2282 = vdwg.mxu0
    %2283 = vmatpush.msra.mxu0 0.0
    %2284 = vmatpush.msra.mxu0 0.0
    %2285 = vmatpush.msra.mxu0 0.0
    %2286 = vmatpush.msra.mxu0 0.0
    %2287 = vmatpush.msra.mxu0 0.0
    %2288 = vmatpush.msra.mxu0 0.0
    %2289 = vmatpush.msra.mxu0 0.0
    %2290 = vmatpush.msra.mxu0 0.0
    %2291 = vmatpush.msra.mxu0 0.0
    %2292 = vmatpush.msra.mxu0 0.0
    %2293 = vmatpush.msra.mxu0 0.0
    %2294 = vmatpush.msra.mxu0 0.0
    %2295 = vmatpush.msra.mxu0 0.0
    %2296 = vmatpush.msra.mxu0 0.0
    %2297 = vmatpush.msra.mxu0 0.0
    %2298 = vmatpush.msra.mxu0 %v2238
    %2299 = vmatmul.f32.gmra.mxu0 %v2229
    %v2300 = vpop.f32.mrf.mxu0
    %v2301 = vadd.f32 0.0, %v2300
    %2302 = vdwg.mxu0
    %2303 = vmatpush.msra.mxu0 0.0
    %2304 = vmatpush.msra.mxu0 0.0
    %2305 = vmatpush.msra.mxu0 0.0
    %2306 = vmatpush.msra.mxu0 0.0
    %2307 = vmatpush.msra.mxu0 0.0
    %2308 = vmatpush.msra.mxu0 0.0
    %2309 = vmatpush.msra.mxu0 0.0
    %2310 = vmatpush.msra.mxu0 0.0
    %2311 = vmatpush.msra.mxu0 0.0
    %2312 = vmatpush.msra.mxu0 0.0
    %2313 = vmatpush.msra.mxu0 0.0
    %2314 = vmatpush.msra.mxu0 0.0
    %2315 = vmatpush.msra.mxu0 0.0
    %2316 = vmatpush.msra.mxu0 0.0
    %2317 = vmatpush.msra.mxu0 0.0
    %2318 = vmatpush.msra.mxu0 %v2241
    %2319 = vmatmul.f32.gmra.mxu0 %v2229
    %v2320 = vpop.f32.mrf.mxu0
    %v2321 = vadd.f32 0.0, %v2320
    %2322 = vdwg.mxu0
    %v2323 = vadd.f32 %v2208, %v2261
    %v2324 = vadd.f32 %v2209, %v2281
    %v2325 = vadd.f32 %v2210, %v2301
    %v2326 = vadd.f32 %v2211, %v2321
    %v2327 = vmul.f32 %v1671, %v488
    %v2328 = vmul.f32 %v1670, %v489
    %v2329 = vmul.f32 %v1669, %v490
    %v2330 = vmul.f32 %v1672, %v491
    %v2332 = vsel %vm166, %v41, 0
    %v2335 = vsel %vm179, %v2327, 0
    %v2338 = vsel %vm179, %v2328, 0
    %v2341 = vsel %vm179, %v2329, 0
    %v2344 = vsel %vm179, %v2330, 0
    %2346 = vmatpush.msra.mxu0 0.0
    %2347 = vmatpush.msra.mxu0 0.0
    %2348 = vmatpush.msra.mxu0 0.0
    %2349 = vmatpush.msra.mxu0 0.0
    %2350 = vmatpush.msra.mxu0 0.0
    %2351 = vmatpush.msra.mxu0 0.0
    %2352 = vmatpush.msra.mxu0 0.0
    %2353 = vmatpush.msra.mxu0 0.0
    %2354 = vmatpush.msra.mxu0 0.0
    %2355 = vmatpush.msra.mxu0 0.0
    %2356 = vmatpush.msra.mxu0 0.0
    %2357 = vmatpush.msra.mxu0 0.0
    %2358 = vmatpush.msra.mxu0 0.0
    %2359 = vmatpush.msra.mxu0 0.0
    %2360 = vmatpush.msra.mxu0 0.0
    %2361 = vmatpush.msra.mxu0 %v2335
    %2362 = vmatmul.f32.gmra.mxu0 %v2332
    %v2363 = vpop.f32.mrf.mxu0
    %v2364 = vadd.f32 0.0, %v2363
    %2365 = vdwg.mxu0
    %2366 = vmatpush.msra.mxu0 0.0
    %2367 = vmatpush.msra.mxu0 0.0
    %2368 = vmatpush.msra.mxu0 0.0
    %2369 = vmatpush.msra.mxu0 0.0
    %2370 = vmatpush.msra.mxu0 0.0
    %2371 = vmatpush.msra.mxu0 0.0
    %2372 = vmatpush.msra.mxu0 0.0
    %2373 = vmatpush.msra.mxu0 0.0
    %2374 = vmatpush.msra.mxu0 0.0
    %2375 = vmatpush.msra.mxu0 0.0
    %2376 = vmatpush.msra.mxu0 0.0
    %2377 = vmatpush.msra.mxu0 0.0
    %2378 = vmatpush.msra.mxu0 0.0
    %2379 = vmatpush.msra.mxu0 0.0
    %2380 = vmatpush.msra.mxu0 0.0
    %2381 = vmatpush.msra.mxu0 %v2338
    %2382 = vmatmul.f32.gmra.mxu0 %v2332
    %v2383 = vpop.f32.mrf.mxu0
    %v2384 = vadd.f32 0.0, %v2383
    %2385 = vdwg.mxu0
    %2386 = vmatpush.msra.mxu0 0.0
    %2387 = vmatpush.msra.mxu0 0.0
    %2388 = vmatpush.msra.mxu0 0.0
    %2389 = vmatpush.msra.mxu0 0.0
    %2390 = vmatpush.msra.mxu0 0.0
    %2391 = vmatpush.msra.mxu0 0.0
    %2392 = vmatpush.msra.mxu0 0.0
    %2393 = vmatpush.msra.mxu0 0.0
    %2394 = vmatpush.msra.mxu0 0.0
    %2395 = vmatpush.msra.mxu0 0.0
    %2396 = vmatpush.msra.mxu0 0.0
    %2397 = vmatpush.msra.mxu0 0.0
    %2398 = vmatpush.msra.mxu0 0.0
    %2399 = vmatpush.msra.mxu0 0.0
    %2400 = vmatpush.msra.mxu0 0.0
    %2401 = vmatpush.msra.mxu0 %v2341
    %2402 = vmatmul.f32.gmra.mxu0 %v2332
    %v2403 = vpop.f32.mrf.mxu0
    %v2404 = vadd.f32 0.0, %v2403
    %2405 = vdwg.mxu0
    %2406 = vmatpush.msra.mxu0 0.0
    %2407 = vmatpush.msra.mxu0 0.0
    %2408 = vmatpush.msra.mxu0 0.0
    %2409 = vmatpush.msra.mxu0 0.0
    %2410 = vmatpush.msra.mxu0 0.0
    %2411 = vmatpush.msra.mxu0 0.0
    %2412 = vmatpush.msra.mxu0 0.0
    %2413 = vmatpush.msra.mxu0 0.0
    %2414 = vmatpush.msra.mxu0 0.0
    %2415 = vmatpush.msra.mxu0 0.0
    %2416 = vmatpush.msra.mxu0 0.0
    %2417 = vmatpush.msra.mxu0 0.0
    %2418 = vmatpush.msra.mxu0 0.0
    %2419 = vmatpush.msra.mxu0 0.0
    %2420 = vmatpush.msra.mxu0 0.0
    %2421 = vmatpush.msra.mxu0 %v2344
    %2422 = vmatmul.f32.gmra.mxu0 %v2332
    %v2423 = vpop.f32.mrf.mxu0
    %v2424 = vadd.f32 0.0, %v2423
    %2425 = vdwg.mxu0
    %v2426 = vadd.f32 %v2323, %v2364
    %v2427 = vadd.f32 %v2324, %v2384
    %v2428 = vadd.f32 %v2325, %v2404
    %v2429 = vadd.f32 %v2326, %v2424
    %v2430 = vmul.f32 %v1687, %v500
    %v2431 = vmul.f32 %v1686, %v501
    %v2432 = vmul.f32 %v1685, %v502
    %v2433 = vmul.f32 %v1688, %v503
    %v2435 = vsel %vm166, %v42, 0
    %v2438 = vsel %vm179, %v2430, 0
    %v2441 = vsel %vm179, %v2431, 0
    %v2444 = vsel %vm179, %v2432, 0
    %v2447 = vsel %vm179, %v2433, 0
    %2449 = vmatpush.msra.mxu0 0.0
    %2450 = vmatpush.msra.mxu0 0.0
    %2451 = vmatpush.msra.mxu0 0.0
    %2452 = vmatpush.msra.mxu0 0.0
    %2453 = vmatpush.msra.mxu0 0.0
    %2454 = vmatpush.msra.mxu0 0.0
    %2455 = vmatpush.msra.mxu0 0.0
    %2456 = vmatpush.msra.mxu0 0.0
    %2457 = vmatpush.msra.mxu0 0.0
    %2458 = vmatpush.msra.mxu0 0.0
    %2459 = vmatpush.msra.mxu0 0.0
    %2460 = vmatpush.msra.mxu0 0.0
    %2461 = vmatpush.msra.mxu0 0.0
    %2462 = vmatpush.msra.mxu0 0.0
    %2463 = vmatpush.msra.mxu0 0.0
    %2464 = vmatpush.msra.mxu0 %v2438
    %2465 = vmatmul.f32.gmra.mxu0 %v2435
    %v2466 = vpop.f32.mrf.mxu0
    %v2467 = vadd.f32 0.0, %v2466
    %2468 = vdwg.mxu0
    %2469 = vmatpush.msra.mxu0 0.0
    %2470 = vmatpush.msra.mxu0 0.0
    %2471 = vmatpush.msra.mxu0 0.0
    %2472 = vmatpush.msra.mxu0 0.0
    %2473 = vmatpush.msra.mxu0 0.0
    %2474 = vmatpush.msra.mxu0 0.0
    %2475 = vmatpush.msra.mxu0 0.0
    %2476 = vmatpush.msra.mxu0 0.0
    %2477 = vmatpush.msra.mxu0 0.0
    %2478 = vmatpush.msra.mxu0 0.0
    %2479 = vmatpush.msra.mxu0 0.0
    %2480 = vmatpush.msra.mxu0 0.0
    %2481 = vmatpush.msra.mxu0 0.0
    %2482 = vmatpush.msra.mxu0 0.0
    %2483 = vmatpush.msra.mxu0 0.0
    %2484 = vmatpush.msra.mxu0 %v2441
    %2485 = vmatmul.f32.gmra.mxu0 %v2435
    %v2486 = vpop.f32.mrf.mxu0
    %v2487 = vadd.f32 0.0, %v2486
    %2488 = vdwg.mxu0
    %2489 = vmatpush.msra.mxu0 0.0
    %2490 = vmatpush.msra.mxu0 0.0
    %2491 = vmatpush.msra.mxu0 0.0
    %2492 = vmatpush.msra.mxu0 0.0
    %2493 = vmatpush.msra.mxu0 0.0
    %2494 = vmatpush.msra.mxu0 0.0
    %2495 = vmatpush.msra.mxu0 0.0
    %2496 = vmatpush.msra.mxu0 0.0
    %2497 = vmatpush.msra.mxu0 0.0
    %2498 = vmatpush.msra.mxu0 0.0
    %2499 = vmatpush.msra.mxu0 0.0
    %2500 = vmatpush.msra.mxu0 0.0
    %2501 = vmatpush.msra.mxu0 0.0
    %2502 = vmatpush.msra.mxu0 0.0
    %2503 = vmatpush.msra.mxu0 0.0
    %2504 = vmatpush.msra.mxu0 %v2444
    %2505 = vmatmul.f32.gmra.mxu0 %v2435
    %v2506 = vpop.f32.mrf.mxu0
    %v2507 = vadd.f32 0.0, %v2506
    %2508 = vdwg.mxu0
    %2509 = vmatpush.msra.mxu0 0.0
    %2510 = vmatpush.msra.mxu0 0.0
    %2511 = vmatpush.msra.mxu0 0.0
    %2512 = vmatpush.msra.mxu0 0.0
    %2513 = vmatpush.msra.mxu0 0.0
    %2514 = vmatpush.msra.mxu0 0.0
    %2515 = vmatpush.msra.mxu0 0.0
    %2516 = vmatpush.msra.mxu0 0.0
    %2517 = vmatpush.msra.mxu0 0.0
    %2518 = vmatpush.msra.mxu0 0.0
    %2519 = vmatpush.msra.mxu0 0.0
    %2520 = vmatpush.msra.mxu0 0.0
    %2521 = vmatpush.msra.mxu0 0.0
    %2522 = vmatpush.msra.mxu0 0.0
    %2523 = vmatpush.msra.mxu0 0.0
    %2524 = vmatpush.msra.mxu0 %v2447
    %2525 = vmatmul.f32.gmra.mxu0 %v2435
    %v2526 = vpop.f32.mrf.mxu0
    %v2527 = vadd.f32 0.0, %v2526
    %2528 = vdwg.mxu0
    %v2529 = vadd.f32 %v2426, %v2467
    %v2530 = vadd.f32 %v2427, %v2487
    %v2531 = vadd.f32 %v2428, %v2507
    %v2532 = vadd.f32 %v2429, %v2527
    %v2533 = vmul.f32 %v1893, %v512
    %v2534 = vmul.f32 %v1892, %v513
    %v2535 = vmul.f32 %v1891, %v514
    %v2536 = vmul.f32 %v1894, %v515
    %v2538 = vsel %vm166, %v43, 0
    %v2541 = vsel %vm179, %v2533, 0
    %v2544 = vsel %vm179, %v2534, 0
    %v2547 = vsel %vm179, %v2535, 0
    %v2550 = vsel %vm179, %v2536, 0
    %2552 = vmatpush.msra.mxu0 0.0
    %2553 = vmatpush.msra.mxu0 0.0
    %2554 = vmatpush.msra.mxu0 0.0
    %2555 = vmatpush.msra.mxu0 0.0
    %2556 = vmatpush.msra.mxu0 0.0
    %2557 = vmatpush.msra.mxu0 0.0
    %2558 = vmatpush.msra.mxu0 0.0
    %2559 = vmatpush.msra.mxu0 0.0
    %2560 = vmatpush.msra.mxu0 0.0
    %2561 = vmatpush.msra.mxu0 0.0
    %2562 = vmatpush.msra.mxu0 0.0
    %2563 = vmatpush.msra.mxu0 0.0
    %2564 = vmatpush.msra.mxu0 0.0
    %2565 = vmatpush.msra.mxu0 0.0
    %2566 = vmatpush.msra.mxu0 0.0
    %2567 = vmatpush.msra.mxu0 %v2541
    %2568 = vmatmul.f32.gmra.mxu0 %v2538
    %v2569 = vpop.f32.mrf.mxu0
    %v2570 = vadd.f32 0.0, %v2569
    %2571 = vdwg.mxu0
    %2572 = vmatpush.msra.mxu0 0.0
    %2573 = vmatpush.msra.mxu0 0.0
    %2574 = vmatpush.msra.mxu0 0.0
    %2575 = vmatpush.msra.mxu0 0.0
    %2576 = vmatpush.msra.mxu0 0.0
    %2577 = vmatpush.msra.mxu0 0.0
    %2578 = vmatpush.msra.mxu0 0.0
    %2579 = vmatpush.msra.mxu0 0.0
    %2580 = vmatpush.msra.mxu0 0.0
    %2581 = vmatpush.msra.mxu0 0.0
    %2582 = vmatpush.msra.mxu0 0.0
    %2583 = vmatpush.msra.mxu0 0.0
    %2584 = vmatpush.msra.mxu0 0.0
    %2585 = vmatpush.msra.mxu0 0.0
    %2586 = vmatpush.msra.mxu0 0.0
    %2587 = vmatpush.msra.mxu0 %v2544
    %2588 = vmatmul.f32.gmra.mxu0 %v2538
    %v2589 = vpop.f32.mrf.mxu0
    %v2590 = vadd.f32 0.0, %v2589
    %2591 = vdwg.mxu0
    %2592 = vmatpush.msra.mxu0 0.0
    %2593 = vmatpush.msra.mxu0 0.0
    %2594 = vmatpush.msra.mxu0 0.0
    %2595 = vmatpush.msra.mxu0 0.0
    %2596 = vmatpush.msra.mxu0 0.0
    %2597 = vmatpush.msra.mxu0 0.0
    %2598 = vmatpush.msra.mxu0 0.0
    %2599 = vmatpush.msra.mxu0 0.0
    %2600 = vmatpush.msra.mxu0 0.0
    %2601 = vmatpush.msra.mxu0 0.0
    %2602 = vmatpush.msra.mxu0 0.0
    %2603 = vmatpush.msra.mxu0 0.0
    %2604 = vmatpush.msra.mxu0 0.0
    %2605 = vmatpush.msra.mxu0 0.0
    %2606 = vmatpush.msra.mxu0 0.0
    %2607 = vmatpush.msra.mxu0 %v2547
    %2608 = vmatmul.f32.gmra.mxu0 %v2538
    %v2609 = vpop.f32.mrf.mxu0
    %v2610 = vadd.f32 0.0, %v2609
    %2611 = vdwg.mxu0
    %2612 = vmatpush.msra.mxu0 0.0
    %2613 = vmatpush.msra.mxu0 0.0
    %2614 = vmatpush.msra.mxu0 0.0
    %2615 = vmatpush.msra.mxu0 0.0
    %2616 = vmatpush.msra.mxu0 0.0
    %2617 = vmatpush.msra.mxu0 0.0
    %2618 = vmatpush.msra.mxu0 0.0
    %2619 = vmatpush.msra.mxu0 0.0
    %2620 = vmatpush.msra.mxu0 0.0
    %2621 = vmatpush.msra.mxu0 0.0
    %2622 = vmatpush.msra.mxu0 0.0
    %2623 = vmatpush.msra.mxu0 0.0
    %2624 = vmatpush.msra.mxu0 0.0
    %2625 = vmatpush.msra.mxu0 0.0
    %2626 = vmatpush.msra.mxu0 0.0
    %2627 = vmatpush.msra.mxu0 %v2550
    %2628 = vmatmul.f32.gmra.mxu0 %v2538
    %v2629 = vpop.f32.mrf.mxu0
    %v2630 = vadd.f32 0.0, %v2629
    %2631 = vdwg.mxu0
    %v2632 = vadd.f32 %v2529, %v2570
    %v2633 = vadd.f32 %v2530, %v2590
    %v2634 = vadd.f32 %v2531, %v2610
    %v2635 = vadd.f32 %v2532, %v2630
    %2636 = vset.pattern.permute.xlu0 8
    %2637 = vperm.xlu0 %2636, %v44
    %v2638 = vpop.permute.xlu0 %2637
    %v2640 = vadd.f32 %v2632, %v2638
    %v2641 = vadd.f32 %v2633, %v2638
    %v2642 = vadd.f32 %v2634, %v2638
    %v2643 = vadd.f32 %v2635, %v2638
    %v2644 = vsel %vm179, %v2640, 0.0
    %v2645 = vsel %vm179, %v2641, 0.0
    %v2646 = vadd.f32 %v2644, %v2645
    %v2647 = vsel %vm179, %v2642, 0.0
    %v2648 = vadd.f32 %v2646, %v2647
    %v2649 = vsel %vm179, %v2643, 0.0
    %v2650 = vadd.f32 %v2648, %v2649
    %2651 = vadd.xlane.f32.xlu0 %v2650
    %v2652 = vpop.xlane.xlu0 %2651
    %v2653 = vmul.f32 %v2652, %v1606
    %v2654 = vsub.f32 %v2640, %v2653
    %v2655 = vsub.f32 %v2641, %v2653
    %v2656 = vsub.f32 %v2642, %v2653
    %v2657 = vsub.f32 %v2643, %v2653
    %v2658 = vmul.f32 %v2654, %v2654
    %v2659 = vmul.f32 %v2655, %v2655
    %v2660 = vmul.f32 %v2656, %v2656
    %v2661 = vmul.f32 %v2657, %v2657
    %v2662 = vsel %vm179, %v2658, 0.0
    %v2663 = vsel %vm179, %v2659, 0.0
    %v2664 = vadd.f32 %v2662, %v2663
    %v2665 = vsel %vm179, %v2660, 0.0
    %v2666 = vadd.f32 %v2664, %v2665
    %v2667 = vsel %vm179, %v2661, 0.0
    %v2668 = vadd.f32 %v2666, %v2667
    %2669 = vadd.xlane.f32.xlu0 %v2668
    %v2670 = vpop.xlane.xlu0 %2669
    %v2671 = vmul.f32 %v2670, %v1606
    %v2672 = vadd.f32 %v2671, 1e-05
    %v2673 = vrsqrt.pop %v2672
    %v2674 = vmul.f32 %v2673, %v2672
    %v2675 = vmul.f32 %v2674, %v2673
    %v2676 = vmul.f32 0.5, %v2675
    %v2677 = vsub.f32 1.5, %v2676
    %v2678 = vmul.f32 %v2673, %v2677
    %vm2679 = vweird.f32 %v2672
    %vm2680 = vweird.f32 %v2673
    %vm2681 = vmor %vm2679, %vm2680
    %v2682 = vsel %vm2681, %v2673, %v2678
    %v2683 = vmul.f32 %v2654, %v2682
    %v2684 = vmul.f32 %v2655, %v2682
    %v2685 = vmul.f32 %v2656, %v2682
    %v2686 = vmul.f32 %v2657, %v2682
    %2687 = vset.pattern.permute.xlu0 9
    %2688 = vperm.xlu0 %2687, %v44
    %v2689 = vpop.permute.xlu0 %2688
    %v2691 = vmul.f32 %v2683, %v2689
    %v2692 = vmul.f32 %v2684, %v2689
    %v2693 = vmul.f32 %v2685, %v2689
    %v2694 = vmul.f32 %v2686, %v2689
    %2695 = vset.pattern.permute.xlu0 10
    %2696 = vperm.xlu0 %2695, %v44
    %v2697 = vpop.permute.xlu0 %2696
    %v2699 = vadd.f32 %v2691, %v2697
    %v2700 = vadd.f32 %v2692, %v2697
    %v2701 = vadd.f32 %v2693, %v2697
    %v2702 = vadd.f32 %v2694, %v2697
    %v2703 = vmax.f32 %v2699, 0.0
    %v2704 = vmax.f32 %v2700, 0.0
    %v2705 = vmax.f32 %v2701, 0.0
    %v2706 = vmax.f32 %v2702, 0.0
    %2707 = vset.pattern.permute.xlu0 11
    %2708 = vperm.xlu0 %2707, %v44
    %v2709 = vpop.permute.xlu0 %2708
    %v2711 = vmul.f32 %v2709, %v2703
    %v2712 = vmul.f32 %v2709, %v2704
    %v2713 = vmul.f32 %v2709, %v2705
    %v2714 = vmul.f32 %v2709, %v2706
    %v2715 = vsel %vm179, %v2711, 0.0
    %v2716 = vrot.slane %v2715, 4
    %v2717 = vadd.f32 %v2715, %v2716
    %v2718 = vrot.slane %v2717, 2
    %v2719 = vadd.f32 %v2717, %v2718
    %v2720 = vrot.slane %v2719, 1
    %v2721 = vadd.f32 %v2719, %v2720
    %v2722 = vsel %vm179, %v2712, 0.0
    %v2723 = vrot.slane %v2722, 4
    %v2724 = vadd.f32 %v2722, %v2723
    %v2725 = vrot.slane %v2724, 2
    %v2726 = vadd.f32 %v2724, %v2725
    %v2727 = vrot.slane %v2726, 1
    %v2728 = vadd.f32 %v2726, %v2727
    %v2729 = vsel %vm179, %v2713, 0.0
    %v2730 = vrot.slane %v2729, 4
    %v2731 = vadd.f32 %v2729, %v2730
    %v2732 = vrot.slane %v2731, 2
    %v2733 = vadd.f32 %v2731, %v2732
    %v2734 = vrot.slane %v2733, 1
    %v2735 = vadd.f32 %v2733, %v2734
    %v2736 = vsel %vm179, %v2714, 0.0
    %v2737 = vrot.slane %v2736, 4
    %v2738 = vadd.f32 %v2736, %v2737
    %v2739 = vrot.slane %v2738, 2
    %v2740 = vadd.f32 %v2738, %v2739
    %v2741 = vrot.slane %v2740, 1
    %v2742 = vadd.f32 %v2740, %v2741
    %2743 = vset.pattern.permute.xlu0 12
    %2744 = vperm.xlu0 %2743, %v44
    %v2745 = vpop.permute.xlu0 %2744
    %v2747 = vadd.f32 %v2721, %v2745
    %v2748 = vadd.f32 %v2728, %v2745
    %v2749 = vadd.f32 %v2735, %v2745
    %v2750 = vadd.f32 %v2742, %v2745
    %vm2751 = vcmask 1040384
    %v2752 = vsel %vm2751, %v2747, 0.0
    %v2753 = vsel %vm2751, %v2748, 0.0
    %v2754 = vadd.f32 %v2752, %v2753
    %v2755 = vsel %vm2751, %v2749, 0.0
    %v2756 = vadd.f32 %v2754, %v2755
    %v2757 = vsel %vm2751, %v2750, 0.0
    %v2758 = vadd.f32 %v2756, %v2757
    %2759 = vadd.xlane.f32.xlu0 %v2758
    %v2760 = vpop.xlane.xlu0 %2759
    %v2761 = vmul.f32 %v2760, %v1606
    %v2762 = vsub.f32 %v2747, %v2761
    %v2763 = vsub.f32 %v2748, %v2761
    %v2764 = vsub.f32 %v2749, %v2761
    %v2765 = vsub.f32 %v2750, %v2761
    %v2766 = vmul.f32 %v2762, %v2762
    %v2767 = vmul.f32 %v2763, %v2763
    %v2768 = vmul.f32 %v2764, %v2764
    %v2769 = vmul.f32 %v2765, %v2765
    %v2770 = vsel %vm2751, %v2766, 0.0
    %v2771 = vsel %vm2751, %v2767, 0.0
    %v2772 = vadd.f32 %v2770, %v2771
    %v2773 = vsel %vm2751, %v2768, 0.0
    %v2774 = vadd.f32 %v2772, %v2773
    %v2775 = vsel %vm2751, %v2769, 0.0
    %v2776 = vadd.f32 %v2774, %v2775
    %2777 = vadd.xlane.f32.xlu0 %v2776
    %v2778 = vpop.xlane.xlu0 %2777
    %v2779 = vmul.f32 %v2778, %v1606
    %v2780 = vadd.f32 %v2779, 1e-05
    %v2781 = vrsqrt.pop %v2780
    %v2782 = vmul.f32 %v2781, %v2780
    %v2783 = vmul.f32 %v2782, %v2781
    %v2784 = vmul.f32 0.5, %v2783
    %v2785 = vsub.f32 1.5, %v2784
    %v2786 = vmul.f32 %v2781, %v2785
    %vm2787 = vweird.f32 %v2780
    %vm2788 = vweird.f32 %v2781
    %vm2789 = vmor %vm2787, %vm2788
    %v2790 = vsel %vm2789, %v2781, %v2786
    %v2791 = vmul.f32 %v2762, %v2790
    %v2792 = vmul.f32 %v2763, %v2790
    %v2793 = vmul.f32 %v2764, %v2790
    %v2794 = vmul.f32 %v2765, %v2790
    %2795 = vset.pattern.permute.xlu0 13
    %2796 = vperm.xlu0 %2795, %v44
    %v2797 = vpop.permute.xlu0 %2796
    %v2799 = vmul.f32 %v2791, %v2797
    %v2800 = vmul.f32 %v2792, %v2797
    %v2801 = vmul.f32 %v2793, %v2797
    %v2802 = vmul.f32 %v2794, %v2797
    %2803 = vset.pattern.permute.xlu0 14
    %2804 = vperm.xlu0 %2803, %v44
    %v2805 = vpop.permute.xlu0 %2804
    %v2807 = vadd.f32 %v2799, %v2805
    %v2808 = vadd.f32 %v2800, %v2805
    %v2809 = vadd.f32 %v2801, %v2805
    %v2810 = vadd.f32 %v2802, %v2805
    %2812 = vset.pattern.permute.xlu0 0
    %2813 = vperm.xlu0 %2812, %v343
    %v2814 = vpop.permute.xlu0 %2813
    %2817 = vset.pattern.permute.xlu0 0
    %2818 = vperm.xlu0 %2817, %v344
    %v2819 = vpop.permute.xlu0 %2818
    %2822 = vset.pattern.permute.xlu0 0
    %2823 = vperm.xlu0 %2822, %v345
    %v2824 = vpop.permute.xlu0 %2823
    %2827 = vset.pattern.permute.xlu0 0
    %2828 = vperm.xlu0 %2827, %v346
    %v2829 = vpop.permute.xlu0 %2828
    %v2831 = vperm.slane %v2807, 0
    %v2832 = vperm.slane %v2808, 0
    %v2833 = vadd.f32 %v2814, %v2831
    %v2834 = vadd.f32 %v2814, %v2832
    %v2835 = vadd.f32 %v2819, %v2831
    %v2836 = vadd.f32 %v2819, %v2832
    %v2837 = vadd.f32 %v2824, %v2831
    %v2838 = vadd.f32 %v2824, %v2832
    %v2839 = vadd.f32 %v2829, %v2831
    %v2840 = vadd.f32 %v2829, %v2832
    %v2841 = vmul.f32 %v2833, 0.5
    %v2842 = vmul.f32 %v2834, 0.5
    %v2843 = vmul.f32 %v2835, 0.5
    %v2844 = vmul.f32 %v2836, 0.5
    %v2845 = vmul.f32 %v2837, 0.5
    %v2846 = vmul.f32 %v2838, 0.5
    %v2847 = vmul.f32 %v2839, 0.5
    %v2848 = vmul.f32 %v2840, 0.5
    %v2849 = vtanh.pop %v2841
    %v2850 = vtanh.pop %v2842
    %v2851 = vtanh.pop %v2843
    %v2852 = vtanh.pop %v2844
    %v2853 = vtanh.pop %v2845
    %v2854 = vtanh.pop %v2846
    %v2855 = vtanh.pop %v2847
    %v2856 = vtanh.pop %v2848
    %v2857 = vmul.f32 %v2849, 0.5
    %v2858 = vmul.f32 %v2850, 0.5
    %v2859 = vmul.f32 %v2851, 0.5
    %v2860 = vmul.f32 %v2852, 0.5
    %v2861 = vmul.f32 %v2853, 0.5
    %v2862 = vmul.f32 %v2854, 0.5
    %v2863 = vmul.f32 %v2855, 0.5
    %v2864 = vmul.f32 %v2856, 0.5
    %v2865 = vadd.f32 %v2857, 0.5
    %v2866 = vadd.f32 %v2858, 0.5
    %v2867 = vadd.f32 %v2859, 0.5
    %v2868 = vadd.f32 %v2860, 0.5
    %v2869 = vadd.f32 %v2861, 0.5
    %v2870 = vadd.f32 %v2862, 0.5
    %v2871 = vadd.f32 %v2863, 0.5
    %v2872 = vadd.f32 %v2864, 0.5
    %v2873 = vadd.f32 %v2865, 1.0
    %v2874 = vadd.f32 %v2866, 1.0
    %v2875 = vadd.f32 %v2867, 1.0
    %v2876 = vadd.f32 %v2868, 1.0
    %v2877 = vadd.f32 %v2869, 1.0
    %v2878 = vadd.f32 %v2870, 1.0
    %v2879 = vadd.f32 %v2871, 1.0
    %v2880 = vadd.f32 %v2872, 1.0
    %v2881 = vmul.f32 %v52, %v2873
    %v2882 = vmul.f32 %v53, %v2874
    %v2883 = vmul.f32 %v54, %v2875
    %v2884 = vmul.f32 %v55, %v2876
    %v2885 = vmul.f32 %v56, %v2877
    %v2886 = vmul.f32 %v57, %v2878
    %v2887 = vmul.f32 %v58, %v2879
    %v2888 = vmul.f32 %v59, %v2880
    %v2889 = vpack.c.bf16 %v2882, %v2881
    %v2890 = vpack.c.bf16 %v2884, %v2883
    %v2891 = vpack.c.bf16 %v2886, %v2885
    %v2892 = vpack.c.bf16 %v2888, %v2887
    %2893 = vst [vmem:[#allocation2] sm:$0xff] %v2889
    %2894 = vst [vmem:[#allocation2 + $0x8] sm:$0xff] %v2890
    %2895 = vst [vmem:[#allocation2 + $0x10] sm:$0xff] %v2891
    %2896 = vst [vmem:[#allocation2 + $0x18] sm:$0xff] %v2892
    %v2897 = vld [vmem:[%s60] sm:$0xff]
    %v2898 = vld [vmem:[%s60 + $0x8] sm:$0xff]
    %v2899 = vld [vmem:[%s60 + $0x10] sm:$0xff]
    %v2900 = vld [vmem:[%s60 + $0x18] sm:$0xff]
    %v2901 = vunpack.c.l.bf16 %v2897
    %v2902 = vunpack.c.h.bf16 %v2897
    %v2903 = vunpack.c.l.bf16 %v2898
    %v2904 = vunpack.c.h.bf16 %v2898
    %v2905 = vunpack.c.l.bf16 %v2899
    %v2906 = vunpack.c.h.bf16 %v2899
    %v2907 = vunpack.c.l.bf16 %v2900
    %v2908 = vunpack.c.h.bf16 %v2900
    %2909 = vset.pattern.permute.xlu0 1
    %2910 = vperm.xlu0 %2909, %v343
    %v2911 = vpop.permute.xlu0 %2910
    %2913 = vset.pattern.permute.xlu0 1
    %2914 = vperm.xlu0 %2913, %v344
    %v2915 = vpop.permute.xlu0 %2914
    %2917 = vset.pattern.permute.xlu0 1
    %2918 = vperm.xlu0 %2917, %v345
    %v2919 = vpop.permute.xlu0 %2918
    %2921 = vset.pattern.permute.xlu0 1
    %2922 = vperm.xlu0 %2921, %v346
    %v2923 = vpop.permute.xlu0 %2922
    %v2925 = vperm.slane %v2809, 0
    %v2926 = vperm.slane %v2810, 0
    %v2927 = vadd.f32 %v2911, %v2925
    %v2928 = vadd.f32 %v2911, %v2926
    %v2929 = vadd.f32 %v2915, %v2925
    %v2930 = vadd.f32 %v2915, %v2926
    %v2931 = vadd.f32 %v2919, %v2925
    %v2932 = vadd.f32 %v2919, %v2926
    %v2933 = vadd.f32 %v2923, %v2925
    %v2934 = vadd.f32 %v2923, %v2926
    %v2935 = vmul.f32 %v2927, 0.5
    %v2936 = vmul.f32 %v2928, 0.5
    %v2937 = vmul.f32 %v2929, 0.5
    %v2938 = vmul.f32 %v2930, 0.5
    %v2939 = vmul.f32 %v2931, 0.5
    %v2940 = vmul.f32 %v2932, 0.5
    %v2941 = vmul.f32 %v2933, 0.5
    %v2942 = vmul.f32 %v2934, 0.5
    %v2943 = vtanh.pop %v2935
    %v2944 = vtanh.pop %v2936
    %v2945 = vtanh.pop %v2937
    %v2946 = vtanh.pop %v2938
    %v2947 = vtanh.pop %v2939
    %v2948 = vtanh.pop %v2940
    %v2949 = vtanh.pop %v2941
    %v2950 = vtanh.pop %v2942
    %v2951 = vmul.f32 %v2943, 0.5
    %v2952 = vmul.f32 %v2944, 0.5
    %v2953 = vmul.f32 %v2945, 0.5
    %v2954 = vmul.f32 %v2946, 0.5
    %v2955 = vmul.f32 %v2947, 0.5
    %v2956 = vmul.f32 %v2948, 0.5
    %v2957 = vmul.f32 %v2949, 0.5
    %v2958 = vmul.f32 %v2950, 0.5
    %v2959 = vadd.f32 %v2951, 0.5
    %v2960 = vadd.f32 %v2952, 0.5
    %v2961 = vadd.f32 %v2953, 0.5
    %v2962 = vadd.f32 %v2954, 0.5
    %v2963 = vadd.f32 %v2955, 0.5
    %v2964 = vadd.f32 %v2956, 0.5
    %v2965 = vadd.f32 %v2957, 0.5
    %v2966 = vadd.f32 %v2958, 0.5
    %v2967 = vadd.f32 %v2959, 1.0
    %v2968 = vadd.f32 %v2960, 1.0
    %v2969 = vadd.f32 %v2961, 1.0
    %v2970 = vadd.f32 %v2962, 1.0
    %v2971 = vadd.f32 %v2963, 1.0
    %v2972 = vadd.f32 %v2964, 1.0
    %v2973 = vadd.f32 %v2965, 1.0
    %v2974 = vadd.f32 %v2966, 1.0
    %v2975 = vmul.f32 %v2901, %v2967
    %v2976 = vmul.f32 %v2902, %v2968
    %v2977 = vmul.f32 %v2903, %v2969
    %v2978 = vmul.f32 %v2904, %v2970
    %v2979 = vmul.f32 %v2905, %v2971
    %v2980 = vmul.f32 %v2906, %v2972
    %v2981 = vmul.f32 %v2907, %v2973
    %v2982 = vmul.f32 %v2908, %v2974
    %v2983 = vpack.c.bf16 %v2976, %v2975
    %v2984 = vpack.c.bf16 %v2978, %v2977
    %v2985 = vpack.c.bf16 %v2980, %v2979
    %v2986 = vpack.c.bf16 %v2982, %v2981
    %s2987 = scalar_lea.vmem [#allocation2], 32
    %2988 = vst [vmem:[%s2987] sm:$0xff] %v2983
    %2989 = vst [vmem:[%s2987 + $0x8] sm:$0xff] %v2984
    %2990 = vst [vmem:[%s2987 + $0x10] sm:$0xff] %v2985
    %2991 = vst [vmem:[%s2987 + $0x18] sm:$0xff] %v2986
    // Predicated region
    $region22: #{tpu_custom_call.1} parent=1 // pred_check
      _
    $region23: #{tpu_custom_call.1} parent=1 // pred_check_branch
      %2993 = sbr.rel (0) target = $region25
    $region24: #{tpu_custom_call.1} parent=1 // pred_region
      %2995 = vsyncadd [#allocation3], 0
      %s2996 = sshll.u32 [#allocation2], 4
      %s2997 = int_to_ptr.vmem [resolvable:$true] %s2996
      %s2998 = sshll.u32 %s5, 4
      %s2999 = int_to_ptr.hbm [resolvable:$true] %s2998
      %3004 = dma.vmem_to_hbm [thread:$0]  %s2997, 1024, %s2999, [#allocation3], 128, 128, 8
    $region25: #{tpu_custom_call.1} parent=1 // pred_fallthru
      _
    // Predicated region
    $region26: #{tpu_custom_call.1} parent=1 // pred_check
      _
    $region27: #{tpu_custom_call.1} parent=1 // pred_check_branch
      %3006 = sbr.rel (0) target = $region29
    $region28: #{tpu_custom_call.1} parent=1 // pred_region
      %3008 = dma.done [#allocation3], 1024
    $region29: #{tpu_custom_call.1} parent=1 // pred_fallthru
      _
    %3009 = vsyncpa [#allocation3], 1

</llo_original>
